<compile_context>
chip_gen: v7x
topology: tpu7x:2x2x1
jax: 0.10.0
libtpu: 0.0.40
codegen_flags: <defaults>
</compile_context>

<pallas_src>
import functools

import jax
import jax.numpy as jnp
from jax.experimental import pallas as pl
from jax.experimental.pallas import tpu as pltpu


# ----------------------------------------------------------------------------
# Kernel: one batch tile per grid step; full source length T resident in VMEM.
# ----------------------------------------------------------------------------
def _bahdanau_attn_kernel(s_ref, h_ref, wh_ref, ws_ref, b_ref, v_ref,
                          ctx_ref, attn_ref, *, energy_dtype):
    tb, T, H = h_ref.shape

    h = h_ref[...]                      # (tb, T, H) bf16 encoder outputs
    s = s_ref[...]                      # (tb, H)    bf16 decoder state

    # Fused input projection on the MXU (the concat+Linear is algebraically
    # split): one (tb*T, H) @ (H, H) matmul for the encoder stream, one
    # (tb, H) @ (H, H) for the (broadcast) decoder state.
    hp = jnp.dot(h.reshape(tb * T, H), wh_ref[...],
                 preferred_element_type=jnp.float32).reshape(tb, T, H)
    sp = jnp.dot(s, ws_ref[...],
                 preferred_element_type=jnp.float32) + b_ref[...]      # (tb, H) f32

    # tanh on the EUP; bf16 on v6e/v7x (bf16 EUP), f32 on v5e.
    energy = jnp.tanh((hp + sp[:, None, :]).astype(energy_dtype))      # (tb, T, H)

    # score[b, t] = v . energy[b, t, :]  — batched q=1 MXU matmul
    # ('bqh,bth->bqt'); the contraction over H happens inside the MXU and the
    # result comes out lane-dense in T (no cross-lane XLU reduce).
    v_b = jnp.broadcast_to(v_ref[...], (tb, 1, H))                     # bf16, tiny
    scores = jnp.einsum('bqh,bth->bqt', v_b, energy.astype(jnp.bfloat16),
                        preferred_element_type=jnp.float32)            # (tb, 1, T) f32

    # Numerically stable softmax over source positions (lane axis), exact
    # normalization (single-vreg divide; approx reciprocal buys nothing here).
    m = jnp.max(scores, axis=-1, keepdims=True)                        # (tb, 1, 1)
    p = jnp.exp(scores - m)                                            # (tb, 1, T)
    attn = p / jnp.sum(p, axis=-1, keepdims=True)                      # (tb, 1, T)
    attn_ref[...] = attn

    # context = attn @ HT, batched q=1 MXU matmul ('bqt,bth->bqh').
    ctx_ref[...] = jnp.einsum('bqt,bth->bqh', attn.astype(jnp.bfloat16), h,
                              preferred_element_type=jnp.float32)      # (tb, 1, H)


def _const_spec(block_shape, index_map):
    """Constant-index operand spec; single-buffered when the JAX version
    supports pipeline_mode, plain BlockSpec otherwise."""
    try:
        return pl.BlockSpec(block_shape, index_map, pipeline_mode=pl.Buffered(1))
    except Exception:  # older JAX without pipeline_mode / Buffered
        return pl.BlockSpec(block_shape, index_map)


# ----------------------------------------------------------------------------
# Wrapper: layout plumbing (time-major -> batch-major), weight split, padding.
# ----------------------------------------------------------------------------
def bahdanau_attn_pallas(St, HT, Wcat, b, v, *, batch_tile=None):
    """St: (1,B,H), HT: (T,B,H), Wcat: (H,2H) [PyTorch Linear weight], b,v: (H,).
    Returns (context (1,B,H), attn_weight (B,1,T)) — same as the PyTorch module."""
    T, B, H = HT.shape

    # ---- device-dependent choices (static, trace-time) ----
    kind = ""
    try:
        kind = jax.devices()[0].device_kind.lower()
    except Exception:
        pass
    is_v5 = "v5" in kind
    is_v7 = ("v7" in kind) or ("tpu7" in kind)
    # bf16 tanh/energy on v6e/v7x (bf16 EUP); f32 elementwise math on v5e.
    energy_dtype = jnp.float32 if is_v5 else jnp.bfloat16

    if batch_tile is None:
        batch_tile = 16                       # bf16 sublane packing: (16,128) min tile
        if is_v7 and B > 8 and (pl.cdiv(B, batch_tile) < 2):
            batch_tile = 8                    # keep >=2 grid steps for 2 TensorCores

    # ---- layout plumbing ----
    s = St.reshape(B, H).astype(jnp.bfloat16)                 # (B, H)
    # Cast to bf16 BEFORE the (T,B,H)->(B,T,H) relayout: the XLA transpose of
    # the largest tensor moves half the bytes.
    h_bth = jnp.transpose(HT.astype(jnp.bfloat16), (1, 0, 2))  # (B, T, H)

    # PyTorch Linear: y = x @ Wcat.T + b with x = [HT ; ST]  ->  split weight.
    Wh = Wcat[:, :H].T.astype(jnp.bfloat16)                   # (H, H) acts on HT
    Ws = Wcat[:, H:].T.astype(jnp.bfloat16)                   # (H, H) acts on St
    b2 = b.reshape(1, H).astype(jnp.float32)                  # bias stays f32 (VPU add)
    v3 = v.reshape(1, 1, H).astype(jnp.bfloat16)              # MXU operand

    # Pad batch to a multiple of the tile (zero rows -> harmless uniform softmax).
    Bp = pl.cdiv(B, batch_tile) * batch_tile
    if Bp != B:
        s = jnp.pad(s, ((0, Bp - B), (0, 0)))
        h_bth = jnp.pad(h_bth, ((0, Bp - B), (0, 0), (0, 0)))

    grid_spec = pltpu.PrefetchScalarGridSpec(
        num_scalar_prefetch=0,
        grid=(Bp // batch_tile,),
        in_specs=[
            pl.BlockSpec((batch_tile, H), lambda i: (i, 0)),         # St tile
            pl.BlockSpec((batch_tile, T, H), lambda i: (i, 0, 0)),   # HT tile
            _const_spec((H, H), lambda i: (0, 0)),                   # Wh (single-buffered)
            _const_spec((H, H), lambda i: (0, 0)),                   # Ws
            _const_spec((1, H), lambda i: (0, 0)),                   # bias
            _const_spec((1, 1, H), lambda i: (0, 0, 0)),             # v
        ],
        out_specs=[
            pl.BlockSpec((batch_tile, 1, H), lambda i: (i, 0, 0)),   # context
            pl.BlockSpec((batch_tile, 1, T), lambda i: (i, 0, 0)),   # attn weights
        ],
    )

    kernel = functools.partial(_bahdanau_attn_kernel, energy_dtype=energy_dtype)

    ctx, attn = pl.pallas_call(
        kernel,
        grid_spec=grid_spec,
        out_shape=(jax.ShapeDtypeStruct((Bp, 1, H), jnp.float32),
                   jax.ShapeDtypeStruct((Bp, 1, T), jnp.float32)),
        compiler_params=pltpu.CompilerParams(
            dimension_semantics=("parallel",),            # batch tiles independent
            vmem_limit_bytes=48 * 1024 * 1024),           # fits v7x's 64 MiB w/ headroom
    )(s, h_bth, Wh, Ws, b2, v3)

    context = jnp.transpose(ctx[:B], (1, 0, 2))           # (1, B, H)
    attn_weight = attn[:B]                                # (B, 1, T)
    return context, attn_weight


# ----------------------------------------------------------------------------
# Pure-JAX reference mirroring the PyTorch forward exactly (f32).
# ----------------------------------------------------------------------------
def bahdanau_attn_ref(St, HT, Wcat, b, v):
    T, B, H = HT.shape
    ST = jnp.broadcast_to(St, (T, B, H)).transpose(1, 0, 2)     # (B, T, H)
    HTb = jnp.transpose(HT, (1, 0, 2))                          # (B, T, H)
    cat = jnp.concatenate([HTb, ST], axis=-1)                   # (B, T, 2H)
    energy = jnp.tanh(cat @ Wcat.T + b)                         # (B, T, H)
    score = jnp.einsum('h,bth->bt', v, energy)[:, None, :]      # (B, 1, T)
    attn_weight = jax.nn.softmax(score, axis=-1)                # (B, 1, T)
    context = jnp.einsum('bqt,bth->bqh', attn_weight, HTb)      # (B, 1, H)
    return jnp.transpose(context, (1, 0, 2)), attn_weight       # (1,B,H), (B,1,T)


if __name__ == "__main__":
    B = 16      # batch
    T = 128     # source length
    H = 128     # hidden size

    key = jax.random.PRNGKey(0)
    k1, k2, k3, k4, k5 = jax.random.split(key, 5)
    St = 0.1 * jax.random.normal(k1, (1, B, H), jnp.float32)
    HT = 0.1 * jax.random.normal(k2, (T, B, H), jnp.float32)
    Wcat = 0.1 * jax.random.normal(k3, (H, 2 * H), jnp.float32)  # Linear(2H->H) weight
    bias = 0.1 * jax.random.normal(k4, (H,), jnp.float32)
    v = 0.02 + jax.random.normal(k5, (H,), jnp.float32)          # nn.init.normal_(v, 0.02)

    fwd = jax.jit(bahdanau_attn_pallas)
    ctx, attn = fwd(St, HT, Wcat, bias, v)
    ctx, attn = jax.block_until_ready((ctx, attn))

    ctx_ref, attn_ref = bahdanau_attn_ref(St, HT, Wcat, bias, v)

    assert ctx.shape == (1, B, H), ctx.shape
    assert attn.shape == (B, 1, T), attn.shape
    # Attention rows are a probability distribution (exact normalization now).
    assert bool(jnp.allclose(jnp.sum(attn, axis=-1), 1.0, atol=1e-3)), "softmax sum check"
    # Match the f32 PyTorch-equivalent reference (bf16 MXU operands / bf16 tanh
    # on v6e+ -> loose tolerance).
    max_attn_err = float(jnp.max(jnp.abs(attn - attn_ref)))
    max_ctx_err = float(jnp.max(jnp.abs(ctx - ctx_ref)))
    assert bool(jnp.allclose(attn, attn_ref, atol=5e-2, rtol=5e-2)), max_attn_err
    assert bool(jnp.allclose(ctx, ctx_ref, atol=5e-2, rtol=5e-2)), max_ctx_err

    print("KERNEL_OK")
</pallas_src>

<mosaic_0001>
module attributes {stable_mosaic.version = 11 : i64} {
  func.func @_bahdanau_attn_kernel(%arg0: i32, %arg1: memref<16x128xbf16, #tpu.memory_space<vmem>>, %arg2: memref<16x128x128xbf16, #tpu.memory_space<vmem>>, %arg3: memref<128x128xbf16, #tpu.memory_space<vmem>>, %arg4: memref<128x128xbf16, #tpu.memory_space<vmem>>, %arg5: memref<1x128xf32, #tpu.memory_space<vmem>>, %arg6: memref<1x1x128xbf16, #tpu.memory_space<vmem>>, %arg7: memref<16x1x128xf32, #tpu.memory_space<vmem>>, %arg8: memref<16x1x128xf32, #tpu.memory_space<vmem>>) attributes {dimension_semantics = [#tpu.dimension_semantics<parallel>], iteration_bounds = array<i64: 1>, scalar_prefetch = 0 : i64, scratch_operands = 0 : i64, tpu.core_type = #tpu.core_type<tc>, window_params = [{transform_indices = @transform_0, window_bounds = array<i64: 16, 128>}, {transform_indices = @transform_1, window_bounds = array<i64: 16, 128, 128>}, {pipeline_mode = #tpu.pipeline_mode<synchronous>, transform_indices = @transform_2, window_bounds = array<i64: 128, 128>}, {pipeline_mode = #tpu.pipeline_mode<synchronous>, transform_indices = @transform_3, window_bounds = array<i64: 128, 128>}, {pipeline_mode = #tpu.pipeline_mode<synchronous>, transform_indices = @transform_4, window_bounds = array<i64: 1, 128>}, {pipeline_mode = #tpu.pipeline_mode<synchronous>, transform_indices = @transform_5, window_bounds = array<i64: 1, 1, 128>}, {transform_indices = @transform_6, window_bounds = array<i64: 16, 1, 128>}, {transform_indices = @transform_7, window_bounds = array<i64: 16, 1, 128>}]} {
    %c0 = arith.constant 0 : index
    %c0_0 = arith.constant 0 : index
    %c0_1 = arith.constant 0 : index
    %0 = vector.load %arg2[%c0, %c0_0, %c0_1] : memref<16x128x128xbf16, #tpu.memory_space<vmem>>, vector<16x128x128xbf16>
    %c0_2 = arith.constant 0 : index
    %c0_3 = arith.constant 0 : index
    %1 = vector.load %arg1[%c0_2, %c0_3] : memref<16x128xbf16, #tpu.memory_space<vmem>>, vector<16x128xbf16>
    %2 = vector.shape_cast %0 : vector<16x128x128xbf16> to vector<2048x128xbf16>
    %c0_4 = arith.constant 0 : index
    %c0_5 = arith.constant 0 : index
    %3 = vector.load %arg3[%c0_4, %c0_5] : memref<128x128xbf16, #tpu.memory_space<vmem>>, vector<128x128xbf16>
    %cst = arith.constant dense<0.000000e+00> : vector<2048x128xf32>
    %4 = tpu.matmul %2, %3, %cst {dimension_numbers = #tpu.dot_dimension_numbers<[1], [0], [0], [1], [0, 0, 1, 1], [], []>} : vector<2048x128xbf16>, vector<128x128xbf16>, vector<2048x128xf32> -> vector<2048x128xf32>
    %5 = vector.shape_cast %4 : vector<2048x128xf32> to vector<16x128x128xf32>
    %c0_6 = arith.constant 0 : index
    %c0_7 = arith.constant 0 : index
    %6 = vector.load %arg4[%c0_6, %c0_7] : memref<128x128xbf16, #tpu.memory_space<vmem>>, vector<128x128xbf16>
    %cst_8 = arith.constant dense<0.000000e+00> : vector<16x128xf32>
    %7 = tpu.matmul %1, %6, %cst_8 {dimension_numbers = #tpu.dot_dimension_numbers<[1], [0], [0], [1], [0, 0, 1, 1], [], []>} : vector<16x128xbf16>, vector<128x128xbf16>, vector<16x128xf32> -> vector<16x128xf32>
    %c0_9 = arith.constant 0 : index
    %c0_10 = arith.constant 0 : index
    %8 = vector.load %arg5[%c0_9, %c0_10] : memref<1x128xf32, #tpu.memory_space<vmem>>, vector<1x128xf32>
    %9 = vector.broadcast %8 : vector<1x128xf32> to vector<16x128xf32>
    %10 = arith.addf %7, %9 : vector<16x128xf32>
    %11 = vector.shape_cast %10 : vector<16x128xf32> to vector<16x1x128xf32>
    %12 = vector.broadcast %11 : vector<16x1x128xf32> to vector<16x128x128xf32>
    %13 = arith.addf %5, %12 : vector<16x128x128xf32>
    %14 = arith.truncf %13 : vector<16x128x128xf32> to vector<16x128x128xbf16>
    %15 = math.tanh %14 : vector<16x128x128xbf16>
    %c0_11 = arith.constant 0 : index
    %c0_12 = arith.constant 0 : index
    %c0_13 = arith.constant 0 : index
    %16 = vector.load %arg6[%c0_11, %c0_12, %c0_13] : memref<1x1x128xbf16, #tpu.memory_space<vmem>>, vector<1x1x128xbf16>
    %17 = vector.shape_cast %16 : vector<1x1x128xbf16> to vector<1x1x128xbf16>
    %18 = vector.broadcast %17 : vector<1x1x128xbf16> to vector<16x1x128xbf16>
    "tpu.trace_start"() <{level = 10 : i32, message = "bqh,bth->bqt"}> : () -> ()
    %cst_14 = arith.constant dense<0.000000e+00> : vector<16x1x128xf32>
    %19 = tpu.matmul %18, %15, %cst_14 {dimension_numbers = #tpu.dot_dimension_numbers<[2], [2], [1], [1], [0, 0, 0, 1, 1, 1], [0], [0]>} : vector<16x1x128xbf16>, vector<16x128x128xbf16>, vector<16x1x128xf32> -> vector<16x1x128xf32>
    "tpu.trace_stop"() : () -> ()
    %cst_15 = arith.constant dense<0xFF800000> : vector<16x1xf32>
    %20 = vector.multi_reduction <maximumf>, %19, %cst_15 [2] : vector<16x1x128xf32> to vector<16x1xf32>
    %21 = vector.shape_cast %20 : vector<16x1xf32> to vector<16x1x1xf32>
    %22 = vector.broadcast %21 : vector<16x1x1xf32> to vector<16x1x128xf32>
    %23 = arith.subf %19, %22 : vector<16x1x128xf32>
    %24 = math.exp %23 : vector<16x1x128xf32>
    %cst_16 = arith.constant dense<0.000000e+00> : vector<16x1xf32>
    %25 = vector.multi_reduction <add>, %24, %cst_16 [2] : vector<16x1x128xf32> to vector<16x1xf32>
    %26 = vector.shape_cast %25 : vector<16x1xf32> to vector<16x1x1xf32>
    %27 = vector.broadcast %26 : vector<16x1x1xf32> to vector<16x1x128xf32>
    %28 = arith.divf %24, %27 : vector<16x1x128xf32>
    %c0_17 = arith.constant 0 : index
    %c0_18 = arith.constant 0 : index
    %c0_19 = arith.constant 0 : index
    %29 = vector.load %arg8[%c0_17, %c0_18, %c0_19] : memref<16x1x128xf32, #tpu.memory_space<vmem>>, vector<16x1x128xf32>
    tpu.vector_store %arg8[%c0_17, %c0_18, %c0_19], %28 {strides = array<i32>} : memref<16x1x128xf32, #tpu.memory_space<vmem>>, vector<16x1x128xf32>,
    %30 = arith.truncf %28 : vector<16x1x128xf32> to vector<16x1x128xbf16>
    "tpu.trace_start"() <{level = 10 : i32, message = "bqt,bth->bqh"}> : () -> ()
    %cst_20 = arith.constant dense<0.000000e+00> : vector<16x1x128xf32>
    %31 = tpu.matmul %30, %0, %cst_20 {dimension_numbers = #tpu.dot_dimension_numbers<[2], [1], [1], [2], [0, 0, 0, 1, 1, 2], [0], [0]>} : vector<16x1x128xbf16>, vector<16x128x128xbf16>, vector<16x1x128xf32> -> vector<16x1x128xf32>
    "tpu.trace_stop"() : () -> ()
    %c0_21 = arith.constant 0 : index
    %c0_22 = arith.constant 0 : index
    %c0_23 = arith.constant 0 : index
    %32 = vector.load %arg7[%c0_21, %c0_22, %c0_23] : memref<16x1x128xf32, #tpu.memory_space<vmem>>, vector<16x1x128xf32>
    tpu.vector_store %arg7[%c0_21, %c0_22, %c0_23], %31 {strides = array<i32>} : memref<16x1x128xf32, #tpu.memory_space<vmem>>, vector<16x1x128xf32>,
    return
  }
  func.func @transform_0(%arg0: i32) -> (i32, i32) {
    %c0_i32 = arith.constant 0 : i32
    %c0_i32_0 = arith.constant 0 : i32
    return %arg0, %c0_i32 : i32, i32
  }
  func.func @transform_1(%arg0: i32) -> (i32, i32, i32) {
    %c0_i32 = arith.constant 0 : i32
    %c0_i32_0 = arith.constant 0 : i32
    %c0_i32_1 = arith.constant 0 : i32
    return %arg0, %c0_i32, %c0_i32_0 : i32, i32, i32
  }
  func.func @transform_2(%arg0: i32) -> (i32, i32) {
    %c0_i32 = arith.constant 0 : i32
    %c0_i32_0 = arith.constant 0 : i32
    %c0_i32_1 = arith.constant 0 : i32
    return %c0_i32, %c0_i32_0 : i32, i32
  }
  func.func @transform_3(%arg0: i32) -> (i32, i32) {
    %c0_i32 = arith.constant 0 : i32
    %c0_i32_0 = arith.constant 0 : i32
    %c0_i32_1 = arith.constant 0 : i32
    return %c0_i32, %c0_i32_0 : i32, i32
  }
  func.func @transform_4(%arg0: i32) -> (i32, i32) {
    %c0_i32 = arith.constant 0 : i32
    %c0_i32_0 = arith.constant 0 : i32
    %c0_i32_1 = arith.constant 0 : i32
    return %c0_i32, %c0_i32_0 : i32, i32
  }
  func.func @transform_5(%arg0: i32) -> (i32, i32, i32) {
    %c0_i32 = arith.constant 0 : i32
    %c0_i32_0 = arith.constant 0 : i32
    %c0_i32_1 = arith.constant 0 : i32
    %c0_i32_2 = arith.constant 0 : i32
    return %c0_i32, %c0_i32_0, %c0_i32_1 : i32, i32, i32
  }
  func.func @transform_6(%arg0: i32) -> (i32, i32, i32) {
    %c0_i32 = arith.constant 0 : i32
    %c0_i32_0 = arith.constant 0 : i32
    %c0_i32_1 = arith.constant 0 : i32
    return %arg0, %c0_i32, %c0_i32_0 : i32, i32, i32
  }
  func.func @transform_7(%arg0: i32) -> (i32, i32, i32) {
    %c0_i32 = arith.constant 0 : i32
    %c0_i32_0 = arith.constant 0 : i32
    %c0_i32_1 = arith.constant 0 : i32
    return %arg0, %c0_i32, %c0_i32_0 : i32, i32, i32
  }
}

</mosaic_0001>

<llo_original>
// kernel: bahdanau_attn_pallas.1
$region0: #{bahdanau_attn_pallas.1}
  #allocation0 [shape = 'u32[]', space=smem, size = 0x4, offset = 0x4, fixed_abs, tag = 'smem constant byte address 0x4 - core index']
  #allocation1 [shape = 'u32[144,128]{1,0:T(1,128)}', space=vmem, size = 0x12000, scoped, tag = 'internal scratch']
  %s0 = inlined_call_operand.vmem [shape: bf16[16,128], index: 0, kind: input, shape index: {}]
  %s1 = inlined_call_operand.vmem [shape: bf16[16,128,128], index: 1, kind: input, shape index: {}]
  %s2 = inlined_call_operand.vmem [shape: bf16[128,128], index: 2, kind: input, shape index: {}]
  %s3 = inlined_call_operand.vmem [shape: bf16[128,128], index: 3, kind: input, shape index: {}]
  %s4 = inlined_call_operand.vmem [shape: f32[1,128], index: 4, kind: input, shape index: {}]
  %s5 = inlined_call_operand.vmem [shape: bf16[1,1,128], index: 5, kind: input, shape index: {}]
  %s6 = inlined_call_operand.hbm [shape: f32[16,1,128], index: 6, kind: output, shape index: {0}]
  %s7 = inlined_call_operand.hbm [shape: f32[16,1,128], index: 7, kind: output, shape index: {1}]
  %8 = xla_tuple %s6, %s7
  %s9 = sld [smem:[#allocation0]]
  $region42: #{bahdanau_attn_pallas.1} parent=0
    _
  %s11 = ssub.s32 1, %s9
  %s12 = scalar_select 0, %s11, %s9
  $region1: #{bahdanau_attn_pallas.1} parent=0
    #allocation2 [shape = 'u8[8192]{0}', space=vmem, size = 0x2000, scoped, tag = 'output window, operand 0, single buffered']
    #allocation3 [shape = 's32[1]{0}', space=sflag, size = 0x4, scoped, tag = 'scoped memory for bahdanau_attn_pallas.1']
    #allocation4 [shape = 'u8[8192]{0}', space=vmem, size = 0x2000, scoped, tag = 'output window, operand 1, single buffered']
    #allocation5 [shape = 's32[1]{0}', space=sflag, size = 0x4, scoped, tag = 'scoped memory for bahdanau_attn_pallas.1']
    %13 = vsyncpa [#allocation3], 0
    %14 = vsyncpa [#allocation5], 0
    // Predicated region
    $region2: #{bahdanau_attn_pallas.1} parent=1 // pred_check
      _
    $region3: #{bahdanau_attn_pallas.1} parent=1 // pred_check_branch
      %16 = sbr.rel (0) target = $region5
    $region4: #{bahdanau_attn_pallas.1} parent=1 // pred_region
      _
    $region5: #{bahdanau_attn_pallas.1} parent=1 // pred_fallthru
      _
    // Predicated region
    $region6: #{bahdanau_attn_pallas.1} parent=1 // pred_check
      _
    $region7: #{bahdanau_attn_pallas.1} parent=1 // pred_check_branch
      %18 = sbr.rel (0) target = $region9
    $region8: #{bahdanau_attn_pallas.1} parent=1 // pred_region
      _
    $region9: #{bahdanau_attn_pallas.1} parent=1 // pred_fallthru
      _
    // Predicated region
    $region10: #{bahdanau_attn_pallas.1} parent=1 // pred_check
      _
    $region11: #{bahdanau_attn_pallas.1} parent=1 // pred_check_branch
      %20 = sbr.rel (0) target = $region13
    $region12: #{bahdanau_attn_pallas.1} parent=1 // pred_region
      _
    $region13: #{bahdanau_attn_pallas.1} parent=1 // pred_fallthru
      _
    // Predicated region
    $region14: #{bahdanau_attn_pallas.1} parent=1 // pred_check
      _
    $region15: #{bahdanau_attn_pallas.1} parent=1 // pred_check_branch
      %22 = sbr.rel (0) target = $region17
    $region16: #{bahdanau_attn_pallas.1} parent=1 // pred_region
      _
    $region17: #{bahdanau_attn_pallas.1} parent=1 // pred_fallthru
      _
    // Predicated region
    $region18: #{bahdanau_attn_pallas.1} parent=1 // pred_check
      _
    $region19: #{bahdanau_attn_pallas.1} parent=1 // pred_check_branch
      %24 = sbr.rel (0) target = $region21
    $region20: #{bahdanau_attn_pallas.1} parent=1 // pred_region
      _
    $region21: #{bahdanau_attn_pallas.1} parent=1 // pred_fallthru
      _
    // Predicated region
    $region22: #{bahdanau_attn_pallas.1} parent=1 // pred_check
      _
    $region23: #{bahdanau_attn_pallas.1} parent=1 // pred_check_branch
      %26 = sbr.rel (0) target = $region25
    $region24: #{bahdanau_attn_pallas.1} parent=1 // pred_region
      _
    $region25: #{bahdanau_attn_pallas.1} parent=1 // pred_fallthru
      _
    %v28 = vld [vmem:[%s1] sm:$0xf]
    %v29 = vld [vmem:[%s1 + $0x4] sm:$0xf]
    %v30 = vld [vmem:[%s1 + $0x8] sm:$0xf]
    %v31 = vld [vmem:[%s1 + $0xc] sm:$0xf]
    %v32 = vld [vmem:[%s1 + $0x10] sm:$0xf]
    %v33 = vld [vmem:[%s1 + $0x14] sm:$0xf]
    %v34 = vld [vmem:[%s1 + $0x18] sm:$0xf]
    %v35 = vld [vmem:[%s1 + $0x1c] sm:$0xf]
    %v36 = vld [vmem:[%s1 + $0x20] sm:$0xf]
    %v37 = vld [vmem:[%s1 + $0x24] sm:$0xf]
    %v38 = vld [vmem:[%s1 + $0x28] sm:$0xf]
    %v39 = vld [vmem:[%s1 + $0x2c] sm:$0xf]
    %v40 = vld [vmem:[%s1 + $0x30] sm:$0xf]
    %v41 = vld [vmem:[%s1 + $0x34] sm:$0xf]
    %v42 = vld [vmem:[%s1 + $0x38] sm:$0xf]
    %v43 = vld [vmem:[%s1 + $0x3c] sm:$0xf]
    %v44 = vld [vmem:[%s1 + $0x40] sm:$0xf]
    %v45 = vld [vmem:[%s1 + $0x44] sm:$0xf]
    %v46 = vld [vmem:[%s1 + $0x48] sm:$0xf]
    %v47 = vld [vmem:[%s1 + $0x4c] sm:$0xf]
    %v48 = vld [vmem:[%s1 + $0x50] sm:$0xf]
    %v49 = vld [vmem:[%s1 + $0x54] sm:$0xf]
    %v50 = vld [vmem:[%s1 + $0x58] sm:$0xf]
    %v51 = vld [vmem:[%s1 + $0x5c] sm:$0xf]
    %v52 = vld [vmem:[%s1 + $0x60] sm:$0xf]
    %v53 = vld [vmem:[%s1 + $0x64] sm:$0xf]
    %v54 = vld [vmem:[%s1 + $0x68] sm:$0xf]
    %v55 = vld [vmem:[%s1 + $0x6c] sm:$0xf]
    %v56 = vld [vmem:[%s1 + $0x70] sm:$0xf]
    %v57 = vld [vmem:[%s1 + $0x74] sm:$0xf]
    %v58 = vld [vmem:[%s1 + $0x78] sm:$0xf]
    %v59 = vld [vmem:[%s1 + $0x7c] sm:$0xf]
    %v60 = vld [vmem:[%s1 + $0x80] sm:$0xf]
    %v61 = vld [vmem:[%s1 + $0x84] sm:$0xf]
    %v62 = vld [vmem:[%s1 + $0x88] sm:$0xf]
    %v63 = vld [vmem:[%s1 + $0x8c] sm:$0xf]
    %v64 = vld [vmem:[%s1 + $0x90] sm:$0xf]
    %v65 = vld [vmem:[%s1 + $0x94] sm:$0xf]
    %v66 = vld [vmem:[%s1 + $0x98] sm:$0xf]
    %v67 = vld [vmem:[%s1 + $0x9c] sm:$0xf]
    %v68 = vld [vmem:[%s1 + $0xa0] sm:$0xf]
    %v69 = vld [vmem:[%s1 + $0xa4] sm:$0xf]
    %v70 = vld [vmem:[%s1 + $0xa8] sm:$0xf]
    %v71 = vld [vmem:[%s1 + $0xac] sm:$0xf]
    %v72 = vld [vmem:[%s1 + $0xb0] sm:$0xf]
    %v73 = vld [vmem:[%s1 + $0xb4] sm:$0xf]
    %v74 = vld [vmem:[%s1 + $0xb8] sm:$0xf]
    %v75 = vld [vmem:[%s1 + $0xbc] sm:$0xf]
    %v76 = vld [vmem:[%s1 + $0xc0] sm:$0xf]
    %v77 = vld [vmem:[%s1 + $0xc4] sm:$0xf]
    %v78 = vld [vmem:[%s1 + $0xc8] sm:$0xf]
    %v79 = vld [vmem:[%s1 + $0xcc] sm:$0xf]
    %v80 = vld [vmem:[%s1 + $0xd0] sm:$0xf]
    %v81 = vld [vmem:[%s1 + $0xd4] sm:$0xf]
    %v82 = vld [vmem:[%s1 + $0xd8] sm:$0xf]
    %v83 = vld [vmem:[%s1 + $0xdc] sm:$0xf]
    %v84 = vld [vmem:[%s1 + $0xe0] sm:$0xf]
    %v85 = vld [vmem:[%s1 + $0xe4] sm:$0xf]
    %v86 = vld [vmem:[%s1 + $0xe8] sm:$0xf]
    %v87 = vld [vmem:[%s1 + $0xec] sm:$0xf]
    %v88 = vld [vmem:[%s1 + $0xf0] sm:$0xf]
    %v89 = vld [vmem:[%s1 + $0xf4] sm:$0xf]
    %v90 = vld [vmem:[%s1 + $0xf8] sm:$0xf]
    %v91 = vld [vmem:[%s1 + $0xfc] sm:$0xf]
    %v92 = vld [vmem:[%s1 + $0x100] sm:$0xf]
    %v93 = vld [vmem:[%s1 + $0x104] sm:$0xf]
    %v94 = vld [vmem:[%s1 + $0x108] sm:$0xf]
    %v95 = vld [vmem:[%s1 + $0x10c] sm:$0xf]
    %v96 = vld [vmem:[%s1 + $0x110] sm:$0xf]
    %v97 = vld [vmem:[%s1 + $0x114] sm:$0xf]
    %v98 = vld [vmem:[%s1 + $0x118] sm:$0xf]
    %v99 = vld [vmem:[%s1 + $0x11c] sm:$0xf]
    %v100 = vld [vmem:[%s1 + $0x120] sm:$0xf]
    %v101 = vld [vmem:[%s1 + $0x124] sm:$0xf]
    %v102 = vld [vmem:[%s1 + $0x128] sm:$0xf]
    %v103 = vld [vmem:[%s1 + $0x12c] sm:$0xf]
    %v104 = vld [vmem:[%s1 + $0x130] sm:$0xf]
    %v105 = vld [vmem:[%s1 + $0x134] sm:$0xf]
    %v106 = vld [vmem:[%s1 + $0x138] sm:$0xf]
    %v107 = vld [vmem:[%s1 + $0x13c] sm:$0xf]
    %v108 = vld [vmem:[%s1 + $0x140] sm:$0xf]
    %v109 = vld [vmem:[%s1 + $0x144] sm:$0xf]
    %v110 = vld [vmem:[%s1 + $0x148] sm:$0xf]
    %v111 = vld [vmem:[%s1 + $0x14c] sm:$0xf]
    %v112 = vld [vmem:[%s1 + $0x150] sm:$0xf]
    %v113 = vld [vmem:[%s1 + $0x154] sm:$0xf]
    %v114 = vld [vmem:[%s1 + $0x158] sm:$0xf]
    %v115 = vld [vmem:[%s1 + $0x15c] sm:$0xf]
    %v116 = vld [vmem:[%s1 + $0x160] sm:$0xf]
    %v117 = vld [vmem:[%s1 + $0x164] sm:$0xf]
    %v118 = vld [vmem:[%s1 + $0x168] sm:$0xf]
    %v119 = vld [vmem:[%s1 + $0x16c] sm:$0xf]
    %v120 = vld [vmem:[%s1 + $0x170] sm:$0xf]
    %v121 = vld [vmem:[%s1 + $0x174] sm:$0xf]
    %v122 = vld [vmem:[%s1 + $0x178] sm:$0xf]
    %v123 = vld [vmem:[%s1 + $0x17c] sm:$0xf]
    %v124 = vld [vmem:[%s1 + $0x180] sm:$0xf]
    %v125 = vld [vmem:[%s1 + $0x184] sm:$0xf]
    %v126 = vld [vmem:[%s1 + $0x188] sm:$0xf]
    %v127 = vld [vmem:[%s1 + $0x18c] sm:$0xf]
    %v128 = vld [vmem:[%s1 + $0x190] sm:$0xf]
    %v129 = vld [vmem:[%s1 + $0x194] sm:$0xf]
    %v130 = vld [vmem:[%s1 + $0x198] sm:$0xf]
    %v131 = vld [vmem:[%s1 + $0x19c] sm:$0xf]
    %v132 = vld [vmem:[%s1 + $0x1a0] sm:$0xf]
    %v133 = vld [vmem:[%s1 + $0x1a4] sm:$0xf]
    %v134 = vld [vmem:[%s1 + $0x1a8] sm:$0xf]
    %v135 = vld [vmem:[%s1 + $0x1ac] sm:$0xf]
    %v136 = vld [vmem:[%s1 + $0x1b0] sm:$0xf]
    %v137 = vld [vmem:[%s1 + $0x1b4] sm:$0xf]
    %v138 = vld [vmem:[%s1 + $0x1b8] sm:$0xf]
    %v139 = vld [vmem:[%s1 + $0x1bc] sm:$0xf]
    %v140 = vld [vmem:[%s1 + $0x1c0] sm:$0xf]
    %v141 = vld [vmem:[%s1 + $0x1c4] sm:$0xf]
    %v142 = vld [vmem:[%s1 + $0x1c8] sm:$0xf]
    %v143 = vld [vmem:[%s1 + $0x1cc] sm:$0xf]
    %v144 = vld [vmem:[%s1 + $0x1d0] sm:$0xf]
    %v145 = vld [vmem:[%s1 + $0x1d4] sm:$0xf]
    %v146 = vld [vmem:[%s1 + $0x1d8] sm:$0xf]
    %v147 = vld [vmem:[%s1 + $0x1dc] sm:$0xf]
    %v148 = vld [vmem:[%s1 + $0x1e0] sm:$0xf]
    %v149 = vld [vmem:[%s1 + $0x1e4] sm:$0xf]
    %v150 = vld [vmem:[%s1 + $0x1e8] sm:$0xf]
    %v151 = vld [vmem:[%s1 + $0x1ec] sm:$0xf]
    %v152 = vld [vmem:[%s1 + $0x1f0] sm:$0xf]
    %v153 = vld [vmem:[%s1 + $0x1f4] sm:$0xf]
    %v154 = vld [vmem:[%s1 + $0x1f8] sm:$0xf]
    %v155 = vld [vmem:[%s1 + $0x1fc] sm:$0xf]
    %v156 = vld [vmem:[%s1 + $0x200] sm:$0xf]
    %v157 = vld [vmem:[%s1 + $0x204] sm:$0xf]
    %v158 = vld [vmem:[%s1 + $0x208] sm:$0xf]
    %v159 = vld [vmem:[%s1 + $0x20c] sm:$0xf]
    %v160 = vld [vmem:[%s1 + $0x210] sm:$0xf]
    %v161 = vld [vmem:[%s1 + $0x214] sm:$0xf]
    %v162 = vld [vmem:[%s1 + $0x218] sm:$0xf]
    %v163 = vld [vmem:[%s1 + $0x21c] sm:$0xf]
    %v164 = vld [vmem:[%s1 + $0x220] sm:$0xf]
    %v165 = vld [vmem:[%s1 + $0x224] sm:$0xf]
    %v166 = vld [vmem:[%s1 + $0x228] sm:$0xf]
    %v167 = vld [vmem:[%s1 + $0x22c] sm:$0xf]
    %v168 = vld [vmem:[%s1 + $0x230] sm:$0xf]
    %v169 = vld [vmem:[%s1 + $0x234] sm:$0xf]
    %v170 = vld [vmem:[%s1 + $0x238] sm:$0xf]
    %v171 = vld [vmem:[%s1 + $0x23c] sm:$0xf]
    %v172 = vld [vmem:[%s1 + $0x240] sm:$0xf]
    %v173 = vld [vmem:[%s1 + $0x244] sm:$0xf]
    %v174 = vld [vmem:[%s1 + $0x248] sm:$0xf]
    %v175 = vld [vmem:[%s1 + $0x24c] sm:$0xf]
    %v176 = vld [vmem:[%s1 + $0x250] sm:$0xf]
    %v177 = vld [vmem:[%s1 + $0x254] sm:$0xf]
    %v178 = vld [vmem:[%s1 + $0x258] sm:$0xf]
    %v179 = vld [vmem:[%s1 + $0x25c] sm:$0xf]
    %v180 = vld [vmem:[%s1 + $0x260] sm:$0xf]
    %v181 = vld [vmem:[%s1 + $0x264] sm:$0xf]
    %v182 = vld [vmem:[%s1 + $0x268] sm:$0xf]
    %v183 = vld [vmem:[%s1 + $0x26c] sm:$0xf]
    %v184 = vld [vmem:[%s1 + $0x270] sm:$0xf]
    %v185 = vld [vmem:[%s1 + $0x274] sm:$0xf]
    %v186 = vld [vmem:[%s1 + $0x278] sm:$0xf]
    %v187 = vld [vmem:[%s1 + $0x27c] sm:$0xf]
    %v188 = vld [vmem:[%s1 + $0x280] sm:$0xf]
    %v189 = vld [vmem:[%s1 + $0x284] sm:$0xf]
    %v190 = vld [vmem:[%s1 + $0x288] sm:$0xf]
    %v191 = vld [vmem:[%s1 + $0x28c] sm:$0xf]
    %v192 = vld [vmem:[%s1 + $0x290] sm:$0xf]
    %v193 = vld [vmem:[%s1 + $0x294] sm:$0xf]
    %v194 = vld [vmem:[%s1 + $0x298] sm:$0xf]
    %v195 = vld [vmem:[%s1 + $0x29c] sm:$0xf]
    %v196 = vld [vmem:[%s1 + $0x2a0] sm:$0xf]
    %v197 = vld [vmem:[%s1 + $0x2a4] sm:$0xf]
    %v198 = vld [vmem:[%s1 + $0x2a8] sm:$0xf]
    %v199 = vld [vmem:[%s1 + $0x2ac] sm:$0xf]
    %v200 = vld [vmem:[%s1 + $0x2b0] sm:$0xf]
    %v201 = vld [vmem:[%s1 + $0x2b4] sm:$0xf]
    %v202 = vld [vmem:[%s1 + $0x2b8] sm:$0xf]
    %v203 = vld [vmem:[%s1 + $0x2bc] sm:$0xf]
    %v204 = vld [vmem:[%s1 + $0x2c0] sm:$0xf]
    %v205 = vld [vmem:[%s1 + $0x2c4] sm:$0xf]
    %v206 = vld [vmem:[%s1 + $0x2c8] sm:$0xf]
    %v207 = vld [vmem:[%s1 + $0x2cc] sm:$0xf]
    %v208 = vld [vmem:[%s1 + $0x2d0] sm:$0xf]
    %v209 = vld [vmem:[%s1 + $0x2d4] sm:$0xf]
    %v210 = vld [vmem:[%s1 + $0x2d8] sm:$0xf]
    %v211 = vld [vmem:[%s1 + $0x2dc] sm:$0xf]
    %v212 = vld [vmem:[%s1 + $0x2e0] sm:$0xf]
    %v213 = vld [vmem:[%s1 + $0x2e4] sm:$0xf]
    %v214 = vld [vmem:[%s1 + $0x2e8] sm:$0xf]
    %v215 = vld [vmem:[%s1 + $0x2ec] sm:$0xf]
    %v216 = vld [vmem:[%s1 + $0x2f0] sm:$0xf]
    %v217 = vld [vmem:[%s1 + $0x2f4] sm:$0xf]
    %v218 = vld [vmem:[%s1 + $0x2f8] sm:$0xf]
    %v219 = vld [vmem:[%s1 + $0x2fc] sm:$0xf]
    %v220 = vld [vmem:[%s1 + $0x300] sm:$0xf]
    %v221 = vld [vmem:[%s1 + $0x304] sm:$0xf]
    %v222 = vld [vmem:[%s1 + $0x308] sm:$0xf]
    %v223 = vld [vmem:[%s1 + $0x30c] sm:$0xf]
    %v224 = vld [vmem:[%s1 + $0x310] sm:$0xf]
    %v225 = vld [vmem:[%s1 + $0x314] sm:$0xf]
    %v226 = vld [vmem:[%s1 + $0x318] sm:$0xf]
    %v227 = vld [vmem:[%s1 + $0x31c] sm:$0xf]
    %v228 = vld [vmem:[%s1 + $0x320] sm:$0xf]
    %v229 = vld [vmem:[%s1 + $0x324] sm:$0xf]
    %v230 = vld [vmem:[%s1 + $0x328] sm:$0xf]
    %v231 = vld [vmem:[%s1 + $0x32c] sm:$0xf]
    %v232 = vld [vmem:[%s1 + $0x330] sm:$0xf]
    %v233 = vld [vmem:[%s1 + $0x334] sm:$0xf]
    %v234 = vld [vmem:[%s1 + $0x338] sm:$0xf]
    %v235 = vld [vmem:[%s1 + $0x33c] sm:$0xf]
    %v236 = vld [vmem:[%s1 + $0x340] sm:$0xf]
    %v237 = vld [vmem:[%s1 + $0x344] sm:$0xf]
    %v238 = vld [vmem:[%s1 + $0x348] sm:$0xf]
    %v239 = vld [vmem:[%s1 + $0x34c] sm:$0xf]
    %v240 = vld [vmem:[%s1 + $0x350] sm:$0xf]
    %v241 = vld [vmem:[%s1 + $0x354] sm:$0xf]
    %v242 = vld [vmem:[%s1 + $0x358] sm:$0xf]
    %v243 = vld [vmem:[%s1 + $0x35c] sm:$0xf]
    %v244 = vld [vmem:[%s1 + $0x360] sm:$0xf]
    %v245 = vld [vmem:[%s1 + $0x364] sm:$0xf]
    %v246 = vld [vmem:[%s1 + $0x368] sm:$0xf]
    %v247 = vld [vmem:[%s1 + $0x36c] sm:$0xf]
    %v248 = vld [vmem:[%s1 + $0x370] sm:$0xf]
    %v249 = vld [vmem:[%s1 + $0x374] sm:$0xf]
    %v250 = vld [vmem:[%s1 + $0x378] sm:$0xf]
    %v251 = vld [vmem:[%s1 + $0x37c] sm:$0xf]
    %v252 = vld [vmem:[%s1 + $0x380] sm:$0xf]
    %v253 = vld [vmem:[%s1 + $0x384] sm:$0xf]
    %v254 = vld [vmem:[%s1 + $0x388] sm:$0xf]
    %v255 = vld [vmem:[%s1 + $0x38c] sm:$0xf]
    %v256 = vld [vmem:[%s1 + $0x390] sm:$0xf]
    %v257 = vld [vmem:[%s1 + $0x394] sm:$0xf]
    %v258 = vld [vmem:[%s1 + $0x398] sm:$0xf]
    %v259 = vld [vmem:[%s1 + $0x39c] sm:$0xf]
    %v260 = vld [vmem:[%s1 + $0x3a0] sm:$0xf]
    %v261 = vld [vmem:[%s1 + $0x3a4] sm:$0xf]
    %v262 = vld [vmem:[%s1 + $0x3a8] sm:$0xf]
    %v263 = vld [vmem:[%s1 + $0x3ac] sm:$0xf]
    %v264 = vld [vmem:[%s1 + $0x3b0] sm:$0xf]
    %v265 = vld [vmem:[%s1 + $0x3b4] sm:$0xf]
    %v266 = vld [vmem:[%s1 + $0x3b8] sm:$0xf]
    %v267 = vld [vmem:[%s1 + $0x3bc] sm:$0xf]
    %v268 = vld [vmem:[%s1 + $0x3c0] sm:$0xf]
    %v269 = vld [vmem:[%s1 + $0x3c4] sm:$0xf]
    %v270 = vld [vmem:[%s1 + $0x3c8] sm:$0xf]
    %v271 = vld [vmem:[%s1 + $0x3cc] sm:$0xf]
    %v272 = vld [vmem:[%s1 + $0x3d0] sm:$0xf]
    %v273 = vld [vmem:[%s1 + $0x3d4] sm:$0xf]
    %v274 = vld [vmem:[%s1 + $0x3d8] sm:$0xf]
    %v275 = vld [vmem:[%s1 + $0x3dc] sm:$0xf]
    %v276 = vld [vmem:[%s1 + $0x3e0] sm:$0xf]
    %v277 = vld [vmem:[%s1 + $0x3e4] sm:$0xf]
    %v278 = vld [vmem:[%s1 + $0x3e8] sm:$0xf]
    %v279 = vld [vmem:[%s1 + $0x3ec] sm:$0xf]
    %v280 = vld [vmem:[%s1 + $0x3f0] sm:$0xf]
    %v281 = vld [vmem:[%s1 + $0x3f4] sm:$0xf]
    %v282 = vld [vmem:[%s1 + $0x3f8] sm:$0xf]
    %v283 = vld [vmem:[%s1 + $0x3fc] sm:$0xf]
    %v284 = vld [vmem:[%s0] sm:$0xf]
    %v285 = vld [vmem:[%s0 + $0x4] sm:$0xf]
    %v286 = vld [vmem:[%s2] sm:$0xf]
    %v287 = vld [vmem:[%s2 + $0x4] sm:$0xf]
    %v288 = vld [vmem:[%s2 + $0x8] sm:$0xf]
    %v289 = vld [vmem:[%s2 + $0xc] sm:$0xf]
    %v290 = vld [vmem:[%s2 + $0x10] sm:$0xf]
    %v291 = vld [vmem:[%s2 + $0x14] sm:$0xf]
    %v292 = vld [vmem:[%s2 + $0x18] sm:$0xf]
    %v293 = vld [vmem:[%s2 + $0x1c] sm:$0xf]
    %v294 = vld [vmem:[%s2 + $0x20] sm:$0xf]
    %v295 = vld [vmem:[%s2 + $0x24] sm:$0xf]
    %v296 = vld [vmem:[%s2 + $0x28] sm:$0xf]
    %v297 = vld [vmem:[%s2 + $0x2c] sm:$0xf]
    %v298 = vld [vmem:[%s2 + $0x30] sm:$0xf]
    %v299 = vld [vmem:[%s2 + $0x34] sm:$0xf]
    %v300 = vld [vmem:[%s2 + $0x38] sm:$0xf]
    %v301 = vld [vmem:[%s2 + $0x3c] sm:$0xf]
    %v558 = vunpack.c.l.b16 %v28
    %v559 = vunpack.c.l.b16 %v29
    %v560 = vunpack.c.l.b16 %v30
    %v561 = vunpack.c.l.b16 %v31
    %v562 = vunpack.c.l.b16 %v32
    %v563 = vunpack.c.l.b16 %v33
    %v564 = vunpack.c.l.b16 %v34
    %v565 = vunpack.c.l.b16 %v35
    %v566 = vunpack.c.l.b16 %v36
    %v567 = vunpack.c.l.b16 %v37
    %v568 = vunpack.c.l.b16 %v38
    %v569 = vunpack.c.l.b16 %v39
    %v570 = vunpack.c.l.b16 %v40
    %v571 = vunpack.c.l.b16 %v41
    %v572 = vunpack.c.l.b16 %v42
    %v573 = vunpack.c.l.b16 %v43
    %v574 = vunpack.c.l.b16 %v44
    %v575 = vunpack.c.l.b16 %v45
    %v576 = vunpack.c.l.b16 %v46
    %v577 = vunpack.c.l.b16 %v47
    %v578 = vunpack.c.l.b16 %v48
    %v579 = vunpack.c.l.b16 %v49
    %v580 = vunpack.c.l.b16 %v50
    %v581 = vunpack.c.l.b16 %v51
    %v582 = vunpack.c.l.b16 %v52
    %v583 = vunpack.c.l.b16 %v53
    %v584 = vunpack.c.l.b16 %v54
    %v585 = vunpack.c.l.b16 %v55
    %v586 = vunpack.c.l.b16 %v56
    %v587 = vunpack.c.l.b16 %v57
    %v588 = vunpack.c.l.b16 %v58
    %v589 = vunpack.c.l.b16 %v59
    %v590 = vunpack.c.l.b16 %v60
    %v591 = vunpack.c.l.b16 %v61
    %v592 = vunpack.c.l.b16 %v62
    %v593 = vunpack.c.l.b16 %v63
    %v594 = vunpack.c.l.b16 %v64
    %v595 = vunpack.c.l.b16 %v65
    %v596 = vunpack.c.l.b16 %v66
    %v597 = vunpack.c.l.b16 %v67
    %v598 = vunpack.c.l.b16 %v68
    %v599 = vunpack.c.l.b16 %v69
    %v600 = vunpack.c.l.b16 %v70
    %v601 = vunpack.c.l.b16 %v71
    %v602 = vunpack.c.l.b16 %v72
    %v603 = vunpack.c.l.b16 %v73
    %v604 = vunpack.c.l.b16 %v74
    %v605 = vunpack.c.l.b16 %v75
    %v606 = vunpack.c.l.b16 %v76
    %v607 = vunpack.c.l.b16 %v77
    %v608 = vunpack.c.l.b16 %v78
    %v609 = vunpack.c.l.b16 %v79
    %v610 = vunpack.c.l.b16 %v80
    %v611 = vunpack.c.l.b16 %v81
    %v612 = vunpack.c.l.b16 %v82
    %v613 = vunpack.c.l.b16 %v83
    %v614 = vunpack.c.l.b16 %v84
    %v615 = vunpack.c.l.b16 %v85
    %v616 = vunpack.c.l.b16 %v86
    %v617 = vunpack.c.l.b16 %v87
    %v618 = vunpack.c.l.b16 %v88
    %v619 = vunpack.c.l.b16 %v89
    %v620 = vunpack.c.l.b16 %v90
    %v621 = vunpack.c.l.b16 %v91
    %v622 = vunpack.c.l.b16 %v92
    %v623 = vunpack.c.l.b16 %v93
    %v624 = vunpack.c.l.b16 %v94
    %v625 = vunpack.c.l.b16 %v95
    %v626 = vunpack.c.l.b16 %v96
    %v627 = vunpack.c.l.b16 %v97
    %v628 = vunpack.c.l.b16 %v98
    %v629 = vunpack.c.l.b16 %v99
    %v630 = vunpack.c.l.b16 %v100
    %v631 = vunpack.c.l.b16 %v101
    %v632 = vunpack.c.l.b16 %v102
    %v633 = vunpack.c.l.b16 %v103
    %v634 = vunpack.c.l.b16 %v104
    %v635 = vunpack.c.l.b16 %v105
    %v636 = vunpack.c.l.b16 %v106
    %v637 = vunpack.c.l.b16 %v107
    %v638 = vunpack.c.l.b16 %v108
    %v639 = vunpack.c.l.b16 %v109
    %v640 = vunpack.c.l.b16 %v110
    %v641 = vunpack.c.l.b16 %v111
    %v642 = vunpack.c.l.b16 %v112
    %v643 = vunpack.c.l.b16 %v113
    %v644 = vunpack.c.l.b16 %v114
    %v645 = vunpack.c.l.b16 %v115
    %v646 = vunpack.c.l.b16 %v116
    %v647 = vunpack.c.l.b16 %v117
    %v648 = vunpack.c.l.b16 %v118
    %v649 = vunpack.c.l.b16 %v119
    %v650 = vunpack.c.l.b16 %v120
    %v651 = vunpack.c.l.b16 %v121
    %v652 = vunpack.c.l.b16 %v122
    %v653 = vunpack.c.l.b16 %v123
    %v654 = vunpack.c.l.b16 %v124
    %v655 = vunpack.c.l.b16 %v125
    %v656 = vunpack.c.l.b16 %v126
    %v657 = vunpack.c.l.b16 %v127
    %v658 = vunpack.c.l.b16 %v128
    %v659 = vunpack.c.l.b16 %v129
    %v660 = vunpack.c.l.b16 %v130
    %v661 = vunpack.c.l.b16 %v131
    %v662 = vunpack.c.l.b16 %v132
    %v663 = vunpack.c.l.b16 %v133
    %v664 = vunpack.c.l.b16 %v134
    %v665 = vunpack.c.l.b16 %v135
    %v666 = vunpack.c.l.b16 %v136
    %v667 = vunpack.c.l.b16 %v137
    %v668 = vunpack.c.l.b16 %v138
    %v669 = vunpack.c.l.b16 %v139
    %v670 = vunpack.c.l.b16 %v140
    %v671 = vunpack.c.l.b16 %v141
    %v672 = vunpack.c.l.b16 %v142
    %v673 = vunpack.c.l.b16 %v143
    %v674 = vunpack.c.l.b16 %v144
    %v675 = vunpack.c.l.b16 %v145
    %v676 = vunpack.c.l.b16 %v146
    %v677 = vunpack.c.l.b16 %v147
    %v678 = vunpack.c.l.b16 %v148
    %v679 = vunpack.c.l.b16 %v149
    %v680 = vunpack.c.l.b16 %v150
    %v681 = vunpack.c.l.b16 %v151
    %v682 = vunpack.c.l.b16 %v152
    %v683 = vunpack.c.l.b16 %v153
    %v684 = vunpack.c.l.b16 %v154
    %v685 = vunpack.c.l.b16 %v155
    %v686 = vunpack.c.l.b16 %v156
    %v687 = vunpack.c.l.b16 %v157
    %v688 = vunpack.c.l.b16 %v158
    %v689 = vunpack.c.l.b16 %v159
    %v690 = vunpack.c.l.b16 %v160
    %v691 = vunpack.c.l.b16 %v161
    %v692 = vunpack.c.l.b16 %v162
    %v693 = vunpack.c.l.b16 %v163
    %v694 = vunpack.c.l.b16 %v164
    %v695 = vunpack.c.l.b16 %v165
    %v696 = vunpack.c.l.b16 %v166
    %v697 = vunpack.c.l.b16 %v167
    %v698 = vunpack.c.l.b16 %v168
    %v699 = vunpack.c.l.b16 %v169
    %v700 = vunpack.c.l.b16 %v170
    %v701 = vunpack.c.l.b16 %v171
    %v702 = vunpack.c.l.b16 %v172
    %v703 = vunpack.c.l.b16 %v173
    %v704 = vunpack.c.l.b16 %v174
    %v705 = vunpack.c.l.b16 %v175
    %v706 = vunpack.c.l.b16 %v176
    %v707 = vunpack.c.l.b16 %v177
    %v708 = vunpack.c.l.b16 %v178
    %v709 = vunpack.c.l.b16 %v179
    %v710 = vunpack.c.l.b16 %v180
    %v711 = vunpack.c.l.b16 %v181
    %v712 = vunpack.c.l.b16 %v182
    %v713 = vunpack.c.l.b16 %v183
    %v714 = vunpack.c.l.b16 %v184
    %v715 = vunpack.c.l.b16 %v185
    %v716 = vunpack.c.l.b16 %v186
    %v717 = vunpack.c.l.b16 %v187
    %v718 = vunpack.c.l.b16 %v188
    %v719 = vunpack.c.l.b16 %v189
    %v720 = vunpack.c.l.b16 %v190
    %v721 = vunpack.c.l.b16 %v191
    %v722 = vunpack.c.l.b16 %v192
    %v723 = vunpack.c.l.b16 %v193
    %v724 = vunpack.c.l.b16 %v194
    %v725 = vunpack.c.l.b16 %v195
    %v726 = vunpack.c.l.b16 %v196
    %v727 = vunpack.c.l.b16 %v197
    %v728 = vunpack.c.l.b16 %v198
    %v729 = vunpack.c.l.b16 %v199
    %v730 = vunpack.c.l.b16 %v200
    %v731 = vunpack.c.l.b16 %v201
    %v732 = vunpack.c.l.b16 %v202
    %v733 = vunpack.c.l.b16 %v203
    %v734 = vunpack.c.l.b16 %v204
    %v735 = vunpack.c.l.b16 %v205
    %v736 = vunpack.c.l.b16 %v206
    %v737 = vunpack.c.l.b16 %v207
    %v738 = vunpack.c.l.b16 %v208
    %v739 = vunpack.c.l.b16 %v209
    %v740 = vunpack.c.l.b16 %v210
    %v741 = vunpack.c.l.b16 %v211
    %v742 = vunpack.c.l.b16 %v212
    %v743 = vunpack.c.l.b16 %v213
    %v744 = vunpack.c.l.b16 %v214
    %v745 = vunpack.c.l.b16 %v215
    %v746 = vunpack.c.l.b16 %v216
    %v747 = vunpack.c.l.b16 %v217
    %v748 = vunpack.c.l.b16 %v218
    %v749 = vunpack.c.l.b16 %v219
    %v750 = vunpack.c.l.b16 %v220
    %v751 = vunpack.c.l.b16 %v221
    %v752 = vunpack.c.l.b16 %v222
    %v753 = vunpack.c.l.b16 %v223
    %v754 = vunpack.c.l.b16 %v224
    %v755 = vunpack.c.l.b16 %v225
    %v756 = vunpack.c.l.b16 %v226
    %v757 = vunpack.c.l.b16 %v227
    %v758 = vunpack.c.l.b16 %v228
    %v759 = vunpack.c.l.b16 %v229
    %v760 = vunpack.c.l.b16 %v230
    %v761 = vunpack.c.l.b16 %v231
    %v762 = vunpack.c.l.b16 %v232
    %v763 = vunpack.c.l.b16 %v233
    %v764 = vunpack.c.l.b16 %v234
    %v765 = vunpack.c.l.b16 %v235
    %v766 = vunpack.c.l.b16 %v236
    %v767 = vunpack.c.l.b16 %v237
    %v768 = vunpack.c.l.b16 %v238
    %v769 = vunpack.c.l.b16 %v239
    %v770 = vunpack.c.l.b16 %v240
    %v771 = vunpack.c.l.b16 %v241
    %v772 = vunpack.c.l.b16 %v242
    %v773 = vunpack.c.l.b16 %v243
    %v774 = vunpack.c.l.b16 %v244
    %v775 = vunpack.c.l.b16 %v245
    %v776 = vunpack.c.l.b16 %v246
    %v777 = vunpack.c.l.b16 %v247
    %v778 = vunpack.c.l.b16 %v248
    %v779 = vunpack.c.l.b16 %v249
    %v780 = vunpack.c.l.b16 %v250
    %v781 = vunpack.c.l.b16 %v251
    %v782 = vunpack.c.l.b16 %v252
    %v783 = vunpack.c.l.b16 %v253
    %v784 = vunpack.c.l.b16 %v254
    %v785 = vunpack.c.l.b16 %v255
    %v786 = vunpack.c.l.b16 %v256
    %v787 = vunpack.c.l.b16 %v257
    %v788 = vunpack.c.l.b16 %v258
    %v789 = vunpack.c.l.b16 %v259
    %v790 = vunpack.c.l.b16 %v260
    %v791 = vunpack.c.l.b16 %v261
    %v792 = vunpack.c.l.b16 %v262
    %v793 = vunpack.c.l.b16 %v263
    %v794 = vunpack.c.l.b16 %v264
    %v795 = vunpack.c.l.b16 %v265
    %v796 = vunpack.c.l.b16 %v266
    %v797 = vunpack.c.l.b16 %v267
    %v798 = vunpack.c.l.b16 %v268
    %v799 = vunpack.c.l.b16 %v269
    %v800 = vunpack.c.l.b16 %v270
    %v801 = vunpack.c.l.b16 %v271
    %v802 = vunpack.c.l.b16 %v272
    %v803 = vunpack.c.l.b16 %v273
    %v804 = vunpack.c.l.b16 %v274
    %v805 = vunpack.c.l.b16 %v275
    %v806 = vunpack.c.l.b16 %v276
    %v807 = vunpack.c.l.b16 %v277
    %v808 = vunpack.c.l.b16 %v278
    %v809 = vunpack.c.l.b16 %v279
    %v810 = vunpack.c.l.b16 %v280
    %v811 = vunpack.c.l.b16 %v281
    %v812 = vunpack.c.l.b16 %v282
    %v813 = vunpack.c.l.b16 %v283
    %v814 = vpack.c.b16 %v559, %v558
    %v815 = vpack.c.b16 %v561, %v560
    %v816 = vpack.c.b16 %v563, %v562
    %v817 = vpack.c.b16 %v565, %v564
    %v818 = vpack.c.b16 %v567, %v566
    %v819 = vpack.c.b16 %v569, %v568
    %v820 = vpack.c.b16 %v571, %v570
    %v821 = vpack.c.b16 %v573, %v572
    %v822 = vpack.c.b16 %v575, %v574
    %v823 = vpack.c.b16 %v577, %v576
    %v824 = vpack.c.b16 %v579, %v578
    %v825 = vpack.c.b16 %v581, %v580
    %v826 = vpack.c.b16 %v583, %v582
    %v827 = vpack.c.b16 %v585, %v584
    %v828 = vpack.c.b16 %v587, %v586
    %v829 = vpack.c.b16 %v589, %v588
    %v830 = vpack.c.b16 %v591, %v590
    %v831 = vpack.c.b16 %v593, %v592
    %v832 = vpack.c.b16 %v595, %v594
    %v833 = vpack.c.b16 %v597, %v596
    %v834 = vpack.c.b16 %v599, %v598
    %v835 = vpack.c.b16 %v601, %v600
    %v836 = vpack.c.b16 %v603, %v602
    %v837 = vpack.c.b16 %v605, %v604
    %v838 = vpack.c.b16 %v607, %v606
    %v839 = vpack.c.b16 %v609, %v608
    %v840 = vpack.c.b16 %v611, %v610
    %v841 = vpack.c.b16 %v613, %v612
    %v842 = vpack.c.b16 %v615, %v614
    %v843 = vpack.c.b16 %v617, %v616
    %v844 = vpack.c.b16 %v619, %v618
    %v845 = vpack.c.b16 %v621, %v620
    %v846 = vpack.c.b16 %v623, %v622
    %v847 = vpack.c.b16 %v625, %v624
    %v848 = vpack.c.b16 %v627, %v626
    %v849 = vpack.c.b16 %v629, %v628
    %v850 = vpack.c.b16 %v631, %v630
    %v851 = vpack.c.b16 %v633, %v632
    %v852 = vpack.c.b16 %v635, %v634
    %v853 = vpack.c.b16 %v637, %v636
    %v854 = vpack.c.b16 %v639, %v638
    %v855 = vpack.c.b16 %v641, %v640
    %v856 = vpack.c.b16 %v643, %v642
    %v857 = vpack.c.b16 %v645, %v644
    %v858 = vpack.c.b16 %v647, %v646
    %v859 = vpack.c.b16 %v649, %v648
    %v860 = vpack.c.b16 %v651, %v650
    %v861 = vpack.c.b16 %v653, %v652
    %v862 = vpack.c.b16 %v655, %v654
    %v863 = vpack.c.b16 %v657, %v656
    %v864 = vpack.c.b16 %v659, %v658
    %v865 = vpack.c.b16 %v661, %v660
    %v866 = vpack.c.b16 %v663, %v662
    %v867 = vpack.c.b16 %v665, %v664
    %v868 = vpack.c.b16 %v667, %v666
    %v869 = vpack.c.b16 %v669, %v668
    %v870 = vpack.c.b16 %v671, %v670
    %v871 = vpack.c.b16 %v673, %v672
    %v872 = vpack.c.b16 %v675, %v674
    %v873 = vpack.c.b16 %v677, %v676
    %v874 = vpack.c.b16 %v679, %v678
    %v875 = vpack.c.b16 %v681, %v680
    %v876 = vpack.c.b16 %v683, %v682
    %v877 = vpack.c.b16 %v685, %v684
    %v878 = vpack.c.b16 %v687, %v686
    %v879 = vpack.c.b16 %v689, %v688
    %v880 = vpack.c.b16 %v691, %v690
    %v881 = vpack.c.b16 %v693, %v692
    %v882 = vpack.c.b16 %v695, %v694
    %v883 = vpack.c.b16 %v697, %v696
    %v884 = vpack.c.b16 %v699, %v698
    %v885 = vpack.c.b16 %v701, %v700
    %v886 = vpack.c.b16 %v703, %v702
    %v887 = vpack.c.b16 %v705, %v704
    %v888 = vpack.c.b16 %v707, %v706
    %v889 = vpack.c.b16 %v709, %v708
    %v890 = vpack.c.b16 %v711, %v710
    %v891 = vpack.c.b16 %v713, %v712
    %v892 = vpack.c.b16 %v715, %v714
    %v893 = vpack.c.b16 %v717, %v716
    %v894 = vpack.c.b16 %v719, %v718
    %v895 = vpack.c.b16 %v721, %v720
    %v896 = vpack.c.b16 %v723, %v722
    %v897 = vpack.c.b16 %v725, %v724
    %v898 = vpack.c.b16 %v727, %v726
    %v899 = vpack.c.b16 %v729, %v728
    %v900 = vpack.c.b16 %v731, %v730
    %v901 = vpack.c.b16 %v733, %v732
    %v902 = vpack.c.b16 %v735, %v734
    %v903 = vpack.c.b16 %v737, %v736
    %v904 = vpack.c.b16 %v739, %v738
    %v905 = vpack.c.b16 %v741, %v740
    %v906 = vpack.c.b16 %v743, %v742
    %v907 = vpack.c.b16 %v745, %v744
    %v908 = vpack.c.b16 %v747, %v746
    %v909 = vpack.c.b16 %v749, %v748
    %v910 = vpack.c.b16 %v751, %v750
    %v911 = vpack.c.b16 %v753, %v752
    %v912 = vpack.c.b16 %v755, %v754
    %v913 = vpack.c.b16 %v757, %v756
    %v914 = vpack.c.b16 %v759, %v758
    %v915 = vpack.c.b16 %v761, %v760
    %v916 = vpack.c.b16 %v763, %v762
    %v917 = vpack.c.b16 %v765, %v764
    %v918 = vpack.c.b16 %v767, %v766
    %v919 = vpack.c.b16 %v769, %v768
    %v920 = vpack.c.b16 %v771, %v770
    %v921 = vpack.c.b16 %v773, %v772
    %v922 = vpack.c.b16 %v775, %v774
    %v923 = vpack.c.b16 %v777, %v776
    %v924 = vpack.c.b16 %v779, %v778
    %v925 = vpack.c.b16 %v781, %v780
    %v926 = vpack.c.b16 %v783, %v782
    %v927 = vpack.c.b16 %v785, %v784
    %v928 = vpack.c.b16 %v787, %v786
    %v929 = vpack.c.b16 %v789, %v788
    %v930 = vpack.c.b16 %v791, %v790
    %v931 = vpack.c.b16 %v793, %v792
    %v932 = vpack.c.b16 %v795, %v794
    %v933 = vpack.c.b16 %v797, %v796
    %v934 = vpack.c.b16 %v799, %v798
    %v935 = vpack.c.b16 %v801, %v800
    %v936 = vpack.c.b16 %v803, %v802
    %v937 = vpack.c.b16 %v805, %v804
    %v938 = vpack.c.b16 %v807, %v806
    %v939 = vpack.c.b16 %v809, %v808
    %v940 = vpack.c.b16 %v811, %v810
    %v941 = vpack.c.b16 %v813, %v812
    %v1086 = vunpack.c.l.b16 %v286
    %v1087 = vunpack.c.l.b16 %v287
    %v1088 = vunpack.c.l.b16 %v288
    %v1089 = vunpack.c.l.b16 %v289
    %v1090 = vunpack.c.l.b16 %v290
    %v1091 = vunpack.c.l.b16 %v291
    %v1092 = vunpack.c.l.b16 %v292
    %v1093 = vunpack.c.l.b16 %v293
    %v1094 = vunpack.c.l.b16 %v294
    %v1095 = vunpack.c.l.b16 %v295
    %v1096 = vunpack.c.l.b16 %v296
    %v1097 = vunpack.c.l.b16 %v297
    %v1098 = vunpack.c.l.b16 %v298
    %v1099 = vunpack.c.l.b16 %v299
    %v1100 = vunpack.c.l.b16 %v300
    %v1101 = vunpack.c.l.b16 %v301
    %v1102 = vpack.c.b16 %v1087, %v1086
    %v1103 = vpack.c.b16 %v1089, %v1088
    %v1104 = vpack.c.b16 %v1091, %v1090
    %v1105 = vpack.c.b16 %v1093, %v1092
    %v1106 = vpack.c.b16 %v1095, %v1094
    %v1107 = vpack.c.b16 %v1097, %v1096
    %v1108 = vpack.c.b16 %v1099, %v1098
    %v1109 = vpack.c.b16 %v1101, %v1100
    %1118 = vmatprep.subr.bf16.mxu0 0
    %1119 = vmatpush1.bf16.msra.mxu0 %v1102
    %1120 = vmatprep.subr.bf16.mxu0 0
    %1121 = vmatpush1.bf16.msra.mxu0 %v1103
    %1122 = vmatprep.subr.bf16.mxu0 0
    %1123 = vmatpush1.bf16.msra.mxu0 %v1104
    %1124 = vmatprep.subr.bf16.mxu0 0
    %1125 = vmatpush1.bf16.msra.mxu0 %v1105
    %1126 = vmatprep.subr.bf16.mxu0 0
    %1127 = vmatpush1.bf16.msra.mxu0 %v1106
    %1128 = vmatprep.subr.bf16.mxu0 0
    %1129 = vmatpush1.bf16.msra.mxu0 %v1107
    %1130 = vmatprep.subr.bf16.mxu0 0
    %1131 = vmatpush1.bf16.msra.mxu0 %v1108
    %1132 = vmatprep.subr.bf16.mxu0 0
    %1133 = vmatpush1.bf16.msra.mxu0 %v1109
    %1134 = vmatprep.subr.bf16.mxu0 0
    %1135 = vmatpush1.bf16.msra.mxu0 0
    %1136 = vmatprep.subr.bf16.mxu0 0
    %1137 = vmatpush1.bf16.msra.mxu0 0
    %1138 = vmatprep.subr.bf16.mxu0 0
    %1139 = vmatpush1.bf16.msra.mxu0 0
    %1140 = vmatprep.subr.bf16.mxu0 0
    %1141 = vmatpush1.bf16.msra.mxu0 0
    %1142 = vmatprep.subr.bf16.mxu0 0
    %1143 = vmatpush1.bf16.msra.mxu0 0
    %1144 = vmatprep.subr.bf16.mxu0 0
    %1145 = vmatpush1.bf16.msra.mxu0 0
    %1146 = vmatprep.subr.bf16.mxu0 0
    %1147 = vmatpush1.bf16.msra.mxu0 0
    %1148 = vmatprep.subr.bf16.mxu0 0
    %1149 = vmatpush1.bf16.msra.mxu0 0
    %1150 = vmatprep.mubr.bf16.mxu0 0
    %1151 = vmatmul.mubr.bf16.gmra.mrb[0].mxu0 %v814
    %v1152 = vpop.f32.mrb[0].mxu0
    %v1153 = vadd.f32 0.0, %v1152
    %v1154 = vpop.f32.mrb[0].mxu0
    %v1155 = vpop.f32.mrb[0].mxu0
    %v1156 = vadd.f32 0.0, %v1155
    %v1157 = vpop.f32.mrb[0].mxu0
    %1158 = vmatprep.mubr.bf16.mxu0 0
    %1159 = vmatmul.mubr.bf16.gmra.mrb[0].mxu0 %v815
    %v1160 = vpop.f32.mrb[0].mxu0
    %v1161 = vadd.f32 0.0, %v1160
    %v1162 = vpop.f32.mrb[0].mxu0
    %v1163 = vpop.f32.mrb[0].mxu0
    %v1164 = vadd.f32 0.0, %v1163
    %v1165 = vpop.f32.mrb[0].mxu0
    %1166 = vmatprep.mubr.bf16.mxu0 0
    %1167 = vmatmul.mubr.bf16.gmra.mrb[0].mxu0 %v816
    %v1168 = vpop.f32.mrb[0].mxu0
    %v1169 = vadd.f32 0.0, %v1168
    %v1170 = vpop.f32.mrb[0].mxu0
    %v1171 = vpop.f32.mrb[0].mxu0
    %v1172 = vadd.f32 0.0, %v1171
    %v1173 = vpop.f32.mrb[0].mxu0
    %1174 = vmatprep.mubr.bf16.mxu0 0
    %1175 = vmatmul.mubr.bf16.gmra.mrb[0].mxu0 %v817
    %v1176 = vpop.f32.mrb[0].mxu0
    %v1177 = vadd.f32 0.0, %v1176
    %v1178 = vpop.f32.mrb[0].mxu0
    %v1179 = vpop.f32.mrb[0].mxu0
    %v1180 = vadd.f32 0.0, %v1179
    %v1181 = vpop.f32.mrb[0].mxu0
    %1182 = vmatprep.mubr.bf16.mxu0 0
    %1183 = vmatmul.mubr.bf16.gmra.mrb[0].mxu0 %v818
    %v1184 = vpop.f32.mrb[0].mxu0
    %v1185 = vadd.f32 0.0, %v1184
    %v1186 = vpop.f32.mrb[0].mxu0
    %v1187 = vpop.f32.mrb[0].mxu0
    %v1188 = vadd.f32 0.0, %v1187
    %v1189 = vpop.f32.mrb[0].mxu0
    %1190 = vmatprep.mubr.bf16.mxu0 0
    %1191 = vmatmul.mubr.bf16.gmra.mrb[0].mxu0 %v819
    %v1192 = vpop.f32.mrb[0].mxu0
    %v1193 = vadd.f32 0.0, %v1192
    %v1194 = vpop.f32.mrb[0].mxu0
    %v1195 = vpop.f32.mrb[0].mxu0
    %v1196 = vadd.f32 0.0, %v1195
    %v1197 = vpop.f32.mrb[0].mxu0
    %1198 = vmatprep.mubr.bf16.mxu0 0
    %1199 = vmatmul.mubr.bf16.gmra.mrb[0].mxu0 %v820
    %v1200 = vpop.f32.mrb[0].mxu0
    %v1201 = vadd.f32 0.0, %v1200
    %v1202 = vpop.f32.mrb[0].mxu0
    %v1203 = vpop.f32.mrb[0].mxu0
    %v1204 = vadd.f32 0.0, %v1203
    %v1205 = vpop.f32.mrb[0].mxu0
    %1206 = vmatprep.mubr.bf16.mxu0 0
    %1207 = vmatmul.mubr.bf16.gmra.mrb[0].mxu0 %v821
    %v1208 = vpop.f32.mrb[0].mxu0
    %v1209 = vadd.f32 0.0, %v1208
    %v1210 = vpop.f32.mrb[0].mxu0
    %v1211 = vpop.f32.mrb[0].mxu0
    %v1212 = vadd.f32 0.0, %v1211
    %v1213 = vpop.f32.mrb[0].mxu0
    %1214 = vmatprep.mubr.bf16.mxu0 0
    %1215 = vmatmul.mubr.bf16.gmra.mrb[0].mxu0 %v822
    %v1216 = vpop.f32.mrb[0].mxu0
    %v1217 = vadd.f32 0.0, %v1216
    %v1218 = vpop.f32.mrb[0].mxu0
    %v1219 = vpop.f32.mrb[0].mxu0
    %v1220 = vadd.f32 0.0, %v1219
    %v1221 = vpop.f32.mrb[0].mxu0
    %1222 = vmatprep.mubr.bf16.mxu0 0
    %1223 = vmatmul.mubr.bf16.gmra.mrb[0].mxu0 %v823
    %v1224 = vpop.f32.mrb[0].mxu0
    %v1225 = vadd.f32 0.0, %v1224
    %v1226 = vpop.f32.mrb[0].mxu0
    %v1227 = vpop.f32.mrb[0].mxu0
    %v1228 = vadd.f32 0.0, %v1227
    %v1229 = vpop.f32.mrb[0].mxu0
    %1230 = vmatprep.mubr.bf16.mxu0 0
    %1231 = vmatmul.mubr.bf16.gmra.mrb[0].mxu0 %v824
    %v1232 = vpop.f32.mrb[0].mxu0
    %v1233 = vadd.f32 0.0, %v1232
    %v1234 = vpop.f32.mrb[0].mxu0
    %v1235 = vpop.f32.mrb[0].mxu0
    %v1236 = vadd.f32 0.0, %v1235
    %v1237 = vpop.f32.mrb[0].mxu0
    %1238 = vmatprep.mubr.bf16.mxu0 0
    %1239 = vmatmul.mubr.bf16.gmra.mrb[0].mxu0 %v825
    %v1240 = vpop.f32.mrb[0].mxu0
    %v1241 = vadd.f32 0.0, %v1240
    %v1242 = vpop.f32.mrb[0].mxu0
    %v1243 = vpop.f32.mrb[0].mxu0
    %v1244 = vadd.f32 0.0, %v1243
    %v1245 = vpop.f32.mrb[0].mxu0
    %1246 = vmatprep.mubr.bf16.mxu0 0
    %1247 = vmatmul.mubr.bf16.gmra.mrb[0].mxu0 %v826
    %v1248 = vpop.f32.mrb[0].mxu0
    %v1249 = vadd.f32 0.0, %v1248
    %v1250 = vpop.f32.mrb[0].mxu0
    %v1251 = vpop.f32.mrb[0].mxu0
    %v1252 = vadd.f32 0.0, %v1251
    %v1253 = vpop.f32.mrb[0].mxu0
    %1254 = vmatprep.mubr.bf16.mxu0 0
    %1255 = vmatmul.mubr.bf16.gmra.mrb[0].mxu0 %v827
    %v1256 = vpop.f32.mrb[0].mxu0
    %v1257 = vadd.f32 0.0, %v1256
    %v1258 = vpop.f32.mrb[0].mxu0
    %v1259 = vpop.f32.mrb[0].mxu0
    %v1260 = vadd.f32 0.0, %v1259
    %v1261 = vpop.f32.mrb[0].mxu0
    %1262 = vmatprep.mubr.bf16.mxu0 0
    %1263 = vmatmul.mubr.bf16.gmra.mrb[0].mxu0 %v828
    %v1264 = vpop.f32.mrb[0].mxu0
    %v1265 = vadd.f32 0.0, %v1264
    %v1266 = vpop.f32.mrb[0].mxu0
    %v1267 = vpop.f32.mrb[0].mxu0
    %v1268 = vadd.f32 0.0, %v1267
    %v1269 = vpop.f32.mrb[0].mxu0
    %1270 = vmatprep.mubr.bf16.mxu0 0
    %1271 = vmatmul.mubr.bf16.gmra.mrb[0].mxu0 %v829
    %v1272 = vpop.f32.mrb[0].mxu0
    %v1273 = vadd.f32 0.0, %v1272
    %v1274 = vpop.f32.mrb[0].mxu0
    %v1275 = vpop.f32.mrb[0].mxu0
    %v1276 = vadd.f32 0.0, %v1275
    %v1277 = vpop.f32.mrb[0].mxu0
    %1278 = vmatprep.mubr.bf16.mxu0 0
    %1279 = vmatmul.mubr.bf16.gmra.mrb[0].mxu0 %v830
    %v1280 = vpop.f32.mrb[0].mxu0
    %v1281 = vadd.f32 0.0, %v1280
    %v1282 = vpop.f32.mrb[0].mxu0
    %v1283 = vpop.f32.mrb[0].mxu0
    %v1284 = vadd.f32 0.0, %v1283
    %v1285 = vpop.f32.mrb[0].mxu0
    %1286 = vmatprep.mubr.bf16.mxu0 0
    %1287 = vmatmul.mubr.bf16.gmra.mrb[0].mxu0 %v831
    %v1288 = vpop.f32.mrb[0].mxu0
    %v1289 = vadd.f32 0.0, %v1288
    %v1290 = vpop.f32.mrb[0].mxu0
    %v1291 = vpop.f32.mrb[0].mxu0
    %v1292 = vadd.f32 0.0, %v1291
    %v1293 = vpop.f32.mrb[0].mxu0
    %1294 = vmatprep.mubr.bf16.mxu0 0
    %1295 = vmatmul.mubr.bf16.gmra.mrb[0].mxu0 %v832
    %v1296 = vpop.f32.mrb[0].mxu0
    %v1297 = vadd.f32 0.0, %v1296
    %v1298 = vpop.f32.mrb[0].mxu0
    %v1299 = vpop.f32.mrb[0].mxu0
    %v1300 = vadd.f32 0.0, %v1299
    %v1301 = vpop.f32.mrb[0].mxu0
    %1302 = vmatprep.mubr.bf16.mxu0 0
    %1303 = vmatmul.mubr.bf16.gmra.mrb[0].mxu0 %v833
    %v1304 = vpop.f32.mrb[0].mxu0
    %v1305 = vadd.f32 0.0, %v1304
    %v1306 = vpop.f32.mrb[0].mxu0
    %v1307 = vpop.f32.mrb[0].mxu0
    %v1308 = vadd.f32 0.0, %v1307
    %v1309 = vpop.f32.mrb[0].mxu0
    %1310 = vmatprep.mubr.bf16.mxu0 0
    %1311 = vmatmul.mubr.bf16.gmra.mrb[0].mxu0 %v834
    %v1312 = vpop.f32.mrb[0].mxu0
    %v1313 = vadd.f32 0.0, %v1312
    %v1314 = vpop.f32.mrb[0].mxu0
    %v1315 = vpop.f32.mrb[0].mxu0
    %v1316 = vadd.f32 0.0, %v1315
    %v1317 = vpop.f32.mrb[0].mxu0
    %1318 = vmatprep.mubr.bf16.mxu0 0
    %1319 = vmatmul.mubr.bf16.gmra.mrb[0].mxu0 %v835
    %v1320 = vpop.f32.mrb[0].mxu0
    %v1321 = vadd.f32 0.0, %v1320
    %v1322 = vpop.f32.mrb[0].mxu0
    %v1323 = vpop.f32.mrb[0].mxu0
    %v1324 = vadd.f32 0.0, %v1323
    %v1325 = vpop.f32.mrb[0].mxu0
    %1326 = vmatprep.mubr.bf16.mxu0 0
    %1327 = vmatmul.mubr.bf16.gmra.mrb[0].mxu0 %v836
    %v1328 = vpop.f32.mrb[0].mxu0
    %v1329 = vadd.f32 0.0, %v1328
    %v1330 = vpop.f32.mrb[0].mxu0
    %v1331 = vpop.f32.mrb[0].mxu0
    %v1332 = vadd.f32 0.0, %v1331
    %v1333 = vpop.f32.mrb[0].mxu0
    %1334 = vmatprep.mubr.bf16.mxu0 0
    %1335 = vmatmul.mubr.bf16.gmra.mrb[0].mxu0 %v837
    %v1336 = vpop.f32.mrb[0].mxu0
    %v1337 = vadd.f32 0.0, %v1336
    %v1338 = vpop.f32.mrb[0].mxu0
    %v1339 = vpop.f32.mrb[0].mxu0
    %v1340 = vadd.f32 0.0, %v1339
    %v1341 = vpop.f32.mrb[0].mxu0
    %1342 = vmatprep.mubr.bf16.mxu0 0
    %1343 = vmatmul.mubr.bf16.gmra.mrb[0].mxu0 %v838
    %v1344 = vpop.f32.mrb[0].mxu0
    %v1345 = vadd.f32 0.0, %v1344
    %v1346 = vpop.f32.mrb[0].mxu0
    %v1347 = vpop.f32.mrb[0].mxu0
    %v1348 = vadd.f32 0.0, %v1347
    %v1349 = vpop.f32.mrb[0].mxu0
    %1350 = vmatprep.mubr.bf16.mxu0 0
    %1351 = vmatmul.mubr.bf16.gmra.mrb[0].mxu0 %v839
    %v1352 = vpop.f32.mrb[0].mxu0
    %v1353 = vadd.f32 0.0, %v1352
    %v1354 = vpop.f32.mrb[0].mxu0
    %v1355 = vpop.f32.mrb[0].mxu0
    %v1356 = vadd.f32 0.0, %v1355
    %v1357 = vpop.f32.mrb[0].mxu0
    %1358 = vmatprep.mubr.bf16.mxu0 0
    %1359 = vmatmul.mubr.bf16.gmra.mrb[0].mxu0 %v840
    %v1360 = vpop.f32.mrb[0].mxu0
    %v1361 = vadd.f32 0.0, %v1360
    %v1362 = vpop.f32.mrb[0].mxu0
    %v1363 = vpop.f32.mrb[0].mxu0
    %v1364 = vadd.f32 0.0, %v1363
    %v1365 = vpop.f32.mrb[0].mxu0
    %1366 = vmatprep.mubr.bf16.mxu0 0
    %1367 = vmatmul.mubr.bf16.gmra.mrb[0].mxu0 %v841
    %v1368 = vpop.f32.mrb[0].mxu0
    %v1369 = vadd.f32 0.0, %v1368
    %v1370 = vpop.f32.mrb[0].mxu0
    %v1371 = vpop.f32.mrb[0].mxu0
    %v1372 = vadd.f32 0.0, %v1371
    %v1373 = vpop.f32.mrb[0].mxu0
    %1374 = vmatprep.mubr.bf16.mxu0 0
    %1375 = vmatmul.mubr.bf16.gmra.mrb[0].mxu0 %v842
    %v1376 = vpop.f32.mrb[0].mxu0
    %v1377 = vadd.f32 0.0, %v1376
    %v1378 = vpop.f32.mrb[0].mxu0
    %v1379 = vpop.f32.mrb[0].mxu0
    %v1380 = vadd.f32 0.0, %v1379
    %v1381 = vpop.f32.mrb[0].mxu0
    %1382 = vmatprep.mubr.bf16.mxu0 0
    %1383 = vmatmul.mubr.bf16.gmra.mrb[0].mxu0 %v843
    %v1384 = vpop.f32.mrb[0].mxu0
    %v1385 = vadd.f32 0.0, %v1384
    %v1386 = vpop.f32.mrb[0].mxu0
    %v1387 = vpop.f32.mrb[0].mxu0
    %v1388 = vadd.f32 0.0, %v1387
    %v1389 = vpop.f32.mrb[0].mxu0
    %1390 = vmatprep.mubr.bf16.mxu0 0
    %1391 = vmatmul.mubr.bf16.gmra.mrb[0].mxu0 %v844
    %v1392 = vpop.f32.mrb[0].mxu0
    %v1393 = vadd.f32 0.0, %v1392
    %v1394 = vpop.f32.mrb[0].mxu0
    %v1395 = vpop.f32.mrb[0].mxu0
    %v1396 = vadd.f32 0.0, %v1395
    %v1397 = vpop.f32.mrb[0].mxu0
    %1398 = vmatprep.mubr.bf16.mxu0 0
    %1399 = vmatmul.mubr.bf16.gmra.mrb[0].mxu0 %v845
    %v1400 = vpop.f32.mrb[0].mxu0
    %v1401 = vadd.f32 0.0, %v1400
    %v1402 = vpop.f32.mrb[0].mxu0
    %v1403 = vpop.f32.mrb[0].mxu0
    %v1404 = vadd.f32 0.0, %v1403
    %v1405 = vpop.f32.mrb[0].mxu0
    %1406 = vmatprep.mubr.bf16.mxu0 0
    %1407 = vmatmul.mubr.bf16.gmra.mrb[0].mxu0 %v846
    %v1408 = vpop.f32.mrb[0].mxu0
    %v1409 = vadd.f32 0.0, %v1408
    %v1410 = vpop.f32.mrb[0].mxu0
    %v1411 = vpop.f32.mrb[0].mxu0
    %v1412 = vadd.f32 0.0, %v1411
    %v1413 = vpop.f32.mrb[0].mxu0
    %1414 = vmatprep.mubr.bf16.mxu0 0
    %1415 = vmatmul.mubr.bf16.gmra.mrb[0].mxu0 %v847
    %v1416 = vpop.f32.mrb[0].mxu0
    %v1417 = vadd.f32 0.0, %v1416
    %v1418 = vpop.f32.mrb[0].mxu0
    %v1419 = vpop.f32.mrb[0].mxu0
    %v1420 = vadd.f32 0.0, %v1419
    %v1421 = vpop.f32.mrb[0].mxu0
    %1422 = vmatprep.mubr.bf16.mxu0 0
    %1423 = vmatmul.mubr.bf16.gmra.mrb[0].mxu0 %v848
    %v1424 = vpop.f32.mrb[0].mxu0
    %v1425 = vadd.f32 0.0, %v1424
    %v1426 = vpop.f32.mrb[0].mxu0
    %v1427 = vpop.f32.mrb[0].mxu0
    %v1428 = vadd.f32 0.0, %v1427
    %v1429 = vpop.f32.mrb[0].mxu0
    %1430 = vmatprep.mubr.bf16.mxu0 0
    %1431 = vmatmul.mubr.bf16.gmra.mrb[0].mxu0 %v849
    %v1432 = vpop.f32.mrb[0].mxu0
    %v1433 = vadd.f32 0.0, %v1432
    %v1434 = vpop.f32.mrb[0].mxu0
    %v1435 = vpop.f32.mrb[0].mxu0
    %v1436 = vadd.f32 0.0, %v1435
    %v1437 = vpop.f32.mrb[0].mxu0
    %1438 = vmatprep.mubr.bf16.mxu0 0
    %1439 = vmatmul.mubr.bf16.gmra.mrb[0].mxu0 %v850
    %v1440 = vpop.f32.mrb[0].mxu0
    %v1441 = vadd.f32 0.0, %v1440
    %v1442 = vpop.f32.mrb[0].mxu0
    %v1443 = vpop.f32.mrb[0].mxu0
    %v1444 = vadd.f32 0.0, %v1443
    %v1445 = vpop.f32.mrb[0].mxu0
    %1446 = vmatprep.mubr.bf16.mxu0 0
    %1447 = vmatmul.mubr.bf16.gmra.mrb[0].mxu0 %v851
    %v1448 = vpop.f32.mrb[0].mxu0
    %v1449 = vadd.f32 0.0, %v1448
    %v1450 = vpop.f32.mrb[0].mxu0
    %v1451 = vpop.f32.mrb[0].mxu0
    %v1452 = vadd.f32 0.0, %v1451
    %v1453 = vpop.f32.mrb[0].mxu0
    %1454 = vmatprep.mubr.bf16.mxu0 0
    %1455 = vmatmul.mubr.bf16.gmra.mrb[0].mxu0 %v852
    %v1456 = vpop.f32.mrb[0].mxu0
    %v1457 = vadd.f32 0.0, %v1456
    %v1458 = vpop.f32.mrb[0].mxu0
    %v1459 = vpop.f32.mrb[0].mxu0
    %v1460 = vadd.f32 0.0, %v1459
    %v1461 = vpop.f32.mrb[0].mxu0
    %1462 = vmatprep.mubr.bf16.mxu0 0
    %1463 = vmatmul.mubr.bf16.gmra.mrb[0].mxu0 %v853
    %v1464 = vpop.f32.mrb[0].mxu0
    %v1465 = vadd.f32 0.0, %v1464
    %v1466 = vpop.f32.mrb[0].mxu0
    %v1467 = vpop.f32.mrb[0].mxu0
    %v1468 = vadd.f32 0.0, %v1467
    %v1469 = vpop.f32.mrb[0].mxu0
    %1470 = vmatprep.mubr.bf16.mxu0 0
    %1471 = vmatmul.mubr.bf16.gmra.mrb[0].mxu0 %v854
    %v1472 = vpop.f32.mrb[0].mxu0
    %v1473 = vadd.f32 0.0, %v1472
    %v1474 = vpop.f32.mrb[0].mxu0
    %v1475 = vpop.f32.mrb[0].mxu0
    %v1476 = vadd.f32 0.0, %v1475
    %v1477 = vpop.f32.mrb[0].mxu0
    %1478 = vmatprep.mubr.bf16.mxu0 0
    %1479 = vmatmul.mubr.bf16.gmra.mrb[0].mxu0 %v855
    %v1480 = vpop.f32.mrb[0].mxu0
    %v1481 = vadd.f32 0.0, %v1480
    %v1482 = vpop.f32.mrb[0].mxu0
    %v1483 = vpop.f32.mrb[0].mxu0
    %v1484 = vadd.f32 0.0, %v1483
    %v1485 = vpop.f32.mrb[0].mxu0
    %1486 = vmatprep.mubr.bf16.mxu0 0
    %1487 = vmatmul.mubr.bf16.gmra.mrb[0].mxu0 %v856
    %v1488 = vpop.f32.mrb[0].mxu0
    %v1489 = vadd.f32 0.0, %v1488
    %v1490 = vpop.f32.mrb[0].mxu0
    %v1491 = vpop.f32.mrb[0].mxu0
    %v1492 = vadd.f32 0.0, %v1491
    %v1493 = vpop.f32.mrb[0].mxu0
    %1494 = vmatprep.mubr.bf16.mxu0 0
    %1495 = vmatmul.mubr.bf16.gmra.mrb[0].mxu0 %v857
    %v1496 = vpop.f32.mrb[0].mxu0
    %v1497 = vadd.f32 0.0, %v1496
    %v1498 = vpop.f32.mrb[0].mxu0
    %v1499 = vpop.f32.mrb[0].mxu0
    %v1500 = vadd.f32 0.0, %v1499
    %v1501 = vpop.f32.mrb[0].mxu0
    %1502 = vmatprep.mubr.bf16.mxu0 0
    %1503 = vmatmul.mubr.bf16.gmra.mrb[0].mxu0 %v858
    %v1504 = vpop.f32.mrb[0].mxu0
    %v1505 = vadd.f32 0.0, %v1504
    %v1506 = vpop.f32.mrb[0].mxu0
    %v1507 = vpop.f32.mrb[0].mxu0
    %v1508 = vadd.f32 0.0, %v1507
    %v1509 = vpop.f32.mrb[0].mxu0
    %1510 = vmatprep.mubr.bf16.mxu0 0
    %1511 = vmatmul.mubr.bf16.gmra.mrb[0].mxu0 %v859
    %v1512 = vpop.f32.mrb[0].mxu0
    %v1513 = vadd.f32 0.0, %v1512
    %v1514 = vpop.f32.mrb[0].mxu0
    %v1515 = vpop.f32.mrb[0].mxu0
    %v1516 = vadd.f32 0.0, %v1515
    %v1517 = vpop.f32.mrb[0].mxu0
    %1518 = vmatprep.mubr.bf16.mxu0 0
    %1519 = vmatmul.mubr.bf16.gmra.mrb[0].mxu0 %v860
    %v1520 = vpop.f32.mrb[0].mxu0
    %v1521 = vadd.f32 0.0, %v1520
    %v1522 = vpop.f32.mrb[0].mxu0
    %v1523 = vpop.f32.mrb[0].mxu0
    %v1524 = vadd.f32 0.0, %v1523
    %v1525 = vpop.f32.mrb[0].mxu0
    %1526 = vmatprep.mubr.bf16.mxu0 0
    %1527 = vmatmul.mubr.bf16.gmra.mrb[0].mxu0 %v861
    %v1528 = vpop.f32.mrb[0].mxu0
    %v1529 = vadd.f32 0.0, %v1528
    %v1530 = vpop.f32.mrb[0].mxu0
    %v1531 = vpop.f32.mrb[0].mxu0
    %v1532 = vadd.f32 0.0, %v1531
    %v1533 = vpop.f32.mrb[0].mxu0
    %1534 = vmatprep.mubr.bf16.mxu0 0
    %1535 = vmatmul.mubr.bf16.gmra.mrb[0].mxu0 %v862
    %v1536 = vpop.f32.mrb[0].mxu0
    %v1537 = vadd.f32 0.0, %v1536
    %v1538 = vpop.f32.mrb[0].mxu0
    %v1539 = vpop.f32.mrb[0].mxu0
    %v1540 = vadd.f32 0.0, %v1539
    %v1541 = vpop.f32.mrb[0].mxu0
    %1542 = vmatprep.mubr.bf16.mxu0 0
    %1543 = vmatmul.mubr.bf16.gmra.mrb[0].mxu0 %v863
    %v1544 = vpop.f32.mrb[0].mxu0
    %v1545 = vadd.f32 0.0, %v1544
    %v1546 = vpop.f32.mrb[0].mxu0
    %v1547 = vpop.f32.mrb[0].mxu0
    %v1548 = vadd.f32 0.0, %v1547
    %v1549 = vpop.f32.mrb[0].mxu0
    %1550 = vmatprep.mubr.bf16.mxu0 0
    %1551 = vmatmul.mubr.bf16.gmra.mrb[0].mxu0 %v864
    %v1552 = vpop.f32.mrb[0].mxu0
    %v1553 = vadd.f32 0.0, %v1552
    %v1554 = vpop.f32.mrb[0].mxu0
    %v1555 = vpop.f32.mrb[0].mxu0
    %v1556 = vadd.f32 0.0, %v1555
    %v1557 = vpop.f32.mrb[0].mxu0
    %1558 = vmatprep.mubr.bf16.mxu0 0
    %1559 = vmatmul.mubr.bf16.gmra.mrb[0].mxu0 %v865
    %v1560 = vpop.f32.mrb[0].mxu0
    %v1561 = vadd.f32 0.0, %v1560
    %v1562 = vpop.f32.mrb[0].mxu0
    %v1563 = vpop.f32.mrb[0].mxu0
    %v1564 = vadd.f32 0.0, %v1563
    %v1565 = vpop.f32.mrb[0].mxu0
    %1566 = vmatprep.mubr.bf16.mxu0 0
    %1567 = vmatmul.mubr.bf16.gmra.mrb[0].mxu0 %v866
    %v1568 = vpop.f32.mrb[0].mxu0
    %v1569 = vadd.f32 0.0, %v1568
    %v1570 = vpop.f32.mrb[0].mxu0
    %v1571 = vpop.f32.mrb[0].mxu0
    %v1572 = vadd.f32 0.0, %v1571
    %v1573 = vpop.f32.mrb[0].mxu0
    %1574 = vmatprep.mubr.bf16.mxu0 0
    %1575 = vmatmul.mubr.bf16.gmra.mrb[0].mxu0 %v867
    %v1576 = vpop.f32.mrb[0].mxu0
    %v1577 = vadd.f32 0.0, %v1576
    %v1578 = vpop.f32.mrb[0].mxu0
    %v1579 = vpop.f32.mrb[0].mxu0
    %v1580 = vadd.f32 0.0, %v1579
    %v1581 = vpop.f32.mrb[0].mxu0
    %1582 = vmatprep.mubr.bf16.mxu0 0
    %1583 = vmatmul.mubr.bf16.gmra.mrb[0].mxu0 %v868
    %v1584 = vpop.f32.mrb[0].mxu0
    %v1585 = vadd.f32 0.0, %v1584
    %v1586 = vpop.f32.mrb[0].mxu0
    %v1587 = vpop.f32.mrb[0].mxu0
    %v1588 = vadd.f32 0.0, %v1587
    %v1589 = vpop.f32.mrb[0].mxu0
    %1590 = vmatprep.mubr.bf16.mxu0 0
    %1591 = vmatmul.mubr.bf16.gmra.mrb[0].mxu0 %v869
    %v1592 = vpop.f32.mrb[0].mxu0
    %v1593 = vadd.f32 0.0, %v1592
    %v1594 = vpop.f32.mrb[0].mxu0
    %v1595 = vpop.f32.mrb[0].mxu0
    %v1596 = vadd.f32 0.0, %v1595
    %v1597 = vpop.f32.mrb[0].mxu0
    %1598 = vmatprep.mubr.bf16.mxu0 0
    %1599 = vmatmul.mubr.bf16.gmra.mrb[0].mxu0 %v870
    %v1600 = vpop.f32.mrb[0].mxu0
    %v1601 = vadd.f32 0.0, %v1600
    %v1602 = vpop.f32.mrb[0].mxu0
    %v1603 = vpop.f32.mrb[0].mxu0
    %v1604 = vadd.f32 0.0, %v1603
    %v1605 = vpop.f32.mrb[0].mxu0
    %1606 = vmatprep.mubr.bf16.mxu0 0
    %1607 = vmatmul.mubr.bf16.gmra.mrb[0].mxu0 %v871
    %v1608 = vpop.f32.mrb[0].mxu0
    %v1609 = vadd.f32 0.0, %v1608
    %v1610 = vpop.f32.mrb[0].mxu0
    %v1611 = vpop.f32.mrb[0].mxu0
    %v1612 = vadd.f32 0.0, %v1611
    %v1613 = vpop.f32.mrb[0].mxu0
    %1614 = vmatprep.mubr.bf16.mxu0 0
    %1615 = vmatmul.mubr.bf16.gmra.mrb[0].mxu0 %v872
    %v1616 = vpop.f32.mrb[0].mxu0
    %v1617 = vadd.f32 0.0, %v1616
    %v1618 = vpop.f32.mrb[0].mxu0
    %v1619 = vpop.f32.mrb[0].mxu0
    %v1620 = vadd.f32 0.0, %v1619
    %v1621 = vpop.f32.mrb[0].mxu0
    %1622 = vmatprep.mubr.bf16.mxu0 0
    %1623 = vmatmul.mubr.bf16.gmra.mrb[0].mxu0 %v873
    %v1624 = vpop.f32.mrb[0].mxu0
    %v1625 = vadd.f32 0.0, %v1624
    %v1626 = vpop.f32.mrb[0].mxu0
    %v1627 = vpop.f32.mrb[0].mxu0
    %v1628 = vadd.f32 0.0, %v1627
    %v1629 = vpop.f32.mrb[0].mxu0
    %1630 = vmatprep.mubr.bf16.mxu0 0
    %1631 = vmatmul.mubr.bf16.gmra.mrb[0].mxu0 %v874
    %v1632 = vpop.f32.mrb[0].mxu0
    %v1633 = vadd.f32 0.0, %v1632
    %v1634 = vpop.f32.mrb[0].mxu0
    %v1635 = vpop.f32.mrb[0].mxu0
    %v1636 = vadd.f32 0.0, %v1635
    %v1637 = vpop.f32.mrb[0].mxu0
    %1638 = vmatprep.mubr.bf16.mxu0 0
    %1639 = vmatmul.mubr.bf16.gmra.mrb[0].mxu0 %v875
    %v1640 = vpop.f32.mrb[0].mxu0
    %v1641 = vadd.f32 0.0, %v1640
    %v1642 = vpop.f32.mrb[0].mxu0
    %v1643 = vpop.f32.mrb[0].mxu0
    %v1644 = vadd.f32 0.0, %v1643
    %v1645 = vpop.f32.mrb[0].mxu0
    %1646 = vmatprep.mubr.bf16.mxu0 0
    %1647 = vmatmul.mubr.bf16.gmra.mrb[0].mxu0 %v876
    %v1648 = vpop.f32.mrb[0].mxu0
    %v1649 = vadd.f32 0.0, %v1648
    %v1650 = vpop.f32.mrb[0].mxu0
    %v1651 = vpop.f32.mrb[0].mxu0
    %v1652 = vadd.f32 0.0, %v1651
    %v1653 = vpop.f32.mrb[0].mxu0
    %1654 = vmatprep.mubr.bf16.mxu0 0
    %1655 = vmatmul.mubr.bf16.gmra.mrb[0].mxu0 %v877
    %v1656 = vpop.f32.mrb[0].mxu0
    %v1657 = vadd.f32 0.0, %v1656
    %v1658 = vpop.f32.mrb[0].mxu0
    %v1659 = vpop.f32.mrb[0].mxu0
    %v1660 = vadd.f32 0.0, %v1659
    %v1661 = vpop.f32.mrb[0].mxu0
    %1662 = vmatprep.mubr.bf16.mxu0 0
    %1663 = vmatmul.mubr.bf16.gmra.mrb[0].mxu0 %v878
    %v1664 = vpop.f32.mrb[0].mxu0
    %v1665 = vadd.f32 0.0, %v1664
    %v1666 = vpop.f32.mrb[0].mxu0
    %v1667 = vpop.f32.mrb[0].mxu0
    %v1668 = vadd.f32 0.0, %v1667
    %v1669 = vpop.f32.mrb[0].mxu0
    %1670 = vmatprep.mubr.bf16.mxu0 0
    %1671 = vmatmul.mubr.bf16.gmra.mrb[0].mxu0 %v879
    %v1672 = vpop.f32.mrb[0].mxu0
    %v1673 = vadd.f32 0.0, %v1672
    %v1674 = vpop.f32.mrb[0].mxu0
    %v1675 = vpop.f32.mrb[0].mxu0
    %v1676 = vadd.f32 0.0, %v1675
    %v1677 = vpop.f32.mrb[0].mxu0
    %1678 = vmatprep.mubr.bf16.mxu0 0
    %1679 = vmatmul.mubr.bf16.gmra.mrb[0].mxu0 %v880
    %v1680 = vpop.f32.mrb[0].mxu0
    %v1681 = vadd.f32 0.0, %v1680
    %v1682 = vpop.f32.mrb[0].mxu0
    %v1683 = vpop.f32.mrb[0].mxu0
    %v1684 = vadd.f32 0.0, %v1683
    %v1685 = vpop.f32.mrb[0].mxu0
    %1686 = vmatprep.mubr.bf16.mxu0 0
    %1687 = vmatmul.mubr.bf16.gmra.mrb[0].mxu0 %v881
    %v1688 = vpop.f32.mrb[0].mxu0
    %v1689 = vadd.f32 0.0, %v1688
    %v1690 = vpop.f32.mrb[0].mxu0
    %v1691 = vpop.f32.mrb[0].mxu0
    %v1692 = vadd.f32 0.0, %v1691
    %v1693 = vpop.f32.mrb[0].mxu0
    %1694 = vmatprep.mubr.bf16.mxu0 0
    %1695 = vmatmul.mubr.bf16.gmra.mrb[0].mxu0 %v882
    %v1696 = vpop.f32.mrb[0].mxu0
    %v1697 = vadd.f32 0.0, %v1696
    %v1698 = vpop.f32.mrb[0].mxu0
    %v1699 = vpop.f32.mrb[0].mxu0
    %v1700 = vadd.f32 0.0, %v1699
    %v1701 = vpop.f32.mrb[0].mxu0
    %1702 = vmatprep.mubr.bf16.mxu0 0
    %1703 = vmatmul.mubr.bf16.gmra.mrb[0].mxu0 %v883
    %v1704 = vpop.f32.mrb[0].mxu0
    %v1705 = vadd.f32 0.0, %v1704
    %v1706 = vpop.f32.mrb[0].mxu0
    %v1707 = vpop.f32.mrb[0].mxu0
    %v1708 = vadd.f32 0.0, %v1707
    %v1709 = vpop.f32.mrb[0].mxu0
    %1710 = vmatprep.mubr.bf16.mxu0 0
    %1711 = vmatmul.mubr.bf16.gmra.mrb[0].mxu0 %v884
    %v1712 = vpop.f32.mrb[0].mxu0
    %v1713 = vadd.f32 0.0, %v1712
    %v1714 = vpop.f32.mrb[0].mxu0
    %v1715 = vpop.f32.mrb[0].mxu0
    %v1716 = vadd.f32 0.0, %v1715
    %v1717 = vpop.f32.mrb[0].mxu0
    %1718 = vmatprep.mubr.bf16.mxu0 0
    %1719 = vmatmul.mubr.bf16.gmra.mrb[0].mxu0 %v885
    %v1720 = vpop.f32.mrb[0].mxu0
    %v1721 = vadd.f32 0.0, %v1720
    %v1722 = vpop.f32.mrb[0].mxu0
    %v1723 = vpop.f32.mrb[0].mxu0
    %v1724 = vadd.f32 0.0, %v1723
    %v1725 = vpop.f32.mrb[0].mxu0
    %1726 = vmatprep.mubr.bf16.mxu0 0
    %1727 = vmatmul.mubr.bf16.gmra.mrb[0].mxu0 %v886
    %v1728 = vpop.f32.mrb[0].mxu0
    %v1729 = vadd.f32 0.0, %v1728
    %v1730 = vpop.f32.mrb[0].mxu0
    %v1731 = vpop.f32.mrb[0].mxu0
    %v1732 = vadd.f32 0.0, %v1731
    %v1733 = vpop.f32.mrb[0].mxu0
    %1734 = vmatprep.mubr.bf16.mxu0 0
    %1735 = vmatmul.mubr.bf16.gmra.mrb[0].mxu0 %v887
    %v1736 = vpop.f32.mrb[0].mxu0
    %v1737 = vadd.f32 0.0, %v1736
    %v1738 = vpop.f32.mrb[0].mxu0
    %v1739 = vpop.f32.mrb[0].mxu0
    %v1740 = vadd.f32 0.0, %v1739
    %v1741 = vpop.f32.mrb[0].mxu0
    %1742 = vmatprep.mubr.bf16.mxu0 0
    %1743 = vmatmul.mubr.bf16.gmra.mrb[0].mxu0 %v888
    %v1744 = vpop.f32.mrb[0].mxu0
    %v1745 = vadd.f32 0.0, %v1744
    %v1746 = vpop.f32.mrb[0].mxu0
    %v1747 = vpop.f32.mrb[0].mxu0
    %v1748 = vadd.f32 0.0, %v1747
    %v1749 = vpop.f32.mrb[0].mxu0
    %1750 = vmatprep.mubr.bf16.mxu0 0
    %1751 = vmatmul.mubr.bf16.gmra.mrb[0].mxu0 %v889
    %v1752 = vpop.f32.mrb[0].mxu0
    %v1753 = vadd.f32 0.0, %v1752
    %v1754 = vpop.f32.mrb[0].mxu0
    %v1755 = vpop.f32.mrb[0].mxu0
    %v1756 = vadd.f32 0.0, %v1755
    %v1757 = vpop.f32.mrb[0].mxu0
    %1758 = vmatprep.mubr.bf16.mxu0 0
    %1759 = vmatmul.mubr.bf16.gmra.mrb[0].mxu0 %v890
    %v1760 = vpop.f32.mrb[0].mxu0
    %v1761 = vadd.f32 0.0, %v1760
    %v1762 = vpop.f32.mrb[0].mxu0
    %v1763 = vpop.f32.mrb[0].mxu0
    %v1764 = vadd.f32 0.0, %v1763
    %v1765 = vpop.f32.mrb[0].mxu0
    %1766 = vmatprep.mubr.bf16.mxu0 0
    %1767 = vmatmul.mubr.bf16.gmra.mrb[0].mxu0 %v891
    %v1768 = vpop.f32.mrb[0].mxu0
    %v1769 = vadd.f32 0.0, %v1768
    %v1770 = vpop.f32.mrb[0].mxu0
    %v1771 = vpop.f32.mrb[0].mxu0
    %v1772 = vadd.f32 0.0, %v1771
    %v1773 = vpop.f32.mrb[0].mxu0
    %1774 = vmatprep.mubr.bf16.mxu0 0
    %1775 = vmatmul.mubr.bf16.gmra.mrb[0].mxu0 %v892
    %v1776 = vpop.f32.mrb[0].mxu0
    %v1777 = vadd.f32 0.0, %v1776
    %v1778 = vpop.f32.mrb[0].mxu0
    %v1779 = vpop.f32.mrb[0].mxu0
    %v1780 = vadd.f32 0.0, %v1779
    %v1781 = vpop.f32.mrb[0].mxu0
    %1782 = vmatprep.mubr.bf16.mxu0 0
    %1783 = vmatmul.mubr.bf16.gmra.mrb[0].mxu0 %v893
    %v1784 = vpop.f32.mrb[0].mxu0
    %v1785 = vadd.f32 0.0, %v1784
    %v1786 = vpop.f32.mrb[0].mxu0
    %v1787 = vpop.f32.mrb[0].mxu0
    %v1788 = vadd.f32 0.0, %v1787
    %v1789 = vpop.f32.mrb[0].mxu0
    %1790 = vmatprep.mubr.bf16.mxu0 0
    %1791 = vmatmul.mubr.bf16.gmra.mrb[0].mxu0 %v894
    %v1792 = vpop.f32.mrb[0].mxu0
    %v1793 = vadd.f32 0.0, %v1792
    %v1794 = vpop.f32.mrb[0].mxu0
    %v1795 = vpop.f32.mrb[0].mxu0
    %v1796 = vadd.f32 0.0, %v1795
    %v1797 = vpop.f32.mrb[0].mxu0
    %1798 = vmatprep.mubr.bf16.mxu0 0
    %1799 = vmatmul.mubr.bf16.gmra.mrb[0].mxu0 %v895
    %v1800 = vpop.f32.mrb[0].mxu0
    %v1801 = vadd.f32 0.0, %v1800
    %v1802 = vpop.f32.mrb[0].mxu0
    %v1803 = vpop.f32.mrb[0].mxu0
    %v1804 = vadd.f32 0.0, %v1803
    %v1805 = vpop.f32.mrb[0].mxu0
    %1806 = vmatprep.mubr.bf16.mxu0 0
    %1807 = vmatmul.mubr.bf16.gmra.mrb[0].mxu0 %v896
    %v1808 = vpop.f32.mrb[0].mxu0
    %v1809 = vadd.f32 0.0, %v1808
    %v1810 = vpop.f32.mrb[0].mxu0
    %v1811 = vpop.f32.mrb[0].mxu0
    %v1812 = vadd.f32 0.0, %v1811
    %v1813 = vpop.f32.mrb[0].mxu0
    %1814 = vmatprep.mubr.bf16.mxu0 0
    %1815 = vmatmul.mubr.bf16.gmra.mrb[0].mxu0 %v897
    %v1816 = vpop.f32.mrb[0].mxu0
    %v1817 = vadd.f32 0.0, %v1816
    %v1818 = vpop.f32.mrb[0].mxu0
    %v1819 = vpop.f32.mrb[0].mxu0
    %v1820 = vadd.f32 0.0, %v1819
    %v1821 = vpop.f32.mrb[0].mxu0
    %1822 = vmatprep.mubr.bf16.mxu0 0
    %1823 = vmatmul.mubr.bf16.gmra.mrb[0].mxu0 %v898
    %v1824 = vpop.f32.mrb[0].mxu0
    %v1825 = vadd.f32 0.0, %v1824
    %v1826 = vpop.f32.mrb[0].mxu0
    %v1827 = vpop.f32.mrb[0].mxu0
    %v1828 = vadd.f32 0.0, %v1827
    %v1829 = vpop.f32.mrb[0].mxu0
    %1830 = vmatprep.mubr.bf16.mxu0 0
    %1831 = vmatmul.mubr.bf16.gmra.mrb[0].mxu0 %v899
    %v1832 = vpop.f32.mrb[0].mxu0
    %v1833 = vadd.f32 0.0, %v1832
    %v1834 = vpop.f32.mrb[0].mxu0
    %v1835 = vpop.f32.mrb[0].mxu0
    %v1836 = vadd.f32 0.0, %v1835
    %v1837 = vpop.f32.mrb[0].mxu0
    %1838 = vmatprep.mubr.bf16.mxu0 0
    %1839 = vmatmul.mubr.bf16.gmra.mrb[0].mxu0 %v900
    %v1840 = vpop.f32.mrb[0].mxu0
    %v1841 = vadd.f32 0.0, %v1840
    %v1842 = vpop.f32.mrb[0].mxu0
    %v1843 = vpop.f32.mrb[0].mxu0
    %v1844 = vadd.f32 0.0, %v1843
    %v1845 = vpop.f32.mrb[0].mxu0
    %1846 = vmatprep.mubr.bf16.mxu0 0
    %1847 = vmatmul.mubr.bf16.gmra.mrb[0].mxu0 %v901
    %v1848 = vpop.f32.mrb[0].mxu0
    %v1849 = vadd.f32 0.0, %v1848
    %v1850 = vpop.f32.mrb[0].mxu0
    %v1851 = vpop.f32.mrb[0].mxu0
    %v1852 = vadd.f32 0.0, %v1851
    %v1853 = vpop.f32.mrb[0].mxu0
    %1854 = vmatprep.mubr.bf16.mxu0 0
    %1855 = vmatmul.mubr.bf16.gmra.mrb[0].mxu0 %v902
    %v1856 = vpop.f32.mrb[0].mxu0
    %v1857 = vadd.f32 0.0, %v1856
    %v1858 = vpop.f32.mrb[0].mxu0
    %v1859 = vpop.f32.mrb[0].mxu0
    %v1860 = vadd.f32 0.0, %v1859
    %v1861 = vpop.f32.mrb[0].mxu0
    %1862 = vmatprep.mubr.bf16.mxu0 0
    %1863 = vmatmul.mubr.bf16.gmra.mrb[0].mxu0 %v903
    %v1864 = vpop.f32.mrb[0].mxu0
    %v1865 = vadd.f32 0.0, %v1864
    %v1866 = vpop.f32.mrb[0].mxu0
    %v1867 = vpop.f32.mrb[0].mxu0
    %v1868 = vadd.f32 0.0, %v1867
    %v1869 = vpop.f32.mrb[0].mxu0
    %1870 = vmatprep.mubr.bf16.mxu0 0
    %1871 = vmatmul.mubr.bf16.gmra.mrb[0].mxu0 %v904
    %v1872 = vpop.f32.mrb[0].mxu0
    %v1873 = vadd.f32 0.0, %v1872
    %v1874 = vpop.f32.mrb[0].mxu0
    %v1875 = vpop.f32.mrb[0].mxu0
    %v1876 = vadd.f32 0.0, %v1875
    %v1877 = vpop.f32.mrb[0].mxu0
    %1878 = vmatprep.mubr.bf16.mxu0 0
    %1879 = vmatmul.mubr.bf16.gmra.mrb[0].mxu0 %v905
    %v1880 = vpop.f32.mrb[0].mxu0
    %v1881 = vadd.f32 0.0, %v1880
    %v1882 = vpop.f32.mrb[0].mxu0
    %v1883 = vpop.f32.mrb[0].mxu0
    %v1884 = vadd.f32 0.0, %v1883
    %v1885 = vpop.f32.mrb[0].mxu0
    %1886 = vmatprep.mubr.bf16.mxu0 0
    %1887 = vmatmul.mubr.bf16.gmra.mrb[0].mxu0 %v906
    %v1888 = vpop.f32.mrb[0].mxu0
    %v1889 = vadd.f32 0.0, %v1888
    %v1890 = vpop.f32.mrb[0].mxu0
    %v1891 = vpop.f32.mrb[0].mxu0
    %v1892 = vadd.f32 0.0, %v1891
    %v1893 = vpop.f32.mrb[0].mxu0
    %1894 = vmatprep.mubr.bf16.mxu0 0
    %1895 = vmatmul.mubr.bf16.gmra.mrb[0].mxu0 %v907
    %v1896 = vpop.f32.mrb[0].mxu0
    %v1897 = vadd.f32 0.0, %v1896
    %v1898 = vpop.f32.mrb[0].mxu0
    %v1899 = vpop.f32.mrb[0].mxu0
    %v1900 = vadd.f32 0.0, %v1899
    %v1901 = vpop.f32.mrb[0].mxu0
    %1902 = vmatprep.mubr.bf16.mxu0 0
    %1903 = vmatmul.mubr.bf16.gmra.mrb[0].mxu0 %v908
    %v1904 = vpop.f32.mrb[0].mxu0
    %v1905 = vadd.f32 0.0, %v1904
    %v1906 = vpop.f32.mrb[0].mxu0
    %v1907 = vpop.f32.mrb[0].mxu0
    %v1908 = vadd.f32 0.0, %v1907
    %v1909 = vpop.f32.mrb[0].mxu0
    %1910 = vmatprep.mubr.bf16.mxu0 0
    %1911 = vmatmul.mubr.bf16.gmra.mrb[0].mxu0 %v909
    %v1912 = vpop.f32.mrb[0].mxu0
    %v1913 = vadd.f32 0.0, %v1912
    %v1914 = vpop.f32.mrb[0].mxu0
    %v1915 = vpop.f32.mrb[0].mxu0
    %v1916 = vadd.f32 0.0, %v1915
    %v1917 = vpop.f32.mrb[0].mxu0
    %1918 = vmatprep.mubr.bf16.mxu0 0
    %1919 = vmatmul.mubr.bf16.gmra.mrb[0].mxu0 %v910
    %v1920 = vpop.f32.mrb[0].mxu0
    %v1921 = vadd.f32 0.0, %v1920
    %v1922 = vpop.f32.mrb[0].mxu0
    %v1923 = vpop.f32.mrb[0].mxu0
    %v1924 = vadd.f32 0.0, %v1923
    %v1925 = vpop.f32.mrb[0].mxu0
    %1926 = vmatprep.mubr.bf16.mxu0 0
    %1927 = vmatmul.mubr.bf16.gmra.mrb[0].mxu0 %v911
    %v1928 = vpop.f32.mrb[0].mxu0
    %v1929 = vadd.f32 0.0, %v1928
    %v1930 = vpop.f32.mrb[0].mxu0
    %v1931 = vpop.f32.mrb[0].mxu0
    %v1932 = vadd.f32 0.0, %v1931
    %v1933 = vpop.f32.mrb[0].mxu0
    %1934 = vmatprep.mubr.bf16.mxu0 0
    %1935 = vmatmul.mubr.bf16.gmra.mrb[0].mxu0 %v912
    %v1936 = vpop.f32.mrb[0].mxu0
    %v1937 = vadd.f32 0.0, %v1936
    %v1938 = vpop.f32.mrb[0].mxu0
    %v1939 = vpop.f32.mrb[0].mxu0
    %v1940 = vadd.f32 0.0, %v1939
    %v1941 = vpop.f32.mrb[0].mxu0
    %1942 = vmatprep.mubr.bf16.mxu0 0
    %1943 = vmatmul.mubr.bf16.gmra.mrb[0].mxu0 %v913
    %v1944 = vpop.f32.mrb[0].mxu0
    %v1945 = vadd.f32 0.0, %v1944
    %v1946 = vpop.f32.mrb[0].mxu0
    %v1947 = vpop.f32.mrb[0].mxu0
    %v1948 = vadd.f32 0.0, %v1947
    %v1949 = vpop.f32.mrb[0].mxu0
    %1950 = vmatprep.mubr.bf16.mxu0 0
    %1951 = vmatmul.mubr.bf16.gmra.mrb[0].mxu0 %v914
    %v1952 = vpop.f32.mrb[0].mxu0
    %v1953 = vadd.f32 0.0, %v1952
    %v1954 = vpop.f32.mrb[0].mxu0
    %v1955 = vpop.f32.mrb[0].mxu0
    %v1956 = vadd.f32 0.0, %v1955
    %v1957 = vpop.f32.mrb[0].mxu0
    %1958 = vmatprep.mubr.bf16.mxu0 0
    %1959 = vmatmul.mubr.bf16.gmra.mrb[0].mxu0 %v915
    %v1960 = vpop.f32.mrb[0].mxu0
    %v1961 = vadd.f32 0.0, %v1960
    %v1962 = vpop.f32.mrb[0].mxu0
    %v1963 = vpop.f32.mrb[0].mxu0
    %v1964 = vadd.f32 0.0, %v1963
    %v1965 = vpop.f32.mrb[0].mxu0
    %1966 = vmatprep.mubr.bf16.mxu0 0
    %1967 = vmatmul.mubr.bf16.gmra.mrb[0].mxu0 %v916
    %v1968 = vpop.f32.mrb[0].mxu0
    %v1969 = vadd.f32 0.0, %v1968
    %v1970 = vpop.f32.mrb[0].mxu0
    %v1971 = vpop.f32.mrb[0].mxu0
    %v1972 = vadd.f32 0.0, %v1971
    %v1973 = vpop.f32.mrb[0].mxu0
    %1974 = vmatprep.mubr.bf16.mxu0 0
    %1975 = vmatmul.mubr.bf16.gmra.mrb[0].mxu0 %v917
    %v1976 = vpop.f32.mrb[0].mxu0
    %v1977 = vadd.f32 0.0, %v1976
    %v1978 = vpop.f32.mrb[0].mxu0
    %v1979 = vpop.f32.mrb[0].mxu0
    %v1980 = vadd.f32 0.0, %v1979
    %v1981 = vpop.f32.mrb[0].mxu0
    %1982 = vmatprep.mubr.bf16.mxu0 0
    %1983 = vmatmul.mubr.bf16.gmra.mrb[0].mxu0 %v918
    %v1984 = vpop.f32.mrb[0].mxu0
    %v1985 = vadd.f32 0.0, %v1984
    %v1986 = vpop.f32.mrb[0].mxu0
    %v1987 = vpop.f32.mrb[0].mxu0
    %v1988 = vadd.f32 0.0, %v1987
    %v1989 = vpop.f32.mrb[0].mxu0
    %1990 = vmatprep.mubr.bf16.mxu0 0
    %1991 = vmatmul.mubr.bf16.gmra.mrb[0].mxu0 %v919
    %v1992 = vpop.f32.mrb[0].mxu0
    %v1993 = vadd.f32 0.0, %v1992
    %v1994 = vpop.f32.mrb[0].mxu0
    %v1995 = vpop.f32.mrb[0].mxu0
    %v1996 = vadd.f32 0.0, %v1995
    %v1997 = vpop.f32.mrb[0].mxu0
    %1998 = vmatprep.mubr.bf16.mxu0 0
    %1999 = vmatmul.mubr.bf16.gmra.mrb[0].mxu0 %v920
    %v2000 = vpop.f32.mrb[0].mxu0
    %v2001 = vadd.f32 0.0, %v2000
    %v2002 = vpop.f32.mrb[0].mxu0
    %v2003 = vpop.f32.mrb[0].mxu0
    %v2004 = vadd.f32 0.0, %v2003
    %v2005 = vpop.f32.mrb[0].mxu0
    %2006 = vmatprep.mubr.bf16.mxu0 0
    %2007 = vmatmul.mubr.bf16.gmra.mrb[0].mxu0 %v921
    %v2008 = vpop.f32.mrb[0].mxu0
    %v2009 = vadd.f32 0.0, %v2008
    %v2010 = vpop.f32.mrb[0].mxu0
    %v2011 = vpop.f32.mrb[0].mxu0
    %v2012 = vadd.f32 0.0, %v2011
    %v2013 = vpop.f32.mrb[0].mxu0
    %2014 = vmatprep.mubr.bf16.mxu0 0
    %2015 = vmatmul.mubr.bf16.gmra.mrb[0].mxu0 %v922
    %v2016 = vpop.f32.mrb[0].mxu0
    %v2017 = vadd.f32 0.0, %v2016
    %v2018 = vpop.f32.mrb[0].mxu0
    %v2019 = vpop.f32.mrb[0].mxu0
    %v2020 = vadd.f32 0.0, %v2019
    %v2021 = vpop.f32.mrb[0].mxu0
    %2022 = vmatprep.mubr.bf16.mxu0 0
    %2023 = vmatmul.mubr.bf16.gmra.mrb[0].mxu0 %v923
    %v2024 = vpop.f32.mrb[0].mxu0
    %v2025 = vadd.f32 0.0, %v2024
    %v2026 = vpop.f32.mrb[0].mxu0
    %v2027 = vpop.f32.mrb[0].mxu0
    %v2028 = vadd.f32 0.0, %v2027
    %v2029 = vpop.f32.mrb[0].mxu0
    %2030 = vmatprep.mubr.bf16.mxu0 0
    %2031 = vmatmul.mubr.bf16.gmra.mrb[0].mxu0 %v924
    %v2032 = vpop.f32.mrb[0].mxu0
    %v2033 = vadd.f32 0.0, %v2032
    %v2034 = vpop.f32.mrb[0].mxu0
    %v2035 = vpop.f32.mrb[0].mxu0
    %v2036 = vadd.f32 0.0, %v2035
    %v2037 = vpop.f32.mrb[0].mxu0
    %2038 = vmatprep.mubr.bf16.mxu0 0
    %2039 = vmatmul.mubr.bf16.gmra.mrb[0].mxu0 %v925
    %v2040 = vpop.f32.mrb[0].mxu0
    %v2041 = vadd.f32 0.0, %v2040
    %v2042 = vpop.f32.mrb[0].mxu0
    %v2043 = vpop.f32.mrb[0].mxu0
    %v2044 = vadd.f32 0.0, %v2043
    %v2045 = vpop.f32.mrb[0].mxu0
    %2046 = vmatprep.mubr.bf16.mxu0 0
    %2047 = vmatmul.mubr.bf16.gmra.mrb[0].mxu0 %v926
    %v2048 = vpop.f32.mrb[0].mxu0
    %v2049 = vadd.f32 0.0, %v2048
    %v2050 = vpop.f32.mrb[0].mxu0
    %v2051 = vpop.f32.mrb[0].mxu0
    %v2052 = vadd.f32 0.0, %v2051
    %v2053 = vpop.f32.mrb[0].mxu0
    %2054 = vmatprep.mubr.bf16.mxu0 0
    %2055 = vmatmul.mubr.bf16.gmra.mrb[0].mxu0 %v927
    %v2056 = vpop.f32.mrb[0].mxu0
    %v2057 = vadd.f32 0.0, %v2056
    %v2058 = vpop.f32.mrb[0].mxu0
    %v2059 = vpop.f32.mrb[0].mxu0
    %v2060 = vadd.f32 0.0, %v2059
    %v2061 = vpop.f32.mrb[0].mxu0
    %2062 = vmatprep.mubr.bf16.mxu0 0
    %2063 = vmatmul.mubr.bf16.gmra.mrb[0].mxu0 %v928
    %v2064 = vpop.f32.mrb[0].mxu0
    %v2065 = vadd.f32 0.0, %v2064
    %v2066 = vpop.f32.mrb[0].mxu0
    %v2067 = vpop.f32.mrb[0].mxu0
    %v2068 = vadd.f32 0.0, %v2067
    %v2069 = vpop.f32.mrb[0].mxu0
    %2070 = vmatprep.mubr.bf16.mxu0 0
    %2071 = vmatmul.mubr.bf16.gmra.mrb[0].mxu0 %v929
    %v2072 = vpop.f32.mrb[0].mxu0
    %v2073 = vadd.f32 0.0, %v2072
    %v2074 = vpop.f32.mrb[0].mxu0
    %v2075 = vpop.f32.mrb[0].mxu0
    %v2076 = vadd.f32 0.0, %v2075
    %v2077 = vpop.f32.mrb[0].mxu0
    %2078 = vmatprep.mubr.bf16.mxu0 0
    %2079 = vmatmul.mubr.bf16.gmra.mrb[0].mxu0 %v930
    %v2080 = vpop.f32.mrb[0].mxu0
    %v2081 = vadd.f32 0.0, %v2080
    %v2082 = vpop.f32.mrb[0].mxu0
    %v2083 = vpop.f32.mrb[0].mxu0
    %v2084 = vadd.f32 0.0, %v2083
    %v2085 = vpop.f32.mrb[0].mxu0
    %2086 = vmatprep.mubr.bf16.mxu0 0
    %2087 = vmatmul.mubr.bf16.gmra.mrb[0].mxu0 %v931
    %v2088 = vpop.f32.mrb[0].mxu0
    %v2089 = vadd.f32 0.0, %v2088
    %v2090 = vpop.f32.mrb[0].mxu0
    %v2091 = vpop.f32.mrb[0].mxu0
    %v2092 = vadd.f32 0.0, %v2091
    %v2093 = vpop.f32.mrb[0].mxu0
    %2094 = vmatprep.mubr.bf16.mxu0 0
    %2095 = vmatmul.mubr.bf16.gmra.mrb[0].mxu0 %v932
    %v2096 = vpop.f32.mrb[0].mxu0
    %v2097 = vadd.f32 0.0, %v2096
    %v2098 = vpop.f32.mrb[0].mxu0
    %v2099 = vpop.f32.mrb[0].mxu0
    %v2100 = vadd.f32 0.0, %v2099
    %v2101 = vpop.f32.mrb[0].mxu0
    %2102 = vmatprep.mubr.bf16.mxu0 0
    %2103 = vmatmul.mubr.bf16.gmra.mrb[0].mxu0 %v933
    %v2104 = vpop.f32.mrb[0].mxu0
    %v2105 = vadd.f32 0.0, %v2104
    %v2106 = vpop.f32.mrb[0].mxu0
    %v2107 = vpop.f32.mrb[0].mxu0
    %v2108 = vadd.f32 0.0, %v2107
    %v2109 = vpop.f32.mrb[0].mxu0
    %2110 = vmatprep.mubr.bf16.mxu0 0
    %2111 = vmatmul.mubr.bf16.gmra.mrb[0].mxu0 %v934
    %v2112 = vpop.f32.mrb[0].mxu0
    %v2113 = vadd.f32 0.0, %v2112
    %v2114 = vpop.f32.mrb[0].mxu0
    %v2115 = vpop.f32.mrb[0].mxu0
    %v2116 = vadd.f32 0.0, %v2115
    %v2117 = vpop.f32.mrb[0].mxu0
    %2118 = vmatprep.mubr.bf16.mxu0 0
    %2119 = vmatmul.mubr.bf16.gmra.mrb[0].mxu0 %v935
    %v2120 = vpop.f32.mrb[0].mxu0
    %v2121 = vadd.f32 0.0, %v2120
    %v2122 = vpop.f32.mrb[0].mxu0
    %v2123 = vpop.f32.mrb[0].mxu0
    %v2124 = vadd.f32 0.0, %v2123
    %v2125 = vpop.f32.mrb[0].mxu0
    %2126 = vmatprep.mubr.bf16.mxu0 0
    %2127 = vmatmul.mubr.bf16.gmra.mrb[0].mxu0 %v936
    %v2128 = vpop.f32.mrb[0].mxu0
    %v2129 = vadd.f32 0.0, %v2128
    %v2130 = vpop.f32.mrb[0].mxu0
    %v2131 = vpop.f32.mrb[0].mxu0
    %v2132 = vadd.f32 0.0, %v2131
    %v2133 = vpop.f32.mrb[0].mxu0
    %2134 = vmatprep.mubr.bf16.mxu0 0
    %2135 = vmatmul.mubr.bf16.gmra.mrb[0].mxu0 %v937
    %v2136 = vpop.f32.mrb[0].mxu0
    %v2137 = vadd.f32 0.0, %v2136
    %v2138 = vpop.f32.mrb[0].mxu0
    %v2139 = vpop.f32.mrb[0].mxu0
    %v2140 = vadd.f32 0.0, %v2139
    %v2141 = vpop.f32.mrb[0].mxu0
    %2142 = vmatprep.mubr.bf16.mxu0 0
    %2143 = vmatmul.mubr.bf16.gmra.mrb[0].mxu0 %v938
    %v2144 = vpop.f32.mrb[0].mxu0
    %v2145 = vadd.f32 0.0, %v2144
    %v2146 = vpop.f32.mrb[0].mxu0
    %v2147 = vpop.f32.mrb[0].mxu0
    %v2148 = vadd.f32 0.0, %v2147
    %v2149 = vpop.f32.mrb[0].mxu0
    %2150 = vmatprep.mubr.bf16.mxu0 0
    %2151 = vmatmul.mubr.bf16.gmra.mrb[0].mxu0 %v939
    %v2152 = vpop.f32.mrb[0].mxu0
    %v2153 = vadd.f32 0.0, %v2152
    %v2154 = vpop.f32.mrb[0].mxu0
    %v2155 = vpop.f32.mrb[0].mxu0
    %v2156 = vadd.f32 0.0, %v2155
    %v2157 = vpop.f32.mrb[0].mxu0
    %2158 = vmatprep.mubr.bf16.mxu0 0
    %2159 = vmatmul.mubr.bf16.gmra.mrb[0].mxu0 %v940
    %v2160 = vpop.f32.mrb[0].mxu0
    %v2161 = vadd.f32 0.0, %v2160
    %v2162 = vpop.f32.mrb[0].mxu0
    %v2163 = vpop.f32.mrb[0].mxu0
    %v2164 = vadd.f32 0.0, %v2163
    %v2165 = vpop.f32.mrb[0].mxu0
    %2166 = vmatprep.mubr.bf16.mxu0 0
    %2167 = vmatmul.mubr.bf16.gmra.mrb[0].mxu0 %v941
    %v2168 = vpop.f32.mrb[0].mxu0
    %v2169 = vadd.f32 0.0, %v2168
    %v2170 = vpop.f32.mrb[0].mxu0
    %v2171 = vpop.f32.mrb[0].mxu0
    %v2172 = vadd.f32 0.0, %v2171
    %v2173 = vpop.f32.mrb[0].mxu0
    %2174 = vdwg.mxu0
    %v2175 = vld [vmem:[%s3] sm:$0xf]
    %v2176 = vld [vmem:[%s3 + $0x4] sm:$0xf]
    %v2177 = vld [vmem:[%s3 + $0x8] sm:$0xf]
    %v2178 = vld [vmem:[%s3 + $0xc] sm:$0xf]
    %v2179 = vld [vmem:[%s3 + $0x10] sm:$0xf]
    %v2180 = vld [vmem:[%s3 + $0x14] sm:$0xf]
    %v2181 = vld [vmem:[%s3 + $0x18] sm:$0xf]
    %v2182 = vld [vmem:[%s3 + $0x1c] sm:$0xf]
    %v2183 = vld [vmem:[%s3 + $0x20] sm:$0xf]
    %v2184 = vld [vmem:[%s3 + $0x24] sm:$0xf]
    %v2185 = vld [vmem:[%s3 + $0x28] sm:$0xf]
    %v2186 = vld [vmem:[%s3 + $0x2c] sm:$0xf]
    %v2187 = vld [vmem:[%s3 + $0x30] sm:$0xf]
    %v2188 = vld [vmem:[%s3 + $0x34] sm:$0xf]
    %v2189 = vld [vmem:[%s3 + $0x38] sm:$0xf]
    %v2190 = vld [vmem:[%s3 + $0x3c] sm:$0xf]
    %v2191 = vld [vmem:[%s4] sm:$0x1]
    %v2193 = vlaneseq
    %v2194 = vshrl.u32 %v2193, 7
    %v2195 = vsub.s32 0, %v2194
    %v2196 = vrot.slane %v2191, %v2195
    %v2200 = vunpack.c.l.b16 %v284
    %v2201 = vunpack.c.l.b16 %v285
    %v2202 = vpack.c.b16 %v2201, %v2200
    %v2220 = vunpack.c.l.b16 %v2175
    %v2221 = vunpack.c.l.b16 %v2176
    %v2222 = vunpack.c.l.b16 %v2177
    %v2223 = vunpack.c.l.b16 %v2178
    %v2224 = vunpack.c.l.b16 %v2179
    %v2225 = vunpack.c.l.b16 %v2180
    %v2226 = vunpack.c.l.b16 %v2181
    %v2227 = vunpack.c.l.b16 %v2182
    %v2228 = vunpack.c.l.b16 %v2183
    %v2229 = vunpack.c.l.b16 %v2184
    %v2230 = vunpack.c.l.b16 %v2185
    %v2231 = vunpack.c.l.b16 %v2186
    %v2232 = vunpack.c.l.b16 %v2187
    %v2233 = vunpack.c.l.b16 %v2188
    %v2234 = vunpack.c.l.b16 %v2189
    %v2235 = vunpack.c.l.b16 %v2190
    %v2236 = vpack.c.b16 %v2221, %v2220
    %v2237 = vpack.c.b16 %v2223, %v2222
    %v2238 = vpack.c.b16 %v2225, %v2224
    %v2239 = vpack.c.b16 %v2227, %v2226
    %v2240 = vpack.c.b16 %v2229, %v2228
    %v2241 = vpack.c.b16 %v2231, %v2230
    %v2242 = vpack.c.b16 %v2233, %v2232
    %v2243 = vpack.c.b16 %v2235, %v2234
    %2252 = vmatprep.subr.bf16.mxu0 0
    %2253 = vmatpush1.bf16.msra.mxu0 %v2236
    %2254 = vmatprep.subr.bf16.mxu0 0
    %2255 = vmatpush1.bf16.msra.mxu0 %v2237
    %2256 = vmatprep.subr.bf16.mxu0 0
    %2257 = vmatpush1.bf16.msra.mxu0 %v2238
    %2258 = vmatprep.subr.bf16.mxu0 0
    %2259 = vmatpush1.bf16.msra.mxu0 %v2239
    %2260 = vmatprep.subr.bf16.mxu0 0
    %2261 = vmatpush1.bf16.msra.mxu0 %v2240
    %2262 = vmatprep.subr.bf16.mxu0 0
    %2263 = vmatpush1.bf16.msra.mxu0 %v2241
    %2264 = vmatprep.subr.bf16.mxu0 0
    %2265 = vmatpush1.bf16.msra.mxu0 %v2242
    %2266 = vmatprep.subr.bf16.mxu0 0
    %2267 = vmatpush1.bf16.msra.mxu0 %v2243
    %2268 = vmatprep.subr.bf16.mxu0 0
    %2269 = vmatpush1.bf16.msra.mxu0 0
    %2270 = vmatprep.subr.bf16.mxu0 0
    %2271 = vmatpush1.bf16.msra.mxu0 0
    %2272 = vmatprep.subr.bf16.mxu0 0
    %2273 = vmatpush1.bf16.msra.mxu0 0
    %2274 = vmatprep.subr.bf16.mxu0 0
    %2275 = vmatpush1.bf16.msra.mxu0 0
    %2276 = vmatprep.subr.bf16.mxu0 0
    %2277 = vmatpush1.bf16.msra.mxu0 0
    %2278 = vmatprep.subr.bf16.mxu0 0
    %2279 = vmatpush1.bf16.msra.mxu0 0
    %2280 = vmatprep.subr.bf16.mxu0 0
    %2281 = vmatpush1.bf16.msra.mxu0 0
    %2282 = vmatprep.subr.bf16.mxu0 0
    %2283 = vmatpush1.bf16.msra.mxu0 0
    %2284 = vmatprep.mubr.bf16.mxu0 0
    %2285 = vmatmul.mubr.bf16.gmra.mrb[0].mxu0 %v2202
    %v2286 = vpop.f32.mrb[0].mxu0
    %v2287 = vadd.f32 %v2196, %v2286
    %v2288 = vpop.f32.mrb[0].mxu0
    %v2289 = vpop.f32.mrb[0].mxu0
    %v2290 = vadd.f32 %v2196, %v2289
    %v2291 = vpop.f32.mrb[0].mxu0
    %2292 = vdwg.mxu0
    %v2295 = vcombine.high %v2287, %v2287
    %v2297 = vunpack.c.l.s4 1966171168
    %v2298 = vunpack.c.0.s8 %v2297
    %v2299 = vlaneseq
    %v2300 = vshrl.u32 %v2299, 7
    %v2301 = vsub.s32 %v2298, %v2300
    %v2302 = vrot.slane %v2287, %v2301
    %v2304 = vunpack.c.l.s4 1966171168
    %v2305 = vunpack.c.0.s8 %v2304
    %v2306 = vlaneseq
    %v2307 = vshrl.u32 %v2306, 7
    %v2308 = vsub.s32 %v2305, %v2307
    %v2309 = vrot.slane %v2295, %v2308
    %v2310 = vcombine.high %v2302, %v2302
    %v2311 = vcombine.high %v2309, %v2309
    %v2313 = vunpack.c.l.s4 1966171168
    %v2314 = vunpack.c.0.s8 %v2313
    %v2315 = vlaneseq
    %v2316 = vshrl.u32 %v2315, 7
    %v2317 = vsub.s32 %v2314, %v2316
    %v2318 = vrot.slane %v2302, %v2317
    %v2320 = vunpack.c.l.s4 1966171168
    %v2321 = vunpack.c.0.s8 %v2320
    %v2322 = vlaneseq
    %v2323 = vshrl.u32 %v2322, 7
    %v2324 = vsub.s32 %v2321, %v2323
    %v2325 = vrot.slane %v2309, %v2324
    %v2327 = vunpack.c.l.s4 1966171168
    %v2328 = vunpack.c.0.s8 %v2327
    %v2329 = vlaneseq
    %v2330 = vshrl.u32 %v2329, 7
    %v2331 = vsub.s32 %v2328, %v2330
    %v2332 = vrot.slane %v2310, %v2331
    %v2334 = vunpack.c.l.s4 1966171168
    %v2335 = vunpack.c.0.s8 %v2334
    %v2336 = vlaneseq
    %v2337 = vshrl.u32 %v2336, 7
    %v2338 = vsub.s32 %v2335, %v2337
    %v2339 = vrot.slane %v2311, %v2338
    %v2340 = vcombine.high %v2318, %v2318
    %v2341 = vcombine.high %v2325, %v2325
    %v2342 = vcombine.high %v2332, %v2332
    %v2343 = vcombine.high %v2339, %v2339
    %v2344 = vcombine.high %v2290, %v2290
    %v2346 = vunpack.c.l.s4 1966171168
    %v2347 = vunpack.c.0.s8 %v2346
    %v2348 = vlaneseq
    %v2349 = vshrl.u32 %v2348, 7
    %v2350 = vsub.s32 %v2347, %v2349
    %v2351 = vrot.slane %v2290, %v2350
    %v2353 = vunpack.c.l.s4 1966171168
    %v2354 = vunpack.c.0.s8 %v2353
    %v2355 = vlaneseq
    %v2356 = vshrl.u32 %v2355, 7
    %v2357 = vsub.s32 %v2354, %v2356
    %v2358 = vrot.slane %v2344, %v2357
    %v2359 = vcombine.high %v2351, %v2351
    %v2360 = vcombine.high %v2358, %v2358
    %v2362 = vunpack.c.l.s4 1966171168
    %v2363 = vunpack.c.0.s8 %v2362
    %v2364 = vlaneseq
    %v2365 = vshrl.u32 %v2364, 7
    %v2366 = vsub.s32 %v2363, %v2365
    %v2367 = vrot.slane %v2351, %v2366
    %v2369 = vunpack.c.l.s4 1966171168
    %v2370 = vunpack.c.0.s8 %v2369
    %v2371 = vlaneseq
    %v2372 = vshrl.u32 %v2371, 7
    %v2373 = vsub.s32 %v2370, %v2372
    %v2374 = vrot.slane %v2358, %v2373
    %v2376 = vunpack.c.l.s4 1966171168
    %v2377 = vunpack.c.0.s8 %v2376
    %v2378 = vlaneseq
    %v2379 = vshrl.u32 %v2378, 7
    %v2380 = vsub.s32 %v2377, %v2379
    %v2381 = vrot.slane %v2359, %v2380
    %v2383 = vunpack.c.l.s4 1966171168
    %v2384 = vunpack.c.0.s8 %v2383
    %v2385 = vlaneseq
    %v2386 = vshrl.u32 %v2385, 7
    %v2387 = vsub.s32 %v2384, %v2386
    %v2388 = vrot.slane %v2360, %v2387
    %v2389 = vcombine.high %v2367, %v2367
    %v2390 = vcombine.high %v2374, %v2374
    %v2391 = vcombine.high %v2381, %v2381
    %v2392 = vcombine.high %v2388, %v2388
    %v2393 = vlaneseq
    %v2394 = vshrl.u32 %v2393, 7
    %v2395 = vsub.s32 0, %v2394
    %v2396 = vrot.slane %v2318, %v2395
    %v2397 = vlaneseq
    %v2398 = vshrl.u32 %v2397, 7
    %v2399 = vsub.s32 0, %v2398
    %v2400 = vrot.slane %v2332, %v2399
    %v2401 = vlaneseq
    %v2402 = vshrl.u32 %v2401, 7
    %v2403 = vsub.s32 0, %v2402
    %v2404 = vrot.slane %v2340, %v2403
    %v2405 = vlaneseq
    %v2406 = vshrl.u32 %v2405, 7
    %v2407 = vsub.s32 0, %v2406
    %v2408 = vrot.slane %v2342, %v2407
    %v2409 = vlaneseq
    %v2410 = vshrl.u32 %v2409, 7
    %v2411 = vsub.s32 0, %v2410
    %v2412 = vrot.slane %v2325, %v2411
    %v2413 = vlaneseq
    %v2414 = vshrl.u32 %v2413, 7
    %v2415 = vsub.s32 0, %v2414
    %v2416 = vrot.slane %v2339, %v2415
    %v2417 = vlaneseq
    %v2418 = vshrl.u32 %v2417, 7
    %v2419 = vsub.s32 0, %v2418
    %v2420 = vrot.slane %v2341, %v2419
    %v2421 = vlaneseq
    %v2422 = vshrl.u32 %v2421, 7
    %v2423 = vsub.s32 0, %v2422
    %v2424 = vrot.slane %v2343, %v2423
    %v2425 = vlaneseq
    %v2426 = vshrl.u32 %v2425, 7
    %v2427 = vsub.s32 0, %v2426
    %v2428 = vrot.slane %v2367, %v2427
    %v2429 = vlaneseq
    %v2430 = vshrl.u32 %v2429, 7
    %v2431 = vsub.s32 0, %v2430
    %v2432 = vrot.slane %v2381, %v2431
    %v2433 = vlaneseq
    %v2434 = vshrl.u32 %v2433, 7
    %v2435 = vsub.s32 0, %v2434
    %v2436 = vrot.slane %v2389, %v2435
    %v2437 = vlaneseq
    %v2438 = vshrl.u32 %v2437, 7
    %v2439 = vsub.s32 0, %v2438
    %v2440 = vrot.slane %v2391, %v2439
    %v2441 = vlaneseq
    %v2442 = vshrl.u32 %v2441, 7
    %v2443 = vsub.s32 0, %v2442
    %v2444 = vrot.slane %v2374, %v2443
    %v2445 = vlaneseq
    %v2446 = vshrl.u32 %v2445, 7
    %v2447 = vsub.s32 0, %v2446
    %v2448 = vrot.slane %v2388, %v2447
    %v2449 = vlaneseq
    %v2450 = vshrl.u32 %v2449, 7
    %v2451 = vsub.s32 0, %v2450
    %v2452 = vrot.slane %v2390, %v2451
    %v2453 = vlaneseq
    %v2454 = vshrl.u32 %v2453, 7
    %v2455 = vsub.s32 0, %v2454
    %v2456 = vrot.slane %v2392, %v2455
    %v2473 = vadd.f32 %v1153, %v2396
    %v2474 = vadd.f32 %v1156, %v2396
    %v2475 = vadd.f32 %v1161, %v2396
    %v2476 = vadd.f32 %v1164, %v2396
    %v2477 = vadd.f32 %v1169, %v2396
    %v2478 = vadd.f32 %v1172, %v2396
    %v2479 = vadd.f32 %v1177, %v2396
    %v2480 = vadd.f32 %v1180, %v2396
    %v2481 = vadd.f32 %v1185, %v2396
    %v2482 = vadd.f32 %v1188, %v2396
    %v2483 = vadd.f32 %v1193, %v2396
    %v2484 = vadd.f32 %v1196, %v2396
    %v2485 = vadd.f32 %v1201, %v2396
    %v2486 = vadd.f32 %v1204, %v2396
    %v2487 = vadd.f32 %v1209, %v2396
    %v2488 = vadd.f32 %v1212, %v2396
    %v2489 = vadd.f32 %v1217, %v2400
    %v2490 = vadd.f32 %v1220, %v2400
    %v2491 = vadd.f32 %v1225, %v2400
    %v2492 = vadd.f32 %v1228, %v2400
    %v2493 = vadd.f32 %v1233, %v2400
    %v2494 = vadd.f32 %v1236, %v2400
    %v2495 = vadd.f32 %v1241, %v2400
    %v2496 = vadd.f32 %v1244, %v2400
    %v2497 = vadd.f32 %v1249, %v2400
    %v2498 = vadd.f32 %v1252, %v2400
    %v2499 = vadd.f32 %v1257, %v2400
    %v2500 = vadd.f32 %v1260, %v2400
    %v2501 = vadd.f32 %v1265, %v2400
    %v2502 = vadd.f32 %v1268, %v2400
    %v2503 = vadd.f32 %v1273, %v2400
    %v2504 = vadd.f32 %v1276, %v2400
    %v2505 = vadd.f32 %v1281, %v2404
    %v2506 = vadd.f32 %v1284, %v2404
    %v2507 = vadd.f32 %v1289, %v2404
    %v2508 = vadd.f32 %v1292, %v2404
    %v2509 = vadd.f32 %v1297, %v2404
    %v2510 = vadd.f32 %v1300, %v2404
    %v2511 = vadd.f32 %v1305, %v2404
    %v2512 = vadd.f32 %v1308, %v2404
    %v2513 = vadd.f32 %v1313, %v2404
    %v2514 = vadd.f32 %v1316, %v2404
    %v2515 = vadd.f32 %v1321, %v2404
    %v2516 = vadd.f32 %v1324, %v2404
    %v2517 = vadd.f32 %v1329, %v2404
    %v2518 = vadd.f32 %v1332, %v2404
    %v2519 = vadd.f32 %v1337, %v2404
    %v2520 = vadd.f32 %v1340, %v2404
    %v2521 = vadd.f32 %v1345, %v2408
    %v2522 = vadd.f32 %v1348, %v2408
    %v2523 = vadd.f32 %v1353, %v2408
    %v2524 = vadd.f32 %v1356, %v2408
    %v2525 = vadd.f32 %v1361, %v2408
    %v2526 = vadd.f32 %v1364, %v2408
    %v2527 = vadd.f32 %v1369, %v2408
    %v2528 = vadd.f32 %v1372, %v2408
    %v2529 = vadd.f32 %v1377, %v2408
    %v2530 = vadd.f32 %v1380, %v2408
    %v2531 = vadd.f32 %v1385, %v2408
    %v2532 = vadd.f32 %v1388, %v2408
    %v2533 = vadd.f32 %v1393, %v2408
    %v2534 = vadd.f32 %v1396, %v2408
    %v2535 = vadd.f32 %v1401, %v2408
    %v2536 = vadd.f32 %v1404, %v2408
    %v2537 = vadd.f32 %v1409, %v2412
    %v2538 = vadd.f32 %v1412, %v2412
    %v2539 = vadd.f32 %v1417, %v2412
    %v2540 = vadd.f32 %v1420, %v2412
    %v2541 = vadd.f32 %v1425, %v2412
    %v2542 = vadd.f32 %v1428, %v2412
    %v2543 = vadd.f32 %v1433, %v2412
    %v2544 = vadd.f32 %v1436, %v2412
    %v2545 = vadd.f32 %v1441, %v2412
    %v2546 = vadd.f32 %v1444, %v2412
    %v2547 = vadd.f32 %v1449, %v2412
    %v2548 = vadd.f32 %v1452, %v2412
    %v2549 = vadd.f32 %v1457, %v2412
    %v2550 = vadd.f32 %v1460, %v2412
    %v2551 = vadd.f32 %v1465, %v2412
    %v2552 = vadd.f32 %v1468, %v2412
    %v2553 = vadd.f32 %v1473, %v2416
    %v2554 = vadd.f32 %v1476, %v2416
    %v2555 = vadd.f32 %v1481, %v2416
    %v2556 = vadd.f32 %v1484, %v2416
    %v2557 = vadd.f32 %v1489, %v2416
    %v2558 = vadd.f32 %v1492, %v2416
    %v2559 = vadd.f32 %v1497, %v2416
    %v2560 = vadd.f32 %v1500, %v2416
    %v2561 = vadd.f32 %v1505, %v2416
    %v2562 = vadd.f32 %v1508, %v2416
    %v2563 = vadd.f32 %v1513, %v2416
    %v2564 = vadd.f32 %v1516, %v2416
    %v2565 = vadd.f32 %v1521, %v2416
    %v2566 = vadd.f32 %v1524, %v2416
    %v2567 = vadd.f32 %v1529, %v2416
    %v2568 = vadd.f32 %v1532, %v2416
    %v2569 = vadd.f32 %v1537, %v2420
    %v2570 = vadd.f32 %v1540, %v2420
    %v2571 = vadd.f32 %v1545, %v2420
    %v2572 = vadd.f32 %v1548, %v2420
    %v2573 = vadd.f32 %v1553, %v2420
    %v2574 = vadd.f32 %v1556, %v2420
    %v2575 = vadd.f32 %v1561, %v2420
    %v2576 = vadd.f32 %v1564, %v2420
    %v2577 = vadd.f32 %v1569, %v2420
    %v2578 = vadd.f32 %v1572, %v2420
    %v2579 = vadd.f32 %v1577, %v2420
    %v2580 = vadd.f32 %v1580, %v2420
    %v2581 = vadd.f32 %v1585, %v2420
    %v2582 = vadd.f32 %v1588, %v2420
    %v2583 = vadd.f32 %v1593, %v2420
    %v2584 = vadd.f32 %v1596, %v2420
    %v2585 = vadd.f32 %v1601, %v2424
    %v2586 = vadd.f32 %v1604, %v2424
    %v2587 = vadd.f32 %v1609, %v2424
    %v2588 = vadd.f32 %v1612, %v2424
    %v2589 = vadd.f32 %v1617, %v2424
    %v2590 = vadd.f32 %v1620, %v2424
    %v2591 = vadd.f32 %v1625, %v2424
    %v2592 = vadd.f32 %v1628, %v2424
    %v2593 = vadd.f32 %v1633, %v2424
    %v2594 = vadd.f32 %v1636, %v2424
    %v2595 = vadd.f32 %v1641, %v2424
    %v2596 = vadd.f32 %v1644, %v2424
    %v2597 = vadd.f32 %v1649, %v2424
    %v2598 = vadd.f32 %v1652, %v2424
    %v2599 = vadd.f32 %v1657, %v2424
    %v2600 = vadd.f32 %v1660, %v2424
    %v2601 = vadd.f32 %v1665, %v2428
    %v2602 = vadd.f32 %v1668, %v2428
    %v2603 = vadd.f32 %v1673, %v2428
    %v2604 = vadd.f32 %v1676, %v2428
    %v2605 = vadd.f32 %v1681, %v2428
    %v2606 = vadd.f32 %v1684, %v2428
    %v2607 = vadd.f32 %v1689, %v2428
    %v2608 = vadd.f32 %v1692, %v2428
    %v2609 = vadd.f32 %v1697, %v2428
    %v2610 = vadd.f32 %v1700, %v2428
    %v2611 = vadd.f32 %v1705, %v2428
    %v2612 = vadd.f32 %v1708, %v2428
    %v2613 = vadd.f32 %v1713, %v2428
    %v2614 = vadd.f32 %v1716, %v2428
    %v2615 = vadd.f32 %v1721, %v2428
    %v2616 = vadd.f32 %v1724, %v2428
    %v2617 = vadd.f32 %v1729, %v2432
    %v2618 = vadd.f32 %v1732, %v2432
    %v2619 = vadd.f32 %v1737, %v2432
    %v2620 = vadd.f32 %v1740, %v2432
    %v2621 = vadd.f32 %v1745, %v2432
    %v2622 = vadd.f32 %v1748, %v2432
    %v2623 = vadd.f32 %v1753, %v2432
    %v2624 = vadd.f32 %v1756, %v2432
    %v2625 = vadd.f32 %v1761, %v2432
    %v2626 = vadd.f32 %v1764, %v2432
    %v2627 = vadd.f32 %v1769, %v2432
    %v2628 = vadd.f32 %v1772, %v2432
    %v2629 = vadd.f32 %v1777, %v2432
    %v2630 = vadd.f32 %v1780, %v2432
    %v2631 = vadd.f32 %v1785, %v2432
    %v2632 = vadd.f32 %v1788, %v2432
    %v2633 = vadd.f32 %v1793, %v2436
    %v2634 = vadd.f32 %v1796, %v2436
    %v2635 = vadd.f32 %v1801, %v2436
    %v2636 = vadd.f32 %v1804, %v2436
    %v2637 = vadd.f32 %v1809, %v2436
    %v2638 = vadd.f32 %v1812, %v2436
    %v2639 = vadd.f32 %v1817, %v2436
    %v2640 = vadd.f32 %v1820, %v2436
    %v2641 = vadd.f32 %v1825, %v2436
    %v2642 = vadd.f32 %v1828, %v2436
    %v2643 = vadd.f32 %v1833, %v2436
    %v2644 = vadd.f32 %v1836, %v2436
    %v2645 = vadd.f32 %v1841, %v2436
    %v2646 = vadd.f32 %v1844, %v2436
    %v2647 = vadd.f32 %v1849, %v2436
    %v2648 = vadd.f32 %v1852, %v2436
    %v2649 = vadd.f32 %v1857, %v2440
    %v2650 = vadd.f32 %v1860, %v2440
    %v2651 = vadd.f32 %v1865, %v2440
    %v2652 = vadd.f32 %v1868, %v2440
    %v2653 = vadd.f32 %v1873, %v2440
    %v2654 = vadd.f32 %v1876, %v2440
    %v2655 = vadd.f32 %v1881, %v2440
    %v2656 = vadd.f32 %v1884, %v2440
    %v2657 = vadd.f32 %v1889, %v2440
    %v2658 = vadd.f32 %v1892, %v2440
    %v2659 = vadd.f32 %v1897, %v2440
    %v2660 = vadd.f32 %v1900, %v2440
    %v2661 = vadd.f32 %v1905, %v2440
    %v2662 = vadd.f32 %v1908, %v2440
    %v2663 = vadd.f32 %v1913, %v2440
    %v2664 = vadd.f32 %v1916, %v2440
    %v2665 = vadd.f32 %v1921, %v2444
    %v2666 = vadd.f32 %v1924, %v2444
    %v2667 = vadd.f32 %v1929, %v2444
    %v2668 = vadd.f32 %v1932, %v2444
    %v2669 = vadd.f32 %v1937, %v2444
    %v2670 = vadd.f32 %v1940, %v2444
    %v2671 = vadd.f32 %v1945, %v2444
    %v2672 = vadd.f32 %v1948, %v2444
    %v2673 = vadd.f32 %v1953, %v2444
    %v2674 = vadd.f32 %v1956, %v2444
    %v2675 = vadd.f32 %v1961, %v2444
    %v2676 = vadd.f32 %v1964, %v2444
    %v2677 = vadd.f32 %v1969, %v2444
    %v2678 = vadd.f32 %v1972, %v2444
    %v2679 = vadd.f32 %v1977, %v2444
    %v2680 = vadd.f32 %v1980, %v2444
    %v2681 = vadd.f32 %v1985, %v2448
    %v2682 = vadd.f32 %v1988, %v2448
    %v2683 = vadd.f32 %v1993, %v2448
    %v2684 = vadd.f32 %v1996, %v2448
    %v2685 = vadd.f32 %v2001, %v2448
    %v2686 = vadd.f32 %v2004, %v2448
    %v2687 = vadd.f32 %v2009, %v2448
    %v2688 = vadd.f32 %v2012, %v2448
    %v2689 = vadd.f32 %v2017, %v2448
    %v2690 = vadd.f32 %v2020, %v2448
    %v2691 = vadd.f32 %v2025, %v2448
    %v2692 = vadd.f32 %v2028, %v2448
    %v2693 = vadd.f32 %v2033, %v2448
    %v2694 = vadd.f32 %v2036, %v2448
    %v2695 = vadd.f32 %v2041, %v2448
    %v2696 = vadd.f32 %v2044, %v2448
    %v2697 = vadd.f32 %v2049, %v2452
    %v2698 = vadd.f32 %v2052, %v2452
    %v2699 = vadd.f32 %v2057, %v2452
    %v2700 = vadd.f32 %v2060, %v2452
    %v2701 = vadd.f32 %v2065, %v2452
    %v2702 = vadd.f32 %v2068, %v2452
    %v2703 = vadd.f32 %v2073, %v2452
    %v2704 = vadd.f32 %v2076, %v2452
    %v2705 = vadd.f32 %v2081, %v2452
    %v2706 = vadd.f32 %v2084, %v2452
    %v2707 = vadd.f32 %v2089, %v2452
    %v2708 = vadd.f32 %v2092, %v2452
    %v2709 = vadd.f32 %v2097, %v2452
    %v2710 = vadd.f32 %v2100, %v2452
    %v2711 = vadd.f32 %v2105, %v2452
    %v2712 = vadd.f32 %v2108, %v2452
    %v2713 = vadd.f32 %v2113, %v2456
    %v2714 = vadd.f32 %v2116, %v2456
    %v2715 = vadd.f32 %v2121, %v2456
    %v2716 = vadd.f32 %v2124, %v2456
    %v2717 = vadd.f32 %v2129, %v2456
    %v2718 = vadd.f32 %v2132, %v2456
    %v2719 = vadd.f32 %v2137, %v2456
    %v2720 = vadd.f32 %v2140, %v2456
    %v2721 = vadd.f32 %v2145, %v2456
    %v2722 = vadd.f32 %v2148, %v2456
    %v2723 = vadd.f32 %v2153, %v2456
    %v2724 = vadd.f32 %v2156, %v2456
    %v2725 = vadd.f32 %v2161, %v2456
    %v2726 = vadd.f32 %v2164, %v2456
    %v2727 = vadd.f32 %v2169, %v2456
    %v2728 = vadd.f32 %v2172, %v2456
    %v2729 = vpack.c.bf16 %v2474, %v2473
    %v2730 = vpack.c.bf16 %v2476, %v2475
    %v2731 = vpack.c.bf16 %v2478, %v2477
    %v2732 = vpack.c.bf16 %v2480, %v2479
    %v2733 = vpack.c.bf16 %v2482, %v2481
    %v2734 = vpack.c.bf16 %v2484, %v2483
    %v2735 = vpack.c.bf16 %v2486, %v2485
    %v2736 = vpack.c.bf16 %v2488, %v2487
    %v2737 = vpack.c.bf16 %v2490, %v2489
    %v2738 = vpack.c.bf16 %v2492, %v2491
    %v2739 = vpack.c.bf16 %v2494, %v2493
    %v2740 = vpack.c.bf16 %v2496, %v2495
    %v2741 = vpack.c.bf16 %v2498, %v2497
    %v2742 = vpack.c.bf16 %v2500, %v2499
    %v2743 = vpack.c.bf16 %v2502, %v2501
    %v2744 = vpack.c.bf16 %v2504, %v2503
    %v2745 = vpack.c.bf16 %v2506, %v2505
    %v2746 = vpack.c.bf16 %v2508, %v2507
    %v2747 = vpack.c.bf16 %v2510, %v2509
    %v2748 = vpack.c.bf16 %v2512, %v2511
    %v2749 = vpack.c.bf16 %v2514, %v2513
    %v2750 = vpack.c.bf16 %v2516, %v2515
    %v2751 = vpack.c.bf16 %v2518, %v2517
    %v2752 = vpack.c.bf16 %v2520, %v2519
    %v2753 = vpack.c.bf16 %v2522, %v2521
    %v2754 = vpack.c.bf16 %v2524, %v2523
    %v2755 = vpack.c.bf16 %v2526, %v2525
    %v2756 = vpack.c.bf16 %v2528, %v2527
    %v2757 = vpack.c.bf16 %v2530, %v2529
    %v2758 = vpack.c.bf16 %v2532, %v2531
    %v2759 = vpack.c.bf16 %v2534, %v2533
    %v2760 = vpack.c.bf16 %v2536, %v2535
    %v2761 = vpack.c.bf16 %v2538, %v2537
    %v2762 = vpack.c.bf16 %v2540, %v2539
    %v2763 = vpack.c.bf16 %v2542, %v2541
    %v2764 = vpack.c.bf16 %v2544, %v2543
    %v2765 = vpack.c.bf16 %v2546, %v2545
    %v2766 = vpack.c.bf16 %v2548, %v2547
    %v2767 = vpack.c.bf16 %v2550, %v2549
    %v2768 = vpack.c.bf16 %v2552, %v2551
    %v2769 = vpack.c.bf16 %v2554, %v2553
    %v2770 = vpack.c.bf16 %v2556, %v2555
    %v2771 = vpack.c.bf16 %v2558, %v2557
    %v2772 = vpack.c.bf16 %v2560, %v2559
    %v2773 = vpack.c.bf16 %v2562, %v2561
    %v2774 = vpack.c.bf16 %v2564, %v2563
    %v2775 = vpack.c.bf16 %v2566, %v2565
    %v2776 = vpack.c.bf16 %v2568, %v2567
    %v2777 = vpack.c.bf16 %v2570, %v2569
    %v2778 = vpack.c.bf16 %v2572, %v2571
    %v2779 = vpack.c.bf16 %v2574, %v2573
    %v2780 = vpack.c.bf16 %v2576, %v2575
    %v2781 = vpack.c.bf16 %v2578, %v2577
    %v2782 = vpack.c.bf16 %v2580, %v2579
    %v2783 = vpack.c.bf16 %v2582, %v2581
    %v2784 = vpack.c.bf16 %v2584, %v2583
    %v2785 = vpack.c.bf16 %v2586, %v2585
    %v2786 = vpack.c.bf16 %v2588, %v2587
    %v2787 = vpack.c.bf16 %v2590, %v2589
    %v2788 = vpack.c.bf16 %v2592, %v2591
    %v2789 = vpack.c.bf16 %v2594, %v2593
    %v2790 = vpack.c.bf16 %v2596, %v2595
    %v2791 = vpack.c.bf16 %v2598, %v2597
    %v2792 = vpack.c.bf16 %v2600, %v2599
    %v2793 = vpack.c.bf16 %v2602, %v2601
    %v2794 = vpack.c.bf16 %v2604, %v2603
    %v2795 = vpack.c.bf16 %v2606, %v2605
    %v2796 = vpack.c.bf16 %v2608, %v2607
    %v2797 = vpack.c.bf16 %v2610, %v2609
    %v2798 = vpack.c.bf16 %v2612, %v2611
    %v2799 = vpack.c.bf16 %v2614, %v2613
    %v2800 = vpack.c.bf16 %v2616, %v2615
    %v2801 = vpack.c.bf16 %v2618, %v2617
    %v2802 = vpack.c.bf16 %v2620, %v2619
    %v2803 = vpack.c.bf16 %v2622, %v2621
    %v2804 = vpack.c.bf16 %v2624, %v2623
    %v2805 = vpack.c.bf16 %v2626, %v2625
    %v2806 = vpack.c.bf16 %v2628, %v2627
    %v2807 = vpack.c.bf16 %v2630, %v2629
    %v2808 = vpack.c.bf16 %v2632, %v2631
    %v2809 = vpack.c.bf16 %v2634, %v2633
    %v2810 = vpack.c.bf16 %v2636, %v2635
    %v2811 = vpack.c.bf16 %v2638, %v2637
    %v2812 = vpack.c.bf16 %v2640, %v2639
    %v2813 = vpack.c.bf16 %v2642, %v2641
    %v2814 = vpack.c.bf16 %v2644, %v2643
    %v2815 = vpack.c.bf16 %v2646, %v2645
    %v2816 = vpack.c.bf16 %v2648, %v2647
    %v2817 = vpack.c.bf16 %v2650, %v2649
    %v2818 = vpack.c.bf16 %v2652, %v2651
    %v2819 = vpack.c.bf16 %v2654, %v2653
    %v2820 = vpack.c.bf16 %v2656, %v2655
    %v2821 = vpack.c.bf16 %v2658, %v2657
    %v2822 = vpack.c.bf16 %v2660, %v2659
    %v2823 = vpack.c.bf16 %v2662, %v2661
    %v2824 = vpack.c.bf16 %v2664, %v2663
    %v2825 = vpack.c.bf16 %v2666, %v2665
    %v2826 = vpack.c.bf16 %v2668, %v2667
    %v2827 = vpack.c.bf16 %v2670, %v2669
    %v2828 = vpack.c.bf16 %v2672, %v2671
    %v2829 = vpack.c.bf16 %v2674, %v2673
    %v2830 = vpack.c.bf16 %v2676, %v2675
    %v2831 = vpack.c.bf16 %v2678, %v2677
    %v2832 = vpack.c.bf16 %v2680, %v2679
    %v2833 = vpack.c.bf16 %v2682, %v2681
    %v2834 = vpack.c.bf16 %v2684, %v2683
    %v2835 = vpack.c.bf16 %v2686, %v2685
    %v2836 = vpack.c.bf16 %v2688, %v2687
    %v2837 = vpack.c.bf16 %v2690, %v2689
    %v2838 = vpack.c.bf16 %v2692, %v2691
    %v2839 = vpack.c.bf16 %v2694, %v2693
    %v2840 = vpack.c.bf16 %v2696, %v2695
    %v2841 = vpack.c.bf16 %v2698, %v2697
    %v2842 = vpack.c.bf16 %v2700, %v2699
    %v2843 = vpack.c.bf16 %v2702, %v2701
    %v2844 = vpack.c.bf16 %v2704, %v2703
    %v2845 = vpack.c.bf16 %v2706, %v2705
    %v2846 = vpack.c.bf16 %v2708, %v2707
    %v2847 = vpack.c.bf16 %v2710, %v2709
    %v2848 = vpack.c.bf16 %v2712, %v2711
    %v2849 = vpack.c.bf16 %v2714, %v2713
    %v2850 = vpack.c.bf16 %v2716, %v2715
    %v2851 = vpack.c.bf16 %v2718, %v2717
    %v2852 = vpack.c.bf16 %v2720, %v2719
    %v2853 = vpack.c.bf16 %v2722, %v2721
    %v2854 = vpack.c.bf16 %v2724, %v2723
    %v2855 = vpack.c.bf16 %v2726, %v2725
    %v2856 = vpack.c.bf16 %v2728, %v2727
    %v2857 = vtanh.bf16.pop %v2729
    %v2858 = vtanh.bf16.pop %v2730
    %v2859 = vtanh.bf16.pop %v2731
    %v2860 = vtanh.bf16.pop %v2732
    %v2861 = vtanh.bf16.pop %v2733
    %v2862 = vtanh.bf16.pop %v2734
    %v2863 = vtanh.bf16.pop %v2735
    %v2864 = vtanh.bf16.pop %v2736
    %v2865 = vtanh.bf16.pop %v2737
    %v2866 = vtanh.bf16.pop %v2738
    %v2867 = vtanh.bf16.pop %v2739
    %v2868 = vtanh.bf16.pop %v2740
    %v2869 = vtanh.bf16.pop %v2741
    %v2870 = vtanh.bf16.pop %v2742
    %v2871 = vtanh.bf16.pop %v2743
    %v2872 = vtanh.bf16.pop %v2744
    %v2873 = vtanh.bf16.pop %v2745
    %v2874 = vtanh.bf16.pop %v2746
    %v2875 = vtanh.bf16.pop %v2747
    %v2876 = vtanh.bf16.pop %v2748
    %v2877 = vtanh.bf16.pop %v2749
    %v2878 = vtanh.bf16.pop %v2750
    %v2879 = vtanh.bf16.pop %v2751
    %v2880 = vtanh.bf16.pop %v2752
    %v2881 = vtanh.bf16.pop %v2753
    %v2882 = vtanh.bf16.pop %v2754
    %v2883 = vtanh.bf16.pop %v2755
    %v2884 = vtanh.bf16.pop %v2756
    %v2885 = vtanh.bf16.pop %v2757
    %v2886 = vtanh.bf16.pop %v2758
    %v2887 = vtanh.bf16.pop %v2759
    %v2888 = vtanh.bf16.pop %v2760
    %v2889 = vtanh.bf16.pop %v2761
    %v2890 = vtanh.bf16.pop %v2762
    %v2891 = vtanh.bf16.pop %v2763
    %v2892 = vtanh.bf16.pop %v2764
    %v2893 = vtanh.bf16.pop %v2765
    %v2894 = vtanh.bf16.pop %v2766
    %v2895 = vtanh.bf16.pop %v2767
    %v2896 = vtanh.bf16.pop %v2768
    %v2897 = vtanh.bf16.pop %v2769
    %v2898 = vtanh.bf16.pop %v2770
    %v2899 = vtanh.bf16.pop %v2771
    %v2900 = vtanh.bf16.pop %v2772
    %v2901 = vtanh.bf16.pop %v2773
    %v2902 = vtanh.bf16.pop %v2774
    %v2903 = vtanh.bf16.pop %v2775
    %v2904 = vtanh.bf16.pop %v2776
    %v2905 = vtanh.bf16.pop %v2777
    %v2906 = vtanh.bf16.pop %v2778
    %v2907 = vtanh.bf16.pop %v2779
    %v2908 = vtanh.bf16.pop %v2780
    %v2909 = vtanh.bf16.pop %v2781
    %v2910 = vtanh.bf16.pop %v2782
    %v2911 = vtanh.bf16.pop %v2783
    %v2912 = vtanh.bf16.pop %v2784
    %v2913 = vtanh.bf16.pop %v2785
    %v2914 = vtanh.bf16.pop %v2786
    %v2915 = vtanh.bf16.pop %v2787
    %v2916 = vtanh.bf16.pop %v2788
    %v2917 = vtanh.bf16.pop %v2789
    %v2918 = vtanh.bf16.pop %v2790
    %v2919 = vtanh.bf16.pop %v2791
    %v2920 = vtanh.bf16.pop %v2792
    %v2921 = vtanh.bf16.pop %v2793
    %v2922 = vtanh.bf16.pop %v2794
    %v2923 = vtanh.bf16.pop %v2795
    %v2924 = vtanh.bf16.pop %v2796
    %v2925 = vtanh.bf16.pop %v2797
    %v2926 = vtanh.bf16.pop %v2798
    %v2927 = vtanh.bf16.pop %v2799
    %v2928 = vtanh.bf16.pop %v2800
    %v2929 = vtanh.bf16.pop %v2801
    %v2930 = vtanh.bf16.pop %v2802
    %v2931 = vtanh.bf16.pop %v2803
    %v2932 = vtanh.bf16.pop %v2804
    %v2933 = vtanh.bf16.pop %v2805
    %v2934 = vtanh.bf16.pop %v2806
    %v2935 = vtanh.bf16.pop %v2807
    %v2936 = vtanh.bf16.pop %v2808
    %v2937 = vtanh.bf16.pop %v2809
    %v2938 = vtanh.bf16.pop %v2810
    %v2939 = vtanh.bf16.pop %v2811
    %v2940 = vtanh.bf16.pop %v2812
    %v2941 = vtanh.bf16.pop %v2813
    %v2942 = vtanh.bf16.pop %v2814
    %v2943 = vtanh.bf16.pop %v2815
    %v2944 = vtanh.bf16.pop %v2816
    %v2945 = vtanh.bf16.pop %v2817
    %v2946 = vtanh.bf16.pop %v2818
    %v2947 = vtanh.bf16.pop %v2819
    %v2948 = vtanh.bf16.pop %v2820
    %v2949 = vtanh.bf16.pop %v2821
    %v2950 = vtanh.bf16.pop %v2822
    %v2951 = vtanh.bf16.pop %v2823
    %v2952 = vtanh.bf16.pop %v2824
    %v2953 = vtanh.bf16.pop %v2825
    %v2954 = vtanh.bf16.pop %v2826
    %v2955 = vtanh.bf16.pop %v2827
    %v2956 = vtanh.bf16.pop %v2828
    %v2957 = vtanh.bf16.pop %v2829
    %v2958 = vtanh.bf16.pop %v2830
    %v2959 = vtanh.bf16.pop %v2831
    %v2960 = vtanh.bf16.pop %v2832
    %v2961 = vtanh.bf16.pop %v2833
    %v2962 = vtanh.bf16.pop %v2834
    %v2963 = vtanh.bf16.pop %v2835
    %v2964 = vtanh.bf16.pop %v2836
    %v2965 = vtanh.bf16.pop %v2837
    %v2966 = vtanh.bf16.pop %v2838
    %v2967 = vtanh.bf16.pop %v2839
    %v2968 = vtanh.bf16.pop %v2840
    %v2969 = vtanh.bf16.pop %v2841
    %v2970 = vtanh.bf16.pop %v2842
    %v2971 = vtanh.bf16.pop %v2843
    %v2972 = vtanh.bf16.pop %v2844
    %v2973 = vtanh.bf16.pop %v2845
    %v2974 = vtanh.bf16.pop %v2846
    %v2975 = vtanh.bf16.pop %v2847
    %v2976 = vtanh.bf16.pop %v2848
    %v2977 = vtanh.bf16.pop %v2849
    %v2978 = vtanh.bf16.pop %v2850
    %v2979 = vtanh.bf16.pop %v2851
    %v2980 = vtanh.bf16.pop %v2852
    %v2981 = vtanh.bf16.pop %v2853
    %v2982 = vtanh.bf16.pop %v2854
    %v2983 = vtanh.bf16.pop %v2855
    %v2984 = vtanh.bf16.pop %v2856
    %v2985 = vld [vmem:[%s5] sm:$0x1]
    %2986 = vmatprep.subr.bf16.mxu0 0
    %2987 = vmatpush1.bf16.xpose.msra.mxu0 %v2857
    %2988 = vmatprep.subr.bf16.mxu0 0
    %2989 = vmatpush1.bf16.xpose.msra.mxu0 %v2858
    %2990 = vmatprep.subr.bf16.mxu0 0
    %2991 = vmatpush1.bf16.xpose.msra.mxu0 %v2859
    %2992 = vmatprep.subr.bf16.mxu0 0
    %2993 = vmatpush1.bf16.xpose.msra.mxu0 %v2860
    %2994 = vmatprep.subr.bf16.mxu0 0
    %2995 = vmatpush1.bf16.xpose.msra.mxu0 %v2861
    %2996 = vmatprep.subr.bf16.mxu0 0
    %2997 = vmatpush1.bf16.xpose.msra.mxu0 %v2862
    %2998 = vmatprep.subr.bf16.mxu0 0
    %2999 = vmatpush1.bf16.xpose.msra.mxu0 %v2863
    %3000 = vmatprep.subr.bf16.mxu0 0
    %3001 = vmatpush1.bf16.xpose.msra.mxu0 %v2864
    %3002 = vmatprep.subr.bf16.mxu0 0
    %3003 = vmatpush1.bf16.xpose.msra.mxu0 0
    %3004 = vmatprep.subr.bf16.mxu0 0
    %3005 = vmatpush1.bf16.xpose.msra.mxu0 0
    %3006 = vmatprep.subr.bf16.mxu0 0
    %3007 = vmatpush1.bf16.xpose.msra.mxu0 0
    %3008 = vmatprep.subr.bf16.mxu0 0
    %3009 = vmatpush1.bf16.xpose.msra.mxu0 0
    %3010 = vmatprep.subr.bf16.mxu0 0
    %3011 = vmatpush1.bf16.xpose.msra.mxu0 0
    %3012 = vmatprep.subr.bf16.mxu0 0
    %3013 = vmatpush1.bf16.xpose.msra.mxu0 0
    %3014 = vmatprep.subr.bf16.mxu0 0
    %3015 = vmatpush1.bf16.xpose.msra.mxu0 0
    %3016 = vmatprep.subr.bf16.mxu0 0
    %3017 = vmatpush1.bf16.xpose.msra.mxu0 0
    %3018 = vmatprep.mubr.bf16.mxu0 0
    %3019 = vmatmul.mubr.bf16.gmra.mrb[0].mxu0 %v2985
    %v3020 = vpop.f32.mrb[0].mxu0
    %v3021 = vadd.f32 0.0, %v3020
    %v3022 = vpop.f32.mrb[0].mxu0
    %v3023 = vpop.f32.mrb[0].mxu0
    %v3024 = vpop.f32.mrb[0].mxu0
    %3025 = vdwg.mxu0
    %3026 = vmatprep.subr.bf16.mxu0 0
    %3027 = vmatpush1.bf16.xpose.msra.mxu0 %v2865
    %3028 = vmatprep.subr.bf16.mxu0 0
    %3029 = vmatpush1.bf16.xpose.msra.mxu0 %v2866
    %3030 = vmatprep.subr.bf16.mxu0 0
    %3031 = vmatpush1.bf16.xpose.msra.mxu0 %v2867
    %3032 = vmatprep.subr.bf16.mxu0 0
    %3033 = vmatpush1.bf16.xpose.msra.mxu0 %v2868
    %3034 = vmatprep.subr.bf16.mxu0 0
    %3035 = vmatpush1.bf16.xpose.msra.mxu0 %v2869
    %3036 = vmatprep.subr.bf16.mxu0 0
    %3037 = vmatpush1.bf16.xpose.msra.mxu0 %v2870
    %3038 = vmatprep.subr.bf16.mxu0 0
    %3039 = vmatpush1.bf16.xpose.msra.mxu0 %v2871
    %3040 = vmatprep.subr.bf16.mxu0 0
    %3041 = vmatpush1.bf16.xpose.msra.mxu0 %v2872
    %3042 = vmatprep.subr.bf16.mxu0 0
    %3043 = vmatpush1.bf16.xpose.msra.mxu0 0
    %3044 = vmatprep.subr.bf16.mxu0 0
    %3045 = vmatpush1.bf16.xpose.msra.mxu0 0
    %3046 = vmatprep.subr.bf16.mxu0 0
    %3047 = vmatpush1.bf16.xpose.msra.mxu0 0
    %3048 = vmatprep.subr.bf16.mxu0 0
    %3049 = vmatpush1.bf16.xpose.msra.mxu0 0
    %3050 = vmatprep.subr.bf16.mxu0 0
    %3051 = vmatpush1.bf16.xpose.msra.mxu0 0
    %3052 = vmatprep.subr.bf16.mxu0 0
    %3053 = vmatpush1.bf16.xpose.msra.mxu0 0
    %3054 = vmatprep.subr.bf16.mxu0 0
    %3055 = vmatpush1.bf16.xpose.msra.mxu0 0
    %3056 = vmatprep.subr.bf16.mxu0 0
    %3057 = vmatpush1.bf16.xpose.msra.mxu0 0
    %3058 = vmatprep.mubr.bf16.mxu0 0
    %3059 = vmatmul.mubr.bf16.gmra.mrb[0].mxu0 %v2985
    %v3060 = vpop.f32.mrb[0].mxu0
    %v3061 = vadd.f32 0.0, %v3060
    %v3062 = vpop.f32.mrb[0].mxu0
    %v3063 = vpop.f32.mrb[0].mxu0
    %v3064 = vpop.f32.mrb[0].mxu0
    %3065 = vdwg.mxu0
    %3066 = vmatprep.subr.bf16.mxu0 0
    %3067 = vmatpush1.bf16.xpose.msra.mxu0 %v2873
    %3068 = vmatprep.subr.bf16.mxu0 0
    %3069 = vmatpush1.bf16.xpose.msra.mxu0 %v2874
    %3070 = vmatprep.subr.bf16.mxu0 0
    %3071 = vmatpush1.bf16.xpose.msra.mxu0 %v2875
    %3072 = vmatprep.subr.bf16.mxu0 0
    %3073 = vmatpush1.bf16.xpose.msra.mxu0 %v2876
    %3074 = vmatprep.subr.bf16.mxu0 0
    %3075 = vmatpush1.bf16.xpose.msra.mxu0 %v2877
    %3076 = vmatprep.subr.bf16.mxu0 0
    %3077 = vmatpush1.bf16.xpose.msra.mxu0 %v2878
    %3078 = vmatprep.subr.bf16.mxu0 0
    %3079 = vmatpush1.bf16.xpose.msra.mxu0 %v2879
    %3080 = vmatprep.subr.bf16.mxu0 0
    %3081 = vmatpush1.bf16.xpose.msra.mxu0 %v2880
    %3082 = vmatprep.subr.bf16.mxu0 0
    %3083 = vmatpush1.bf16.xpose.msra.mxu0 0
    %3084 = vmatprep.subr.bf16.mxu0 0
    %3085 = vmatpush1.bf16.xpose.msra.mxu0 0
    %3086 = vmatprep.subr.bf16.mxu0 0
    %3087 = vmatpush1.bf16.xpose.msra.mxu0 0
    %3088 = vmatprep.subr.bf16.mxu0 0
    %3089 = vmatpush1.bf16.xpose.msra.mxu0 0
    %3090 = vmatprep.subr.bf16.mxu0 0
    %3091 = vmatpush1.bf16.xpose.msra.mxu0 0
    %3092 = vmatprep.subr.bf16.mxu0 0
    %3093 = vmatpush1.bf16.xpose.msra.mxu0 0
    %3094 = vmatprep.subr.bf16.mxu0 0
    %3095 = vmatpush1.bf16.xpose.msra.mxu0 0
    %3096 = vmatprep.subr.bf16.mxu0 0
    %3097 = vmatpush1.bf16.xpose.msra.mxu0 0
    %3098 = vmatprep.mubr.bf16.mxu0 0
    %3099 = vmatmul.mubr.bf16.gmra.mrb[0].mxu0 %v2985
    %v3100 = vpop.f32.mrb[0].mxu0
    %v3101 = vadd.f32 0.0, %v3100
    %v3102 = vpop.f32.mrb[0].mxu0
    %v3103 = vpop.f32.mrb[0].mxu0
    %v3104 = vpop.f32.mrb[0].mxu0
    %3105 = vdwg.mxu0
    %3106 = vmatprep.subr.bf16.mxu0 0
    %3107 = vmatpush1.bf16.xpose.msra.mxu0 %v2881
    %3108 = vmatprep.subr.bf16.mxu0 0
    %3109 = vmatpush1.bf16.xpose.msra.mxu0 %v2882
    %3110 = vmatprep.subr.bf16.mxu0 0
    %3111 = vmatpush1.bf16.xpose.msra.mxu0 %v2883
    %3112 = vmatprep.subr.bf16.mxu0 0
    %3113 = vmatpush1.bf16.xpose.msra.mxu0 %v2884
    %3114 = vmatprep.subr.bf16.mxu0 0
    %3115 = vmatpush1.bf16.xpose.msra.mxu0 %v2885
    %3116 = vmatprep.subr.bf16.mxu0 0
    %3117 = vmatpush1.bf16.xpose.msra.mxu0 %v2886
    %3118 = vmatprep.subr.bf16.mxu0 0
    %3119 = vmatpush1.bf16.xpose.msra.mxu0 %v2887
    %3120 = vmatprep.subr.bf16.mxu0 0
    %3121 = vmatpush1.bf16.xpose.msra.mxu0 %v2888
    %3122 = vmatprep.subr.bf16.mxu0 0
    %3123 = vmatpush1.bf16.xpose.msra.mxu0 0
    %3124 = vmatprep.subr.bf16.mxu0 0
    %3125 = vmatpush1.bf16.xpose.msra.mxu0 0
    %3126 = vmatprep.subr.bf16.mxu0 0
    %3127 = vmatpush1.bf16.xpose.msra.mxu0 0
    %3128 = vmatprep.subr.bf16.mxu0 0
    %3129 = vmatpush1.bf16.xpose.msra.mxu0 0
    %3130 = vmatprep.subr.bf16.mxu0 0
    %3131 = vmatpush1.bf16.xpose.msra.mxu0 0
    %3132 = vmatprep.subr.bf16.mxu0 0
    %3133 = vmatpush1.bf16.xpose.msra.mxu0 0
    %3134 = vmatprep.subr.bf16.mxu0 0
    %3135 = vmatpush1.bf16.xpose.msra.mxu0 0
    %3136 = vmatprep.subr.bf16.mxu0 0
    %3137 = vmatpush1.bf16.xpose.msra.mxu0 0
    %3138 = vmatprep.mubr.bf16.mxu0 0
    %3139 = vmatmul.mubr.bf16.gmra.mrb[0].mxu0 %v2985
    %v3140 = vpop.f32.mrb[0].mxu0
    %v3141 = vadd.f32 0.0, %v3140
    %v3142 = vpop.f32.mrb[0].mxu0
    %v3143 = vpop.f32.mrb[0].mxu0
    %v3144 = vpop.f32.mrb[0].mxu0
    %3145 = vdwg.mxu0
    %3146 = vmatprep.subr.bf16.mxu0 0
    %3147 = vmatpush1.bf16.xpose.msra.mxu0 %v2889
    %3148 = vmatprep.subr.bf16.mxu0 0
    %3149 = vmatpush1.bf16.xpose.msra.mxu0 %v2890
    %3150 = vmatprep.subr.bf16.mxu0 0
    %3151 = vmatpush1.bf16.xpose.msra.mxu0 %v2891
    %3152 = vmatprep.subr.bf16.mxu0 0
    %3153 = vmatpush1.bf16.xpose.msra.mxu0 %v2892
    %3154 = vmatprep.subr.bf16.mxu0 0
    %3155 = vmatpush1.bf16.xpose.msra.mxu0 %v2893
    %3156 = vmatprep.subr.bf16.mxu0 0
    %3157 = vmatpush1.bf16.xpose.msra.mxu0 %v2894
    %3158 = vmatprep.subr.bf16.mxu0 0
    %3159 = vmatpush1.bf16.xpose.msra.mxu0 %v2895
    %3160 = vmatprep.subr.bf16.mxu0 0
    %3161 = vmatpush1.bf16.xpose.msra.mxu0 %v2896
    %3162 = vmatprep.subr.bf16.mxu0 0
    %3163 = vmatpush1.bf16.xpose.msra.mxu0 0
    %3164 = vmatprep.subr.bf16.mxu0 0
    %3165 = vmatpush1.bf16.xpose.msra.mxu0 0
    %3166 = vmatprep.subr.bf16.mxu0 0
    %3167 = vmatpush1.bf16.xpose.msra.mxu0 0
    %3168 = vmatprep.subr.bf16.mxu0 0
    %3169 = vmatpush1.bf16.xpose.msra.mxu0 0
    %3170 = vmatprep.subr.bf16.mxu0 0
    %3171 = vmatpush1.bf16.xpose.msra.mxu0 0
    %3172 = vmatprep.subr.bf16.mxu0 0
    %3173 = vmatpush1.bf16.xpose.msra.mxu0 0
    %3174 = vmatprep.subr.bf16.mxu0 0
    %3175 = vmatpush1.bf16.xpose.msra.mxu0 0
    %3176 = vmatprep.subr.bf16.mxu0 0
    %3177 = vmatpush1.bf16.xpose.msra.mxu0 0
    %3178 = vmatprep.mubr.bf16.mxu0 0
    %3179 = vmatmul.mubr.bf16.gmra.mrb[0].mxu0 %v2985
    %v3180 = vpop.f32.mrb[0].mxu0
    %v3181 = vadd.f32 0.0, %v3180
    %v3182 = vpop.f32.mrb[0].mxu0
    %v3183 = vpop.f32.mrb[0].mxu0
    %v3184 = vpop.f32.mrb[0].mxu0
    %3185 = vdwg.mxu0
    %3186 = vmatprep.subr.bf16.mxu0 0
    %3187 = vmatpush1.bf16.xpose.msra.mxu0 %v2897
    %3188 = vmatprep.subr.bf16.mxu0 0
    %3189 = vmatpush1.bf16.xpose.msra.mxu0 %v2898
    %3190 = vmatprep.subr.bf16.mxu0 0
    %3191 = vmatpush1.bf16.xpose.msra.mxu0 %v2899
    %3192 = vmatprep.subr.bf16.mxu0 0
    %3193 = vmatpush1.bf16.xpose.msra.mxu0 %v2900
    %3194 = vmatprep.subr.bf16.mxu0 0
    %3195 = vmatpush1.bf16.xpose.msra.mxu0 %v2901
    %3196 = vmatprep.subr.bf16.mxu0 0
    %3197 = vmatpush1.bf16.xpose.msra.mxu0 %v2902
    %3198 = vmatprep.subr.bf16.mxu0 0
    %3199 = vmatpush1.bf16.xpose.msra.mxu0 %v2903
    %3200 = vmatprep.subr.bf16.mxu0 0
    %3201 = vmatpush1.bf16.xpose.msra.mxu0 %v2904
    %3202 = vmatprep.subr.bf16.mxu0 0
    %3203 = vmatpush1.bf16.xpose.msra.mxu0 0
    %3204 = vmatprep.subr.bf16.mxu0 0
    %3205 = vmatpush1.bf16.xpose.msra.mxu0 0
    %3206 = vmatprep.subr.bf16.mxu0 0
    %3207 = vmatpush1.bf16.xpose.msra.mxu0 0
    %3208 = vmatprep.subr.bf16.mxu0 0
    %3209 = vmatpush1.bf16.xpose.msra.mxu0 0
    %3210 = vmatprep.subr.bf16.mxu0 0
    %3211 = vmatpush1.bf16.xpose.msra.mxu0 0
    %3212 = vmatprep.subr.bf16.mxu0 0
    %3213 = vmatpush1.bf16.xpose.msra.mxu0 0
    %3214 = vmatprep.subr.bf16.mxu0 0
    %3215 = vmatpush1.bf16.xpose.msra.mxu0 0
    %3216 = vmatprep.subr.bf16.mxu0 0
    %3217 = vmatpush1.bf16.xpose.msra.mxu0 0
    %3218 = vmatprep.mubr.bf16.mxu0 0
    %3219 = vmatmul.mubr.bf16.gmra.mrb[0].mxu0 %v2985
    %v3220 = vpop.f32.mrb[0].mxu0
    %v3221 = vadd.f32 0.0, %v3220
    %v3222 = vpop.f32.mrb[0].mxu0
    %v3223 = vpop.f32.mrb[0].mxu0
    %v3224 = vpop.f32.mrb[0].mxu0
    %3225 = vdwg.mxu0
    %3226 = vmatprep.subr.bf16.mxu0 0
    %3227 = vmatpush1.bf16.xpose.msra.mxu0 %v2905
    %3228 = vmatprep.subr.bf16.mxu0 0
    %3229 = vmatpush1.bf16.xpose.msra.mxu0 %v2906
    %3230 = vmatprep.subr.bf16.mxu0 0
    %3231 = vmatpush1.bf16.xpose.msra.mxu0 %v2907
    %3232 = vmatprep.subr.bf16.mxu0 0
    %3233 = vmatpush1.bf16.xpose.msra.mxu0 %v2908
    %3234 = vmatprep.subr.bf16.mxu0 0
    %3235 = vmatpush1.bf16.xpose.msra.mxu0 %v2909
    %3236 = vmatprep.subr.bf16.mxu0 0
    %3237 = vmatpush1.bf16.xpose.msra.mxu0 %v2910
    %3238 = vmatprep.subr.bf16.mxu0 0
    %3239 = vmatpush1.bf16.xpose.msra.mxu0 %v2911
    %3240 = vmatprep.subr.bf16.mxu0 0
    %3241 = vmatpush1.bf16.xpose.msra.mxu0 %v2912
    %3242 = vmatprep.subr.bf16.mxu0 0
    %3243 = vmatpush1.bf16.xpose.msra.mxu0 0
    %3244 = vmatprep.subr.bf16.mxu0 0
    %3245 = vmatpush1.bf16.xpose.msra.mxu0 0
    %3246 = vmatprep.subr.bf16.mxu0 0
    %3247 = vmatpush1.bf16.xpose.msra.mxu0 0
    %3248 = vmatprep.subr.bf16.mxu0 0
    %3249 = vmatpush1.bf16.xpose.msra.mxu0 0
    %3250 = vmatprep.subr.bf16.mxu0 0
    %3251 = vmatpush1.bf16.xpose.msra.mxu0 0
    %3252 = vmatprep.subr.bf16.mxu0 0
    %3253 = vmatpush1.bf16.xpose.msra.mxu0 0
    %3254 = vmatprep.subr.bf16.mxu0 0
    %3255 = vmatpush1.bf16.xpose.msra.mxu0 0
    %3256 = vmatprep.subr.bf16.mxu0 0
    %3257 = vmatpush1.bf16.xpose.msra.mxu0 0
    %3258 = vmatprep.mubr.bf16.mxu0 0
    %3259 = vmatmul.mubr.bf16.gmra.mrb[0].mxu0 %v2985
    %v3260 = vpop.f32.mrb[0].mxu0
    %v3261 = vadd.f32 0.0, %v3260
    %v3262 = vpop.f32.mrb[0].mxu0
    %v3263 = vpop.f32.mrb[0].mxu0
    %v3264 = vpop.f32.mrb[0].mxu0
    %3265 = vdwg.mxu0
    %3266 = vmatprep.subr.bf16.mxu0 0
    %3267 = vmatpush1.bf16.xpose.msra.mxu0 %v2913
    %3268 = vmatprep.subr.bf16.mxu0 0
    %3269 = vmatpush1.bf16.xpose.msra.mxu0 %v2914
    %3270 = vmatprep.subr.bf16.mxu0 0
    %3271 = vmatpush1.bf16.xpose.msra.mxu0 %v2915
    %3272 = vmatprep.subr.bf16.mxu0 0
    %3273 = vmatpush1.bf16.xpose.msra.mxu0 %v2916
    %3274 = vmatprep.subr.bf16.mxu0 0
    %3275 = vmatpush1.bf16.xpose.msra.mxu0 %v2917
    %3276 = vmatprep.subr.bf16.mxu0 0
    %3277 = vmatpush1.bf16.xpose.msra.mxu0 %v2918
    %3278 = vmatprep.subr.bf16.mxu0 0
    %3279 = vmatpush1.bf16.xpose.msra.mxu0 %v2919
    %3280 = vmatprep.subr.bf16.mxu0 0
    %3281 = vmatpush1.bf16.xpose.msra.mxu0 %v2920
    %3282 = vmatprep.subr.bf16.mxu0 0
    %3283 = vmatpush1.bf16.xpose.msra.mxu0 0
    %3284 = vmatprep.subr.bf16.mxu0 0
    %3285 = vmatpush1.bf16.xpose.msra.mxu0 0
    %3286 = vmatprep.subr.bf16.mxu0 0
    %3287 = vmatpush1.bf16.xpose.msra.mxu0 0
    %3288 = vmatprep.subr.bf16.mxu0 0
    %3289 = vmatpush1.bf16.xpose.msra.mxu0 0
    %3290 = vmatprep.subr.bf16.mxu0 0
    %3291 = vmatpush1.bf16.xpose.msra.mxu0 0
    %3292 = vmatprep.subr.bf16.mxu0 0
    %3293 = vmatpush1.bf16.xpose.msra.mxu0 0
    %3294 = vmatprep.subr.bf16.mxu0 0
    %3295 = vmatpush1.bf16.xpose.msra.mxu0 0
    %3296 = vmatprep.subr.bf16.mxu0 0
    %3297 = vmatpush1.bf16.xpose.msra.mxu0 0
    %3298 = vmatprep.mubr.bf16.mxu0 0
    %3299 = vmatmul.mubr.bf16.gmra.mrb[0].mxu0 %v2985
    %v3300 = vpop.f32.mrb[0].mxu0
    %v3301 = vadd.f32 0.0, %v3300
    %v3302 = vpop.f32.mrb[0].mxu0
    %v3303 = vpop.f32.mrb[0].mxu0
    %v3304 = vpop.f32.mrb[0].mxu0
    %3305 = vdwg.mxu0
    %3306 = vmatprep.subr.bf16.mxu0 0
    %3307 = vmatpush1.bf16.xpose.msra.mxu0 %v2921
    %3308 = vmatprep.subr.bf16.mxu0 0
    %3309 = vmatpush1.bf16.xpose.msra.mxu0 %v2922
    %3310 = vmatprep.subr.bf16.mxu0 0
    %3311 = vmatpush1.bf16.xpose.msra.mxu0 %v2923
    %3312 = vmatprep.subr.bf16.mxu0 0
    %3313 = vmatpush1.bf16.xpose.msra.mxu0 %v2924
    %3314 = vmatprep.subr.bf16.mxu0 0
    %3315 = vmatpush1.bf16.xpose.msra.mxu0 %v2925
    %3316 = vmatprep.subr.bf16.mxu0 0
    %3317 = vmatpush1.bf16.xpose.msra.mxu0 %v2926
    %3318 = vmatprep.subr.bf16.mxu0 0
    %3319 = vmatpush1.bf16.xpose.msra.mxu0 %v2927
    %3320 = vmatprep.subr.bf16.mxu0 0
    %3321 = vmatpush1.bf16.xpose.msra.mxu0 %v2928
    %3322 = vmatprep.subr.bf16.mxu0 0
    %3323 = vmatpush1.bf16.xpose.msra.mxu0 0
    %3324 = vmatprep.subr.bf16.mxu0 0
    %3325 = vmatpush1.bf16.xpose.msra.mxu0 0
    %3326 = vmatprep.subr.bf16.mxu0 0
    %3327 = vmatpush1.bf16.xpose.msra.mxu0 0
    %3328 = vmatprep.subr.bf16.mxu0 0
    %3329 = vmatpush1.bf16.xpose.msra.mxu0 0
    %3330 = vmatprep.subr.bf16.mxu0 0
    %3331 = vmatpush1.bf16.xpose.msra.mxu0 0
    %3332 = vmatprep.subr.bf16.mxu0 0
    %3333 = vmatpush1.bf16.xpose.msra.mxu0 0
    %3334 = vmatprep.subr.bf16.mxu0 0
    %3335 = vmatpush1.bf16.xpose.msra.mxu0 0
    %3336 = vmatprep.subr.bf16.mxu0 0
    %3337 = vmatpush1.bf16.xpose.msra.mxu0 0
    %3338 = vmatprep.mubr.bf16.mxu0 0
    %3339 = vmatmul.mubr.bf16.gmra.mrb[0].mxu0 %v2985
    %v3340 = vpop.f32.mrb[0].mxu0
    %v3341 = vadd.f32 0.0, %v3340
    %v3342 = vpop.f32.mrb[0].mxu0
    %v3343 = vpop.f32.mrb[0].mxu0
    %v3344 = vpop.f32.mrb[0].mxu0
    %3345 = vdwg.mxu0
    %3346 = vmatprep.subr.bf16.mxu0 0
    %3347 = vmatpush1.bf16.xpose.msra.mxu0 %v2929
    %3348 = vmatprep.subr.bf16.mxu0 0
    %3349 = vmatpush1.bf16.xpose.msra.mxu0 %v2930
    %3350 = vmatprep.subr.bf16.mxu0 0
    %3351 = vmatpush1.bf16.xpose.msra.mxu0 %v2931
    %3352 = vmatprep.subr.bf16.mxu0 0
    %3353 = vmatpush1.bf16.xpose.msra.mxu0 %v2932
    %3354 = vmatprep.subr.bf16.mxu0 0
    %3355 = vmatpush1.bf16.xpose.msra.mxu0 %v2933
    %3356 = vmatprep.subr.bf16.mxu0 0
    %3357 = vmatpush1.bf16.xpose.msra.mxu0 %v2934
    %3358 = vmatprep.subr.bf16.mxu0 0
    %3359 = vmatpush1.bf16.xpose.msra.mxu0 %v2935
    %3360 = vmatprep.subr.bf16.mxu0 0
    %3361 = vmatpush1.bf16.xpose.msra.mxu0 %v2936
    %3362 = vmatprep.subr.bf16.mxu0 0
    %3363 = vmatpush1.bf16.xpose.msra.mxu0 0
    %3364 = vmatprep.subr.bf16.mxu0 0
    %3365 = vmatpush1.bf16.xpose.msra.mxu0 0
    %3366 = vmatprep.subr.bf16.mxu0 0
    %3367 = vmatpush1.bf16.xpose.msra.mxu0 0
    %3368 = vmatprep.subr.bf16.mxu0 0
    %3369 = vmatpush1.bf16.xpose.msra.mxu0 0
    %3370 = vmatprep.subr.bf16.mxu0 0
    %3371 = vmatpush1.bf16.xpose.msra.mxu0 0
    %3372 = vmatprep.subr.bf16.mxu0 0
    %3373 = vmatpush1.bf16.xpose.msra.mxu0 0
    %3374 = vmatprep.subr.bf16.mxu0 0
    %3375 = vmatpush1.bf16.xpose.msra.mxu0 0
    %3376 = vmatprep.subr.bf16.mxu0 0
    %3377 = vmatpush1.bf16.xpose.msra.mxu0 0
    %3378 = vmatprep.mubr.bf16.mxu0 0
    %3379 = vmatmul.mubr.bf16.gmra.mrb[0].mxu0 %v2985
    %v3380 = vpop.f32.mrb[0].mxu0
    %v3381 = vadd.f32 0.0, %v3380
    %v3382 = vpop.f32.mrb[0].mxu0
    %v3383 = vpop.f32.mrb[0].mxu0
    %v3384 = vpop.f32.mrb[0].mxu0
    %3385 = vdwg.mxu0
    %3386 = vmatprep.subr.bf16.mxu0 0
    %3387 = vmatpush1.bf16.xpose.msra.mxu0 %v2937
    %3388 = vmatprep.subr.bf16.mxu0 0
    %3389 = vmatpush1.bf16.xpose.msra.mxu0 %v2938
    %3390 = vmatprep.subr.bf16.mxu0 0
    %3391 = vmatpush1.bf16.xpose.msra.mxu0 %v2939
    %3392 = vmatprep.subr.bf16.mxu0 0
    %3393 = vmatpush1.bf16.xpose.msra.mxu0 %v2940
    %3394 = vmatprep.subr.bf16.mxu0 0
    %3395 = vmatpush1.bf16.xpose.msra.mxu0 %v2941
    %3396 = vmatprep.subr.bf16.mxu0 0
    %3397 = vmatpush1.bf16.xpose.msra.mxu0 %v2942
    %3398 = vmatprep.subr.bf16.mxu0 0
    %3399 = vmatpush1.bf16.xpose.msra.mxu0 %v2943
    %3400 = vmatprep.subr.bf16.mxu0 0
    %3401 = vmatpush1.bf16.xpose.msra.mxu0 %v2944
    %3402 = vmatprep.subr.bf16.mxu0 0
    %3403 = vmatpush1.bf16.xpose.msra.mxu0 0
    %3404 = vmatprep.subr.bf16.mxu0 0
    %3405 = vmatpush1.bf16.xpose.msra.mxu0 0
    %3406 = vmatprep.subr.bf16.mxu0 0
    %3407 = vmatpush1.bf16.xpose.msra.mxu0 0
    %3408 = vmatprep.subr.bf16.mxu0 0
    %3409 = vmatpush1.bf16.xpose.msra.mxu0 0
    %3410 = vmatprep.subr.bf16.mxu0 0
    %3411 = vmatpush1.bf16.xpose.msra.mxu0 0
    %3412 = vmatprep.subr.bf16.mxu0 0
    %3413 = vmatpush1.bf16.xpose.msra.mxu0 0
    %3414 = vmatprep.subr.bf16.mxu0 0
    %3415 = vmatpush1.bf16.xpose.msra.mxu0 0
    %3416 = vmatprep.subr.bf16.mxu0 0
    %3417 = vmatpush1.bf16.xpose.msra.mxu0 0
    %3418 = vmatprep.mubr.bf16.mxu0 0
    %3419 = vmatmul.mubr.bf16.gmra.mrb[0].mxu0 %v2985
    %v3420 = vpop.f32.mrb[0].mxu0
    %v3421 = vadd.f32 0.0, %v3420
    %v3422 = vpop.f32.mrb[0].mxu0
    %v3423 = vpop.f32.mrb[0].mxu0
    %v3424 = vpop.f32.mrb[0].mxu0
    %3425 = vdwg.mxu0
    %3426 = vmatprep.subr.bf16.mxu0 0
    %3427 = vmatpush1.bf16.xpose.msra.mxu0 %v2945
    %3428 = vmatprep.subr.bf16.mxu0 0
    %3429 = vmatpush1.bf16.xpose.msra.mxu0 %v2946
    %3430 = vmatprep.subr.bf16.mxu0 0
    %3431 = vmatpush1.bf16.xpose.msra.mxu0 %v2947
    %3432 = vmatprep.subr.bf16.mxu0 0
    %3433 = vmatpush1.bf16.xpose.msra.mxu0 %v2948
    %3434 = vmatprep.subr.bf16.mxu0 0
    %3435 = vmatpush1.bf16.xpose.msra.mxu0 %v2949
    %3436 = vmatprep.subr.bf16.mxu0 0
    %3437 = vmatpush1.bf16.xpose.msra.mxu0 %v2950
    %3438 = vmatprep.subr.bf16.mxu0 0
    %3439 = vmatpush1.bf16.xpose.msra.mxu0 %v2951
    %3440 = vmatprep.subr.bf16.mxu0 0
    %3441 = vmatpush1.bf16.xpose.msra.mxu0 %v2952
    %3442 = vmatprep.subr.bf16.mxu0 0
    %3443 = vmatpush1.bf16.xpose.msra.mxu0 0
    %3444 = vmatprep.subr.bf16.mxu0 0
    %3445 = vmatpush1.bf16.xpose.msra.mxu0 0
    %3446 = vmatprep.subr.bf16.mxu0 0
    %3447 = vmatpush1.bf16.xpose.msra.mxu0 0
    %3448 = vmatprep.subr.bf16.mxu0 0
    %3449 = vmatpush1.bf16.xpose.msra.mxu0 0
    %3450 = vmatprep.subr.bf16.mxu0 0
    %3451 = vmatpush1.bf16.xpose.msra.mxu0 0
    %3452 = vmatprep.subr.bf16.mxu0 0
    %3453 = vmatpush1.bf16.xpose.msra.mxu0 0
    %3454 = vmatprep.subr.bf16.mxu0 0
    %3455 = vmatpush1.bf16.xpose.msra.mxu0 0
    %3456 = vmatprep.subr.bf16.mxu0 0
    %3457 = vmatpush1.bf16.xpose.msra.mxu0 0
    %3458 = vmatprep.mubr.bf16.mxu0 0
    %3459 = vmatmul.mubr.bf16.gmra.mrb[0].mxu0 %v2985
    %v3460 = vpop.f32.mrb[0].mxu0
    %v3461 = vadd.f32 0.0, %v3460
    %v3462 = vpop.f32.mrb[0].mxu0
    %v3463 = vpop.f32.mrb[0].mxu0
    %v3464 = vpop.f32.mrb[0].mxu0
    %3465 = vdwg.mxu0
    %3466 = vmatprep.subr.bf16.mxu0 0
    %3467 = vmatpush1.bf16.xpose.msra.mxu0 %v2953
    %3468 = vmatprep.subr.bf16.mxu0 0
    %3469 = vmatpush1.bf16.xpose.msra.mxu0 %v2954
    %3470 = vmatprep.subr.bf16.mxu0 0
    %3471 = vmatpush1.bf16.xpose.msra.mxu0 %v2955
    %3472 = vmatprep.subr.bf16.mxu0 0
    %3473 = vmatpush1.bf16.xpose.msra.mxu0 %v2956
    %3474 = vmatprep.subr.bf16.mxu0 0
    %3475 = vmatpush1.bf16.xpose.msra.mxu0 %v2957
    %3476 = vmatprep.subr.bf16.mxu0 0
    %3477 = vmatpush1.bf16.xpose.msra.mxu0 %v2958
    %3478 = vmatprep.subr.bf16.mxu0 0
    %3479 = vmatpush1.bf16.xpose.msra.mxu0 %v2959
    %3480 = vmatprep.subr.bf16.mxu0 0
    %3481 = vmatpush1.bf16.xpose.msra.mxu0 %v2960
    %3482 = vmatprep.subr.bf16.mxu0 0
    %3483 = vmatpush1.bf16.xpose.msra.mxu0 0
    %3484 = vmatprep.subr.bf16.mxu0 0
    %3485 = vmatpush1.bf16.xpose.msra.mxu0 0
    %3486 = vmatprep.subr.bf16.mxu0 0
    %3487 = vmatpush1.bf16.xpose.msra.mxu0 0
    %3488 = vmatprep.subr.bf16.mxu0 0
    %3489 = vmatpush1.bf16.xpose.msra.mxu0 0
    %3490 = vmatprep.subr.bf16.mxu0 0
    %3491 = vmatpush1.bf16.xpose.msra.mxu0 0
    %3492 = vmatprep.subr.bf16.mxu0 0
    %3493 = vmatpush1.bf16.xpose.msra.mxu0 0
    %3494 = vmatprep.subr.bf16.mxu0 0
    %3495 = vmatpush1.bf16.xpose.msra.mxu0 0
    %3496 = vmatprep.subr.bf16.mxu0 0
    %3497 = vmatpush1.bf16.xpose.msra.mxu0 0
    %3498 = vmatprep.mubr.bf16.mxu0 0
    %3499 = vmatmul.mubr.bf16.gmra.mrb[0].mxu0 %v2985
    %v3500 = vpop.f32.mrb[0].mxu0
    %v3501 = vadd.f32 0.0, %v3500
    %v3502 = vpop.f32.mrb[0].mxu0
    %v3503 = vpop.f32.mrb[0].mxu0
    %v3504 = vpop.f32.mrb[0].mxu0
    %3505 = vdwg.mxu0
    %3506 = vmatprep.subr.bf16.mxu0 0
    %3507 = vmatpush1.bf16.xpose.msra.mxu0 %v2961
    %3508 = vmatprep.subr.bf16.mxu0 0
    %3509 = vmatpush1.bf16.xpose.msra.mxu0 %v2962
    %3510 = vmatprep.subr.bf16.mxu0 0
    %3511 = vmatpush1.bf16.xpose.msra.mxu0 %v2963
    %3512 = vmatprep.subr.bf16.mxu0 0
    %3513 = vmatpush1.bf16.xpose.msra.mxu0 %v2964
    %3514 = vmatprep.subr.bf16.mxu0 0
    %3515 = vmatpush1.bf16.xpose.msra.mxu0 %v2965
    %3516 = vmatprep.subr.bf16.mxu0 0
    %3517 = vmatpush1.bf16.xpose.msra.mxu0 %v2966
    %3518 = vmatprep.subr.bf16.mxu0 0
    %3519 = vmatpush1.bf16.xpose.msra.mxu0 %v2967
    %3520 = vmatprep.subr.bf16.mxu0 0
    %3521 = vmatpush1.bf16.xpose.msra.mxu0 %v2968
    %3522 = vmatprep.subr.bf16.mxu0 0
    %3523 = vmatpush1.bf16.xpose.msra.mxu0 0
    %3524 = vmatprep.subr.bf16.mxu0 0
    %3525 = vmatpush1.bf16.xpose.msra.mxu0 0
    %3526 = vmatprep.subr.bf16.mxu0 0
    %3527 = vmatpush1.bf16.xpose.msra.mxu0 0
    %3528 = vmatprep.subr.bf16.mxu0 0
    %3529 = vmatpush1.bf16.xpose.msra.mxu0 0
    %3530 = vmatprep.subr.bf16.mxu0 0
    %3531 = vmatpush1.bf16.xpose.msra.mxu0 0
    %3532 = vmatprep.subr.bf16.mxu0 0
    %3533 = vmatpush1.bf16.xpose.msra.mxu0 0
    %3534 = vmatprep.subr.bf16.mxu0 0
    %3535 = vmatpush1.bf16.xpose.msra.mxu0 0
    %3536 = vmatprep.subr.bf16.mxu0 0
    %3537 = vmatpush1.bf16.xpose.msra.mxu0 0
    %3538 = vmatprep.mubr.bf16.mxu0 0
    %3539 = vmatmul.mubr.bf16.gmra.mrb[0].mxu0 %v2985
    %v3540 = vpop.f32.mrb[0].mxu0
    %v3541 = vadd.f32 0.0, %v3540
    %v3542 = vpop.f32.mrb[0].mxu0
    %v3543 = vpop.f32.mrb[0].mxu0
    %v3544 = vpop.f32.mrb[0].mxu0
    %3545 = vdwg.mxu0
    %3546 = vmatprep.subr.bf16.mxu0 0
    %3547 = vmatpush1.bf16.xpose.msra.mxu0 %v2969
    %3548 = vmatprep.subr.bf16.mxu0 0
    %3549 = vmatpush1.bf16.xpose.msra.mxu0 %v2970
    %3550 = vmatprep.subr.bf16.mxu0 0
    %3551 = vmatpush1.bf16.xpose.msra.mxu0 %v2971
    %3552 = vmatprep.subr.bf16.mxu0 0
    %3553 = vmatpush1.bf16.xpose.msra.mxu0 %v2972
    %3554 = vmatprep.subr.bf16.mxu0 0
    %3555 = vmatpush1.bf16.xpose.msra.mxu0 %v2973
    %3556 = vmatprep.subr.bf16.mxu0 0
    %3557 = vmatpush1.bf16.xpose.msra.mxu0 %v2974
    %3558 = vmatprep.subr.bf16.mxu0 0
    %3559 = vmatpush1.bf16.xpose.msra.mxu0 %v2975
    %3560 = vmatprep.subr.bf16.mxu0 0
    %3561 = vmatpush1.bf16.xpose.msra.mxu0 %v2976
    %3562 = vmatprep.subr.bf16.mxu0 0
    %3563 = vmatpush1.bf16.xpose.msra.mxu0 0
    %3564 = vmatprep.subr.bf16.mxu0 0
    %3565 = vmatpush1.bf16.xpose.msra.mxu0 0
    %3566 = vmatprep.subr.bf16.mxu0 0
    %3567 = vmatpush1.bf16.xpose.msra.mxu0 0
    %3568 = vmatprep.subr.bf16.mxu0 0
    %3569 = vmatpush1.bf16.xpose.msra.mxu0 0
    %3570 = vmatprep.subr.bf16.mxu0 0
    %3571 = vmatpush1.bf16.xpose.msra.mxu0 0
    %3572 = vmatprep.subr.bf16.mxu0 0
    %3573 = vmatpush1.bf16.xpose.msra.mxu0 0
    %3574 = vmatprep.subr.bf16.mxu0 0
    %3575 = vmatpush1.bf16.xpose.msra.mxu0 0
    %3576 = vmatprep.subr.bf16.mxu0 0
    %3577 = vmatpush1.bf16.xpose.msra.mxu0 0
    %3578 = vmatprep.mubr.bf16.mxu0 0
    %3579 = vmatmul.mubr.bf16.gmra.mrb[0].mxu0 %v2985
    %v3580 = vpop.f32.mrb[0].mxu0
    %v3581 = vadd.f32 0.0, %v3580
    %v3582 = vpop.f32.mrb[0].mxu0
    %v3583 = vpop.f32.mrb[0].mxu0
    %v3584 = vpop.f32.mrb[0].mxu0
    %3585 = vdwg.mxu0
    %3586 = vmatprep.subr.bf16.mxu0 0
    %3587 = vmatpush1.bf16.xpose.msra.mxu0 %v2977
    %3588 = vmatprep.subr.bf16.mxu0 0
    %3589 = vmatpush1.bf16.xpose.msra.mxu0 %v2978
    %3590 = vmatprep.subr.bf16.mxu0 0
    %3591 = vmatpush1.bf16.xpose.msra.mxu0 %v2979
    %3592 = vmatprep.subr.bf16.mxu0 0
    %3593 = vmatpush1.bf16.xpose.msra.mxu0 %v2980
    %3594 = vmatprep.subr.bf16.mxu0 0
    %3595 = vmatpush1.bf16.xpose.msra.mxu0 %v2981
    %3596 = vmatprep.subr.bf16.mxu0 0
    %3597 = vmatpush1.bf16.xpose.msra.mxu0 %v2982
    %3598 = vmatprep.subr.bf16.mxu0 0
    %3599 = vmatpush1.bf16.xpose.msra.mxu0 %v2983
    %3600 = vmatprep.subr.bf16.mxu0 0
    %3601 = vmatpush1.bf16.xpose.msra.mxu0 %v2984
    %3602 = vmatprep.subr.bf16.mxu0 0
    %3603 = vmatpush1.bf16.xpose.msra.mxu0 0
    %3604 = vmatprep.subr.bf16.mxu0 0
    %3605 = vmatpush1.bf16.xpose.msra.mxu0 0
    %3606 = vmatprep.subr.bf16.mxu0 0
    %3607 = vmatpush1.bf16.xpose.msra.mxu0 0
    %3608 = vmatprep.subr.bf16.mxu0 0
    %3609 = vmatpush1.bf16.xpose.msra.mxu0 0
    %3610 = vmatprep.subr.bf16.mxu0 0
    %3611 = vmatpush1.bf16.xpose.msra.mxu0 0
    %3612 = vmatprep.subr.bf16.mxu0 0
    %3613 = vmatpush1.bf16.xpose.msra.mxu0 0
    %3614 = vmatprep.subr.bf16.mxu0 0
    %3615 = vmatpush1.bf16.xpose.msra.mxu0 0
    %3616 = vmatprep.subr.bf16.mxu0 0
    %3617 = vmatpush1.bf16.xpose.msra.mxu0 0
    %3618 = vmatprep.mubr.bf16.mxu0 0
    %3619 = vmatmul.mubr.bf16.gmra.mrb[0].mxu0 %v2985
    %v3620 = vpop.f32.mrb[0].mxu0
    %v3621 = vadd.f32 0.0, %v3620
    %v3622 = vpop.f32.mrb[0].mxu0
    %v3623 = vpop.f32.mrb[0].mxu0
    %v3624 = vpop.f32.mrb[0].mxu0
    %3625 = vdwg.mxu0
    %vm3626 = vcmask 1040384
    %v3627 = vsel %vm3626, %v3021, -inf
    %3628 = vmax.xlane.f32.xlu0 %v3627
    %v3629 = vpop.xlane.xlu0 %3628
    %v3630 = vsel %vm3626, %v3061, -inf
    %3631 = vmax.xlane.f32.xlu0 %v3630
    %v3632 = vpop.xlane.xlu0 %3631
    %v3633 = vsel %vm3626, %v3101, -inf
    %3634 = vmax.xlane.f32.xlu0 %v3633
    %v3635 = vpop.xlane.xlu0 %3634
    %v3636 = vsel %vm3626, %v3141, -inf
    %3637 = vmax.xlane.f32.xlu0 %v3636
    %v3638 = vpop.xlane.xlu0 %3637
    %v3639 = vsel %vm3626, %v3181, -inf
    %3640 = vmax.xlane.f32.xlu0 %v3639
    %v3641 = vpop.xlane.xlu0 %3640
    %v3642 = vsel %vm3626, %v3221, -inf
    %3643 = vmax.xlane.f32.xlu0 %v3642
    %v3644 = vpop.xlane.xlu0 %3643
    %v3645 = vsel %vm3626, %v3261, -inf
    %3646 = vmax.xlane.f32.xlu0 %v3645
    %v3647 = vpop.xlane.xlu0 %3646
    %v3648 = vsel %vm3626, %v3301, -inf
    %3649 = vmax.xlane.f32.xlu0 %v3648
    %v3650 = vpop.xlane.xlu0 %3649
    %v3651 = vsel %vm3626, %v3341, -inf
    %3652 = vmax.xlane.f32.xlu0 %v3651
    %v3653 = vpop.xlane.xlu0 %3652
    %v3654 = vsel %vm3626, %v3381, -inf
    %3655 = vmax.xlane.f32.xlu0 %v3654
    %v3656 = vpop.xlane.xlu0 %3655
    %v3657 = vsel %vm3626, %v3421, -inf
    %3658 = vmax.xlane.f32.xlu0 %v3657
    %v3659 = vpop.xlane.xlu0 %3658
    %v3660 = vsel %vm3626, %v3461, -inf
    %3661 = vmax.xlane.f32.xlu0 %v3660
    %v3662 = vpop.xlane.xlu0 %3661
    %v3663 = vsel %vm3626, %v3501, -inf
    %3664 = vmax.xlane.f32.xlu0 %v3663
    %v3665 = vpop.xlane.xlu0 %3664
    %v3666 = vsel %vm3626, %v3541, -inf
    %3667 = vmax.xlane.f32.xlu0 %v3666
    %v3668 = vpop.xlane.xlu0 %3667
    %v3669 = vsel %vm3626, %v3581, -inf
    %3670 = vmax.xlane.f32.xlu0 %v3669
    %v3671 = vpop.xlane.xlu0 %3670
    %v3672 = vsel %vm3626, %v3621, -inf
    %3673 = vmax.xlane.f32.xlu0 %v3672
    %v3674 = vpop.xlane.xlu0 %3673
    %v3675 = vsub.f32 %v3021, %v3629
    %v3676 = vsub.f32 %v3061, %v3632
    %v3677 = vsub.f32 %v3101, %v3635
    %v3678 = vsub.f32 %v3141, %v3638
    %v3679 = vsub.f32 %v3181, %v3641
    %v3680 = vsub.f32 %v3221, %v3644
    %v3681 = vsub.f32 %v3261, %v3647
    %v3682 = vsub.f32 %v3301, %v3650
    %v3683 = vsub.f32 %v3341, %v3653
    %v3684 = vsub.f32 %v3381, %v3656
    %v3685 = vsub.f32 %v3421, %v3659
    %v3686 = vsub.f32 %v3461, %v3662
    %v3687 = vsub.f32 %v3501, %v3665
    %v3688 = vsub.f32 %v3541, %v3668
    %v3689 = vsub.f32 %v3581, %v3671
    %v3690 = vsub.f32 %v3621, %v3674
    %v3691 = vmul.f32 %v3675, 1.442695
    %v3692 = vpow.pop %v3691
    %v3693 = vmul.f32 %v3676, 1.442695
    %v3694 = vpow.pop %v3693
    %v3695 = vmul.f32 %v3677, 1.442695
    %v3696 = vpow.pop %v3695
    %v3697 = vmul.f32 %v3678, 1.442695
    %v3698 = vpow.pop %v3697
    %v3699 = vmul.f32 %v3679, 1.442695
    %v3700 = vpow.pop %v3699
    %v3701 = vmul.f32 %v3680, 1.442695
    %v3702 = vpow.pop %v3701
    %v3703 = vmul.f32 %v3681, 1.442695
    %v3704 = vpow.pop %v3703
    %v3705 = vmul.f32 %v3682, 1.442695
    %v3706 = vpow.pop %v3705
    %v3707 = vmul.f32 %v3683, 1.442695
    %v3708 = vpow.pop %v3707
    %v3709 = vmul.f32 %v3684, 1.442695
    %v3710 = vpow.pop %v3709
    %v3711 = vmul.f32 %v3685, 1.442695
    %v3712 = vpow.pop %v3711
    %v3713 = vmul.f32 %v3686, 1.442695
    %v3714 = vpow.pop %v3713
    %v3715 = vmul.f32 %v3687, 1.442695
    %v3716 = vpow.pop %v3715
    %v3717 = vmul.f32 %v3688, 1.442695
    %v3718 = vpow.pop %v3717
    %v3719 = vmul.f32 %v3689, 1.442695
    %v3720 = vpow.pop %v3719
    %v3721 = vmul.f32 %v3690, 1.442695
    %v3722 = vpow.pop %v3721
    %v3723 = vsel %vm3626, %v3692, 0.0
    %3724 = vadd.xlane.f32.xlu0 %v3723
    %v3725 = vpop.xlane.xlu0 %3724
    %v3726 = vsel %vm3626, %v3694, 0.0
    %3727 = vadd.xlane.f32.xlu0 %v3726
    %v3728 = vpop.xlane.xlu0 %3727
    %v3729 = vsel %vm3626, %v3696, 0.0
    %3730 = vadd.xlane.f32.xlu0 %v3729
    %v3731 = vpop.xlane.xlu0 %3730
    %v3732 = vsel %vm3626, %v3698, 0.0
    %3733 = vadd.xlane.f32.xlu0 %v3732
    %v3734 = vpop.xlane.xlu0 %3733
    %v3735 = vsel %vm3626, %v3700, 0.0
    %3736 = vadd.xlane.f32.xlu0 %v3735
    %v3737 = vpop.xlane.xlu0 %3736
    %v3738 = vsel %vm3626, %v3702, 0.0
    %3739 = vadd.xlane.f32.xlu0 %v3738
    %v3740 = vpop.xlane.xlu0 %3739
    %v3741 = vsel %vm3626, %v3704, 0.0
    %3742 = vadd.xlane.f32.xlu0 %v3741
    %v3743 = vpop.xlane.xlu0 %3742
    %v3744 = vsel %vm3626, %v3706, 0.0
    %3745 = vadd.xlane.f32.xlu0 %v3744
    %v3746 = vpop.xlane.xlu0 %3745
    %v3747 = vsel %vm3626, %v3708, 0.0
    %3748 = vadd.xlane.f32.xlu0 %v3747
    %v3749 = vpop.xlane.xlu0 %3748
    %v3750 = vsel %vm3626, %v3710, 0.0
    %3751 = vadd.xlane.f32.xlu0 %v3750
    %v3752 = vpop.xlane.xlu0 %3751
    %v3753 = vsel %vm3626, %v3712, 0.0
    %3754 = vadd.xlane.f32.xlu0 %v3753
    %v3755 = vpop.xlane.xlu0 %3754
    %v3756 = vsel %vm3626, %v3714, 0.0
    %3757 = vadd.xlane.f32.xlu0 %v3756
    %v3758 = vpop.xlane.xlu0 %3757
    %v3759 = vsel %vm3626, %v3716, 0.0
    %3760 = vadd.xlane.f32.xlu0 %v3759
    %v3761 = vpop.xlane.xlu0 %3760
    %v3762 = vsel %vm3626, %v3718, 0.0
    %3763 = vadd.xlane.f32.xlu0 %v3762
    %v3764 = vpop.xlane.xlu0 %3763
    %v3765 = vsel %vm3626, %v3720, 0.0
    %3766 = vadd.xlane.f32.xlu0 %v3765
    %v3767 = vpop.xlane.xlu0 %3766
    %v3768 = vsel %vm3626, %v3722, 0.0
    %3769 = vadd.xlane.f32.xlu0 %v3768
    %v3770 = vpop.xlane.xlu0 %3769
    %v3771 = vrcp.pop %v3725
    %v3772 = vmul.f32 %v3692, %v3771
    %v3773 = vrcp.pop %v3728
    %v3774 = vmul.f32 %v3694, %v3773
    %v3775 = vrcp.pop %v3731
    %v3776 = vmul.f32 %v3696, %v3775
    %v3777 = vrcp.pop %v3734
    %v3778 = vmul.f32 %v3698, %v3777
    %v3779 = vrcp.pop %v3737
    %v3780 = vmul.f32 %v3700, %v3779
    %v3781 = vrcp.pop %v3740
    %v3782 = vmul.f32 %v3702, %v3781
    %v3783 = vrcp.pop %v3743
    %v3784 = vmul.f32 %v3704, %v3783
    %v3785 = vrcp.pop %v3746
    %v3786 = vmul.f32 %v3706, %v3785
    %v3787 = vrcp.pop %v3749
    %v3788 = vmul.f32 %v3708, %v3787
    %v3789 = vrcp.pop %v3752
    %v3790 = vmul.f32 %v3710, %v3789
    %v3791 = vrcp.pop %v3755
    %v3792 = vmul.f32 %v3712, %v3791
    %v3793 = vrcp.pop %v3758
    %v3794 = vmul.f32 %v3714, %v3793
    %v3795 = vrcp.pop %v3761
    %v3796 = vmul.f32 %v3716, %v3795
    %v3797 = vrcp.pop %v3764
    %v3798 = vmul.f32 %v3718, %v3797
    %v3799 = vrcp.pop %v3767
    %v3800 = vmul.f32 %v3720, %v3799
    %v3801 = vrcp.pop %v3770
    %v3802 = vmul.f32 %v3722, %v3801
    %3803 = vst [vmem:[#allocation4] sm:$0x1] %v3772
    %3804 = vst [vmem:[#allocation4 + $0x1] sm:$0x1] %v3774
    %3805 = vst [vmem:[#allocation4 + $0x2] sm:$0x1] %v3776
    %3806 = vst [vmem:[#allocation4 + $0x3] sm:$0x1] %v3778
    %3807 = vst [vmem:[#allocation4 + $0x4] sm:$0x1] %v3780
    %3808 = vst [vmem:[#allocation4 + $0x5] sm:$0x1] %v3782
    %3809 = vst [vmem:[#allocation4 + $0x6] sm:$0x1] %v3784
    %3810 = vst [vmem:[#allocation4 + $0x7] sm:$0x1] %v3786
    %3811 = vst [vmem:[#allocation4 + $0x8] sm:$0x1] %v3788
    %3812 = vst [vmem:[#allocation4 + $0x9] sm:$0x1] %v3790
    %3813 = vst [vmem:[#allocation4 + $0xa] sm:$0x1] %v3792
    %3814 = vst [vmem:[#allocation4 + $0xb] sm:$0x1] %v3794
    %3815 = vst [vmem:[#allocation4 + $0xc] sm:$0x1] %v3796
    %3816 = vst [vmem:[#allocation4 + $0xd] sm:$0x1] %v3798
    %3817 = vst [vmem:[#allocation4 + $0xe] sm:$0x1] %v3800
    %3818 = vst [vmem:[#allocation4 + $0xf] sm:$0x1] %v3802
    %v3819 = vpack.c.bf16 %v3772, %v3772
    %v3820 = vpack.c.bf16 %v3774, %v3774
    %v3821 = vpack.c.bf16 %v3776, %v3776
    %v3822 = vpack.c.bf16 %v3778, %v3778
    %v3823 = vpack.c.bf16 %v3780, %v3780
    %v3824 = vpack.c.bf16 %v3782, %v3782
    %v3825 = vpack.c.bf16 %v3784, %v3784
    %v3826 = vpack.c.bf16 %v3786, %v3786
    %v3827 = vpack.c.bf16 %v3788, %v3788
    %v3828 = vpack.c.bf16 %v3790, %v3790
    %v3829 = vpack.c.bf16 %v3792, %v3792
    %v3830 = vpack.c.bf16 %v3794, %v3794
    %v3831 = vpack.c.bf16 %v3796, %v3796
    %v3832 = vpack.c.bf16 %v3798, %v3798
    %v3833 = vpack.c.bf16 %v3800, %v3800
    %v3834 = vpack.c.bf16 %v3802, %v3802
    %3835 = vmatprep.subr.bf16.mxu0 0
    %3836 = vmatpush1.bf16.msra.mxu0 %v814
    %3837 = vmatprep.subr.bf16.mxu0 0
    %3838 = vmatpush1.bf16.msra.mxu0 %v815
    %3839 = vmatprep.subr.bf16.mxu0 0
    %3840 = vmatpush1.bf16.msra.mxu0 %v816
    %3841 = vmatprep.subr.bf16.mxu0 0
    %3842 = vmatpush1.bf16.msra.mxu0 %v817
    %3843 = vmatprep.subr.bf16.mxu0 0
    %3844 = vmatpush1.bf16.msra.mxu0 %v818
    %3845 = vmatprep.subr.bf16.mxu0 0
    %3846 = vmatpush1.bf16.msra.mxu0 %v819
    %3847 = vmatprep.subr.bf16.mxu0 0
    %3848 = vmatpush1.bf16.msra.mxu0 %v820
    %3849 = vmatprep.subr.bf16.mxu0 0
    %3850 = vmatpush1.bf16.msra.mxu0 %v821
    %3851 = vmatprep.subr.bf16.mxu0 0
    %3852 = vmatpush1.bf16.msra.mxu0 0
    %3853 = vmatprep.subr.bf16.mxu0 0
    %3854 = vmatpush1.bf16.msra.mxu0 0
    %3855 = vmatprep.subr.bf16.mxu0 0
    %3856 = vmatpush1.bf16.msra.mxu0 0
    %3857 = vmatprep.subr.bf16.mxu0 0
    %3858 = vmatpush1.bf16.msra.mxu0 0
    %3859 = vmatprep.subr.bf16.mxu0 0
    %3860 = vmatpush1.bf16.msra.mxu0 0
    %3861 = vmatprep.subr.bf16.mxu0 0
    %3862 = vmatpush1.bf16.msra.mxu0 0
    %3863 = vmatprep.subr.bf16.mxu0 0
    %3864 = vmatpush1.bf16.msra.mxu0 0
    %3865 = vmatprep.subr.bf16.mxu0 0
    %3866 = vmatpush1.bf16.msra.mxu0 0
    %3867 = vmatprep.mubr.bf16.mxu0 0
    %3868 = vmatmul.mubr.bf16.gmra.mrb[0].mxu0 %v3819
    %v3869 = vpop.f32.mrb[0].mxu0
    %v3870 = vadd.f32 0.0, %v3869
    %v3871 = vpop.f32.mrb[0].mxu0
    %v3872 = vpop.f32.mrb[0].mxu0
    %v3873 = vpop.f32.mrb[0].mxu0
    %3874 = vdwg.mxu0
    %3875 = vmatprep.subr.bf16.mxu0 0
    %3876 = vmatpush1.bf16.msra.mxu0 %v822
    %3877 = vmatprep.subr.bf16.mxu0 0
    %3878 = vmatpush1.bf16.msra.mxu0 %v823
    %3879 = vmatprep.subr.bf16.mxu0 0
    %3880 = vmatpush1.bf16.msra.mxu0 %v824
    %3881 = vmatprep.subr.bf16.mxu0 0
    %3882 = vmatpush1.bf16.msra.mxu0 %v825
    %3883 = vmatprep.subr.bf16.mxu0 0
    %3884 = vmatpush1.bf16.msra.mxu0 %v826
    %3885 = vmatprep.subr.bf16.mxu0 0
    %3886 = vmatpush1.bf16.msra.mxu0 %v827
    %3887 = vmatprep.subr.bf16.mxu0 0
    %3888 = vmatpush1.bf16.msra.mxu0 %v828
    %3889 = vmatprep.subr.bf16.mxu0 0
    %3890 = vmatpush1.bf16.msra.mxu0 %v829
    %3891 = vmatprep.subr.bf16.mxu0 0
    %3892 = vmatpush1.bf16.msra.mxu0 0
    %3893 = vmatprep.subr.bf16.mxu0 0
    %3894 = vmatpush1.bf16.msra.mxu0 0
    %3895 = vmatprep.subr.bf16.mxu0 0
    %3896 = vmatpush1.bf16.msra.mxu0 0
    %3897 = vmatprep.subr.bf16.mxu0 0
    %3898 = vmatpush1.bf16.msra.mxu0 0
    %3899 = vmatprep.subr.bf16.mxu0 0
    %3900 = vmatpush1.bf16.msra.mxu0 0
    %3901 = vmatprep.subr.bf16.mxu0 0
    %3902 = vmatpush1.bf16.msra.mxu0 0
    %3903 = vmatprep.subr.bf16.mxu0 0
    %3904 = vmatpush1.bf16.msra.mxu0 0
    %3905 = vmatprep.subr.bf16.mxu0 0
    %3906 = vmatpush1.bf16.msra.mxu0 0
    %3907 = vmatprep.mubr.bf16.mxu0 0
    %3908 = vmatmul.mubr.bf16.gmra.mrb[0].mxu0 %v3820
    %v3909 = vpop.f32.mrb[0].mxu0
    %v3910 = vadd.f32 0.0, %v3909
    %v3911 = vpop.f32.mrb[0].mxu0
    %v3912 = vpop.f32.mrb[0].mxu0
    %v3913 = vpop.f32.mrb[0].mxu0
    %3914 = vdwg.mxu0
    %3915 = vmatprep.subr.bf16.mxu0 0
    %3916 = vmatpush1.bf16.msra.mxu0 %v830
    %3917 = vmatprep.subr.bf16.mxu0 0
    %3918 = vmatpush1.bf16.msra.mxu0 %v831
    %3919 = vmatprep.subr.bf16.mxu0 0
    %3920 = vmatpush1.bf16.msra.mxu0 %v832
    %3921 = vmatprep.subr.bf16.mxu0 0
    %3922 = vmatpush1.bf16.msra.mxu0 %v833
    %3923 = vmatprep.subr.bf16.mxu0 0
    %3924 = vmatpush1.bf16.msra.mxu0 %v834
    %3925 = vmatprep.subr.bf16.mxu0 0
    %3926 = vmatpush1.bf16.msra.mxu0 %v835
    %3927 = vmatprep.subr.bf16.mxu0 0
    %3928 = vmatpush1.bf16.msra.mxu0 %v836
    %3929 = vmatprep.subr.bf16.mxu0 0
    %3930 = vmatpush1.bf16.msra.mxu0 %v837
    %3931 = vmatprep.subr.bf16.mxu0 0
    %3932 = vmatpush1.bf16.msra.mxu0 0
    %3933 = vmatprep.subr.bf16.mxu0 0
    %3934 = vmatpush1.bf16.msra.mxu0 0
    %3935 = vmatprep.subr.bf16.mxu0 0
    %3936 = vmatpush1.bf16.msra.mxu0 0
    %3937 = vmatprep.subr.bf16.mxu0 0
    %3938 = vmatpush1.bf16.msra.mxu0 0
    %3939 = vmatprep.subr.bf16.mxu0 0
    %3940 = vmatpush1.bf16.msra.mxu0 0
    %3941 = vmatprep.subr.bf16.mxu0 0
    %3942 = vmatpush1.bf16.msra.mxu0 0
    %3943 = vmatprep.subr.bf16.mxu0 0
    %3944 = vmatpush1.bf16.msra.mxu0 0
    %3945 = vmatprep.subr.bf16.mxu0 0
    %3946 = vmatpush1.bf16.msra.mxu0 0
    %3947 = vmatprep.mubr.bf16.mxu0 0
    %3948 = vmatmul.mubr.bf16.gmra.mrb[0].mxu0 %v3821
    %v3949 = vpop.f32.mrb[0].mxu0
    %v3950 = vadd.f32 0.0, %v3949
    %v3951 = vpop.f32.mrb[0].mxu0
    %v3952 = vpop.f32.mrb[0].mxu0
    %v3953 = vpop.f32.mrb[0].mxu0
    %3954 = vdwg.mxu0
    %3955 = vmatprep.subr.bf16.mxu0 0
    %3956 = vmatpush1.bf16.msra.mxu0 %v838
    %3957 = vmatprep.subr.bf16.mxu0 0
    %3958 = vmatpush1.bf16.msra.mxu0 %v839
    %3959 = vmatprep.subr.bf16.mxu0 0
    %3960 = vmatpush1.bf16.msra.mxu0 %v840
    %3961 = vmatprep.subr.bf16.mxu0 0
    %3962 = vmatpush1.bf16.msra.mxu0 %v841
    %3963 = vmatprep.subr.bf16.mxu0 0
    %3964 = vmatpush1.bf16.msra.mxu0 %v842
    %3965 = vmatprep.subr.bf16.mxu0 0
    %3966 = vmatpush1.bf16.msra.mxu0 %v843
    %3967 = vmatprep.subr.bf16.mxu0 0
    %3968 = vmatpush1.bf16.msra.mxu0 %v844
    %3969 = vmatprep.subr.bf16.mxu0 0
    %3970 = vmatpush1.bf16.msra.mxu0 %v845
    %3971 = vmatprep.subr.bf16.mxu0 0
    %3972 = vmatpush1.bf16.msra.mxu0 0
    %3973 = vmatprep.subr.bf16.mxu0 0
    %3974 = vmatpush1.bf16.msra.mxu0 0
    %3975 = vmatprep.subr.bf16.mxu0 0
    %3976 = vmatpush1.bf16.msra.mxu0 0
    %3977 = vmatprep.subr.bf16.mxu0 0
    %3978 = vmatpush1.bf16.msra.mxu0 0
    %3979 = vmatprep.subr.bf16.mxu0 0
    %3980 = vmatpush1.bf16.msra.mxu0 0
    %3981 = vmatprep.subr.bf16.mxu0 0
    %3982 = vmatpush1.bf16.msra.mxu0 0
    %3983 = vmatprep.subr.bf16.mxu0 0
    %3984 = vmatpush1.bf16.msra.mxu0 0
    %3985 = vmatprep.subr.bf16.mxu0 0
    %3986 = vmatpush1.bf16.msra.mxu0 0
    %3987 = vmatprep.mubr.bf16.mxu0 0
    %3988 = vmatmul.mubr.bf16.gmra.mrb[0].mxu0 %v3822
    %v3989 = vpop.f32.mrb[0].mxu0
    %v3990 = vadd.f32 0.0, %v3989
    %v3991 = vpop.f32.mrb[0].mxu0
    %v3992 = vpop.f32.mrb[0].mxu0
    %v3993 = vpop.f32.mrb[0].mxu0
    %3994 = vdwg.mxu0
    %3995 = vmatprep.subr.bf16.mxu0 0
    %3996 = vmatpush1.bf16.msra.mxu0 %v846
    %3997 = vmatprep.subr.bf16.mxu0 0
    %3998 = vmatpush1.bf16.msra.mxu0 %v847
    %3999 = vmatprep.subr.bf16.mxu0 0
    %4000 = vmatpush1.bf16.msra.mxu0 %v848
    %4001 = vmatprep.subr.bf16.mxu0 0
    %4002 = vmatpush1.bf16.msra.mxu0 %v849
    %4003 = vmatprep.subr.bf16.mxu0 0
    %4004 = vmatpush1.bf16.msra.mxu0 %v850
    %4005 = vmatprep.subr.bf16.mxu0 0
    %4006 = vmatpush1.bf16.msra.mxu0 %v851
    %4007 = vmatprep.subr.bf16.mxu0 0
    %4008 = vmatpush1.bf16.msra.mxu0 %v852
    %4009 = vmatprep.subr.bf16.mxu0 0
    %4010 = vmatpush1.bf16.msra.mxu0 %v853
    %4011 = vmatprep.subr.bf16.mxu0 0
    %4012 = vmatpush1.bf16.msra.mxu0 0
    %4013 = vmatprep.subr.bf16.mxu0 0
    %4014 = vmatpush1.bf16.msra.mxu0 0
    %4015 = vmatprep.subr.bf16.mxu0 0
    %4016 = vmatpush1.bf16.msra.mxu0 0
    %4017 = vmatprep.subr.bf16.mxu0 0
    %4018 = vmatpush1.bf16.msra.mxu0 0
    %4019 = vmatprep.subr.bf16.mxu0 0
    %4020 = vmatpush1.bf16.msra.mxu0 0
    %4021 = vmatprep.subr.bf16.mxu0 0
    %4022 = vmatpush1.bf16.msra.mxu0 0
    %4023 = vmatprep.subr.bf16.mxu0 0
    %4024 = vmatpush1.bf16.msra.mxu0 0
    %4025 = vmatprep.subr.bf16.mxu0 0
    %4026 = vmatpush1.bf16.msra.mxu0 0
    %4027 = vmatprep.mubr.bf16.mxu0 0
    %4028 = vmatmul.mubr.bf16.gmra.mrb[0].mxu0 %v3823
    %v4029 = vpop.f32.mrb[0].mxu0
    %v4030 = vadd.f32 0.0, %v4029
    %v4031 = vpop.f32.mrb[0].mxu0
    %v4032 = vpop.f32.mrb[0].mxu0
    %v4033 = vpop.f32.mrb[0].mxu0
    %4034 = vdwg.mxu0
    %4035 = vmatprep.subr.bf16.mxu0 0
    %4036 = vmatpush1.bf16.msra.mxu0 %v854
    %4037 = vmatprep.subr.bf16.mxu0 0
    %4038 = vmatpush1.bf16.msra.mxu0 %v855
    %4039 = vmatprep.subr.bf16.mxu0 0
    %4040 = vmatpush1.bf16.msra.mxu0 %v856
    %4041 = vmatprep.subr.bf16.mxu0 0
    %4042 = vmatpush1.bf16.msra.mxu0 %v857
    %4043 = vmatprep.subr.bf16.mxu0 0
    %4044 = vmatpush1.bf16.msra.mxu0 %v858
    %4045 = vmatprep.subr.bf16.mxu0 0
    %4046 = vmatpush1.bf16.msra.mxu0 %v859
    %4047 = vmatprep.subr.bf16.mxu0 0
    %4048 = vmatpush1.bf16.msra.mxu0 %v860
    %4049 = vmatprep.subr.bf16.mxu0 0
    %4050 = vmatpush1.bf16.msra.mxu0 %v861
    %4051 = vmatprep.subr.bf16.mxu0 0
    %4052 = vmatpush1.bf16.msra.mxu0 0
    %4053 = vmatprep.subr.bf16.mxu0 0
    %4054 = vmatpush1.bf16.msra.mxu0 0
    %4055 = vmatprep.subr.bf16.mxu0 0
    %4056 = vmatpush1.bf16.msra.mxu0 0
    %4057 = vmatprep.subr.bf16.mxu0 0
    %4058 = vmatpush1.bf16.msra.mxu0 0
    %4059 = vmatprep.subr.bf16.mxu0 0
    %4060 = vmatpush1.bf16.msra.mxu0 0
    %4061 = vmatprep.subr.bf16.mxu0 0
    %4062 = vmatpush1.bf16.msra.mxu0 0
    %4063 = vmatprep.subr.bf16.mxu0 0
    %4064 = vmatpush1.bf16.msra.mxu0 0
    %4065 = vmatprep.subr.bf16.mxu0 0
    %4066 = vmatpush1.bf16.msra.mxu0 0
    %4067 = vmatprep.mubr.bf16.mxu0 0
    %4068 = vmatmul.mubr.bf16.gmra.mrb[0].mxu0 %v3824
    %v4069 = vpop.f32.mrb[0].mxu0
    %v4070 = vadd.f32 0.0, %v4069
    %v4071 = vpop.f32.mrb[0].mxu0
    %v4072 = vpop.f32.mrb[0].mxu0
    %v4073 = vpop.f32.mrb[0].mxu0
    %4074 = vdwg.mxu0
    %4075 = vmatprep.subr.bf16.mxu0 0
    %4076 = vmatpush1.bf16.msra.mxu0 %v862
    %4077 = vmatprep.subr.bf16.mxu0 0
    %4078 = vmatpush1.bf16.msra.mxu0 %v863
    %4079 = vmatprep.subr.bf16.mxu0 0
    %4080 = vmatpush1.bf16.msra.mxu0 %v864
    %4081 = vmatprep.subr.bf16.mxu0 0
    %4082 = vmatpush1.bf16.msra.mxu0 %v865
    %4083 = vmatprep.subr.bf16.mxu0 0
    %4084 = vmatpush1.bf16.msra.mxu0 %v866
    %4085 = vmatprep.subr.bf16.mxu0 0
    %4086 = vmatpush1.bf16.msra.mxu0 %v867
    %4087 = vmatprep.subr.bf16.mxu0 0
    %4088 = vmatpush1.bf16.msra.mxu0 %v868
    %4089 = vmatprep.subr.bf16.mxu0 0
    %4090 = vmatpush1.bf16.msra.mxu0 %v869
    %4091 = vmatprep.subr.bf16.mxu0 0
    %4092 = vmatpush1.bf16.msra.mxu0 0
    %4093 = vmatprep.subr.bf16.mxu0 0
    %4094 = vmatpush1.bf16.msra.mxu0 0
    %4095 = vmatprep.subr.bf16.mxu0 0
    %4096 = vmatpush1.bf16.msra.mxu0 0
    %4097 = vmatprep.subr.bf16.mxu0 0
    %4098 = vmatpush1.bf16.msra.mxu0 0
    %4099 = vmatprep.subr.bf16.mxu0 0
    %4100 = vmatpush1.bf16.msra.mxu0 0
    %4101 = vmatprep.subr.bf16.mxu0 0
    %4102 = vmatpush1.bf16.msra.mxu0 0
    %4103 = vmatprep.subr.bf16.mxu0 0
    %4104 = vmatpush1.bf16.msra.mxu0 0
    %4105 = vmatprep.subr.bf16.mxu0 0
    %4106 = vmatpush1.bf16.msra.mxu0 0
    %4107 = vmatprep.mubr.bf16.mxu0 0
    %4108 = vmatmul.mubr.bf16.gmra.mrb[0].mxu0 %v3825
    %v4109 = vpop.f32.mrb[0].mxu0
    %v4110 = vadd.f32 0.0, %v4109
    %v4111 = vpop.f32.mrb[0].mxu0
    %v4112 = vpop.f32.mrb[0].mxu0
    %v4113 = vpop.f32.mrb[0].mxu0
    %4114 = vdwg.mxu0
    %4115 = vmatprep.subr.bf16.mxu0 0
    %4116 = vmatpush1.bf16.msra.mxu0 %v870
    %4117 = vmatprep.subr.bf16.mxu0 0
    %4118 = vmatpush1.bf16.msra.mxu0 %v871
    %4119 = vmatprep.subr.bf16.mxu0 0
    %4120 = vmatpush1.bf16.msra.mxu0 %v872
    %4121 = vmatprep.subr.bf16.mxu0 0
    %4122 = vmatpush1.bf16.msra.mxu0 %v873
    %4123 = vmatprep.subr.bf16.mxu0 0
    %4124 = vmatpush1.bf16.msra.mxu0 %v874
    %4125 = vmatprep.subr.bf16.mxu0 0
    %4126 = vmatpush1.bf16.msra.mxu0 %v875
    %4127 = vmatprep.subr.bf16.mxu0 0
    %4128 = vmatpush1.bf16.msra.mxu0 %v876
    %4129 = vmatprep.subr.bf16.mxu0 0
    %4130 = vmatpush1.bf16.msra.mxu0 %v877
    %4131 = vmatprep.subr.bf16.mxu0 0
    %4132 = vmatpush1.bf16.msra.mxu0 0
    %4133 = vmatprep.subr.bf16.mxu0 0
    %4134 = vmatpush1.bf16.msra.mxu0 0
    %4135 = vmatprep.subr.bf16.mxu0 0
    %4136 = vmatpush1.bf16.msra.mxu0 0
    %4137 = vmatprep.subr.bf16.mxu0 0
    %4138 = vmatpush1.bf16.msra.mxu0 0
    %4139 = vmatprep.subr.bf16.mxu0 0
    %4140 = vmatpush1.bf16.msra.mxu0 0
    %4141 = vmatprep.subr.bf16.mxu0 0
    %4142 = vmatpush1.bf16.msra.mxu0 0
    %4143 = vmatprep.subr.bf16.mxu0 0
    %4144 = vmatpush1.bf16.msra.mxu0 0
    %4145 = vmatprep.subr.bf16.mxu0 0
    %4146 = vmatpush1.bf16.msra.mxu0 0
    %4147 = vmatprep.mubr.bf16.mxu0 0
    %4148 = vmatmul.mubr.bf16.gmra.mrb[0].mxu0 %v3826
    %v4149 = vpop.f32.mrb[0].mxu0
    %v4150 = vadd.f32 0.0, %v4149
    %v4151 = vpop.f32.mrb[0].mxu0
    %v4152 = vpop.f32.mrb[0].mxu0
    %v4153 = vpop.f32.mrb[0].mxu0
    %4154 = vdwg.mxu0
    %4155 = vmatprep.subr.bf16.mxu0 0
    %4156 = vmatpush1.bf16.msra.mxu0 %v878
    %4157 = vmatprep.subr.bf16.mxu0 0
    %4158 = vmatpush1.bf16.msra.mxu0 %v879
    %4159 = vmatprep.subr.bf16.mxu0 0
    %4160 = vmatpush1.bf16.msra.mxu0 %v880
    %4161 = vmatprep.subr.bf16.mxu0 0
    %4162 = vmatpush1.bf16.msra.mxu0 %v881
    %4163 = vmatprep.subr.bf16.mxu0 0
    %4164 = vmatpush1.bf16.msra.mxu0 %v882
    %4165 = vmatprep.subr.bf16.mxu0 0
    %4166 = vmatpush1.bf16.msra.mxu0 %v883
    %4167 = vmatprep.subr.bf16.mxu0 0
    %4168 = vmatpush1.bf16.msra.mxu0 %v884
    %4169 = vmatprep.subr.bf16.mxu0 0
    %4170 = vmatpush1.bf16.msra.mxu0 %v885
    %4171 = vmatprep.subr.bf16.mxu0 0
    %4172 = vmatpush1.bf16.msra.mxu0 0
    %4173 = vmatprep.subr.bf16.mxu0 0
    %4174 = vmatpush1.bf16.msra.mxu0 0
    %4175 = vmatprep.subr.bf16.mxu0 0
    %4176 = vmatpush1.bf16.msra.mxu0 0
    %4177 = vmatprep.subr.bf16.mxu0 0
    %4178 = vmatpush1.bf16.msra.mxu0 0
    %4179 = vmatprep.subr.bf16.mxu0 0
    %4180 = vmatpush1.bf16.msra.mxu0 0
    %4181 = vmatprep.subr.bf16.mxu0 0
    %4182 = vmatpush1.bf16.msra.mxu0 0
    %4183 = vmatprep.subr.bf16.mxu0 0
    %4184 = vmatpush1.bf16.msra.mxu0 0
    %4185 = vmatprep.subr.bf16.mxu0 0
    %4186 = vmatpush1.bf16.msra.mxu0 0
    %4187 = vmatprep.mubr.bf16.mxu0 0
    %4188 = vmatmul.mubr.bf16.gmra.mrb[0].mxu0 %v3827
    %v4189 = vpop.f32.mrb[0].mxu0
    %v4190 = vadd.f32 0.0, %v4189
    %v4191 = vpop.f32.mrb[0].mxu0
    %v4192 = vpop.f32.mrb[0].mxu0
    %v4193 = vpop.f32.mrb[0].mxu0
    %4194 = vdwg.mxu0
    %4195 = vmatprep.subr.bf16.mxu0 0
    %4196 = vmatpush1.bf16.msra.mxu0 %v886
    %4197 = vmatprep.subr.bf16.mxu0 0
    %4198 = vmatpush1.bf16.msra.mxu0 %v887
    %4199 = vmatprep.subr.bf16.mxu0 0
    %4200 = vmatpush1.bf16.msra.mxu0 %v888
    %4201 = vmatprep.subr.bf16.mxu0 0
    %4202 = vmatpush1.bf16.msra.mxu0 %v889
    %4203 = vmatprep.subr.bf16.mxu0 0
    %4204 = vmatpush1.bf16.msra.mxu0 %v890
    %4205 = vmatprep.subr.bf16.mxu0 0
    %4206 = vmatpush1.bf16.msra.mxu0 %v891
    %4207 = vmatprep.subr.bf16.mxu0 0
    %4208 = vmatpush1.bf16.msra.mxu0 %v892
    %4209 = vmatprep.subr.bf16.mxu0 0
    %4210 = vmatpush1.bf16.msra.mxu0 %v893
    %4211 = vmatprep.subr.bf16.mxu0 0
    %4212 = vmatpush1.bf16.msra.mxu0 0
    %4213 = vmatprep.subr.bf16.mxu0 0
    %4214 = vmatpush1.bf16.msra.mxu0 0
    %4215 = vmatprep.subr.bf16.mxu0 0
    %4216 = vmatpush1.bf16.msra.mxu0 0
    %4217 = vmatprep.subr.bf16.mxu0 0
    %4218 = vmatpush1.bf16.msra.mxu0 0
    %4219 = vmatprep.subr.bf16.mxu0 0
    %4220 = vmatpush1.bf16.msra.mxu0 0
    %4221 = vmatprep.subr.bf16.mxu0 0
    %4222 = vmatpush1.bf16.msra.mxu0 0
    %4223 = vmatprep.subr.bf16.mxu0 0
    %4224 = vmatpush1.bf16.msra.mxu0 0
    %4225 = vmatprep.subr.bf16.mxu0 0
    %4226 = vmatpush1.bf16.msra.mxu0 0
    %4227 = vmatprep.mubr.bf16.mxu0 0
    %4228 = vmatmul.mubr.bf16.gmra.mrb[0].mxu0 %v3828
    %v4229 = vpop.f32.mrb[0].mxu0
    %v4230 = vadd.f32 0.0, %v4229
    %v4231 = vpop.f32.mrb[0].mxu0
    %v4232 = vpop.f32.mrb[0].mxu0
    %v4233 = vpop.f32.mrb[0].mxu0
    %4234 = vdwg.mxu0
    %4235 = vmatprep.subr.bf16.mxu0 0
    %4236 = vmatpush1.bf16.msra.mxu0 %v894
    %4237 = vmatprep.subr.bf16.mxu0 0
    %4238 = vmatpush1.bf16.msra.mxu0 %v895
    %4239 = vmatprep.subr.bf16.mxu0 0
    %4240 = vmatpush1.bf16.msra.mxu0 %v896
    %4241 = vmatprep.subr.bf16.mxu0 0
    %4242 = vmatpush1.bf16.msra.mxu0 %v897
    %4243 = vmatprep.subr.bf16.mxu0 0
    %4244 = vmatpush1.bf16.msra.mxu0 %v898
    %4245 = vmatprep.subr.bf16.mxu0 0
    %4246 = vmatpush1.bf16.msra.mxu0 %v899
    %4247 = vmatprep.subr.bf16.mxu0 0
    %4248 = vmatpush1.bf16.msra.mxu0 %v900
    %4249 = vmatprep.subr.bf16.mxu0 0
    %4250 = vmatpush1.bf16.msra.mxu0 %v901
    %4251 = vmatprep.subr.bf16.mxu0 0
    %4252 = vmatpush1.bf16.msra.mxu0 0
    %4253 = vmatprep.subr.bf16.mxu0 0
    %4254 = vmatpush1.bf16.msra.mxu0 0
    %4255 = vmatprep.subr.bf16.mxu0 0
    %4256 = vmatpush1.bf16.msra.mxu0 0
    %4257 = vmatprep.subr.bf16.mxu0 0
    %4258 = vmatpush1.bf16.msra.mxu0 0
    %4259 = vmatprep.subr.bf16.mxu0 0
    %4260 = vmatpush1.bf16.msra.mxu0 0
    %4261 = vmatprep.subr.bf16.mxu0 0
    %4262 = vmatpush1.bf16.msra.mxu0 0
    %4263 = vmatprep.subr.bf16.mxu0 0
    %4264 = vmatpush1.bf16.msra.mxu0 0
    %4265 = vmatprep.subr.bf16.mxu0 0
    %4266 = vmatpush1.bf16.msra.mxu0 0
    %4267 = vmatprep.mubr.bf16.mxu0 0
    %4268 = vmatmul.mubr.bf16.gmra.mrb[0].mxu0 %v3829
    %v4269 = vpop.f32.mrb[0].mxu0
    %v4270 = vadd.f32 0.0, %v4269
    %v4271 = vpop.f32.mrb[0].mxu0
    %v4272 = vpop.f32.mrb[0].mxu0
    %v4273 = vpop.f32.mrb[0].mxu0
    %4274 = vdwg.mxu0
    %4275 = vmatprep.subr.bf16.mxu0 0
    %4276 = vmatpush1.bf16.msra.mxu0 %v902
    %4277 = vmatprep.subr.bf16.mxu0 0
    %4278 = vmatpush1.bf16.msra.mxu0 %v903
    %4279 = vmatprep.subr.bf16.mxu0 0
    %4280 = vmatpush1.bf16.msra.mxu0 %v904
    %4281 = vmatprep.subr.bf16.mxu0 0
    %4282 = vmatpush1.bf16.msra.mxu0 %v905
    %4283 = vmatprep.subr.bf16.mxu0 0
    %4284 = vmatpush1.bf16.msra.mxu0 %v906
    %4285 = vmatprep.subr.bf16.mxu0 0
    %4286 = vmatpush1.bf16.msra.mxu0 %v907
    %4287 = vmatprep.subr.bf16.mxu0 0
    %4288 = vmatpush1.bf16.msra.mxu0 %v908
    %4289 = vmatprep.subr.bf16.mxu0 0
    %4290 = vmatpush1.bf16.msra.mxu0 %v909
    %4291 = vmatprep.subr.bf16.mxu0 0
    %4292 = vmatpush1.bf16.msra.mxu0 0
    %4293 = vmatprep.subr.bf16.mxu0 0
    %4294 = vmatpush1.bf16.msra.mxu0 0
    %4295 = vmatprep.subr.bf16.mxu0 0
    %4296 = vmatpush1.bf16.msra.mxu0 0
    %4297 = vmatprep.subr.bf16.mxu0 0
    %4298 = vmatpush1.bf16.msra.mxu0 0
    %4299 = vmatprep.subr.bf16.mxu0 0
    %4300 = vmatpush1.bf16.msra.mxu0 0
    %4301 = vmatprep.subr.bf16.mxu0 0
    %4302 = vmatpush1.bf16.msra.mxu0 0
    %4303 = vmatprep.subr.bf16.mxu0 0
    %4304 = vmatpush1.bf16.msra.mxu0 0
    %4305 = vmatprep.subr.bf16.mxu0 0
    %4306 = vmatpush1.bf16.msra.mxu0 0
    %4307 = vmatprep.mubr.bf16.mxu0 0
    %4308 = vmatmul.mubr.bf16.gmra.mrb[0].mxu0 %v3830
    %v4309 = vpop.f32.mrb[0].mxu0
    %v4310 = vadd.f32 0.0, %v4309
    %v4311 = vpop.f32.mrb[0].mxu0
    %v4312 = vpop.f32.mrb[0].mxu0
    %v4313 = vpop.f32.mrb[0].mxu0
    %4314 = vdwg.mxu0
    %4315 = vmatprep.subr.bf16.mxu0 0
    %4316 = vmatpush1.bf16.msra.mxu0 %v910
    %4317 = vmatprep.subr.bf16.mxu0 0
    %4318 = vmatpush1.bf16.msra.mxu0 %v911
    %4319 = vmatprep.subr.bf16.mxu0 0
    %4320 = vmatpush1.bf16.msra.mxu0 %v912
    %4321 = vmatprep.subr.bf16.mxu0 0
    %4322 = vmatpush1.bf16.msra.mxu0 %v913
    %4323 = vmatprep.subr.bf16.mxu0 0
    %4324 = vmatpush1.bf16.msra.mxu0 %v914
    %4325 = vmatprep.subr.bf16.mxu0 0
    %4326 = vmatpush1.bf16.msra.mxu0 %v915
    %4327 = vmatprep.subr.bf16.mxu0 0
    %4328 = vmatpush1.bf16.msra.mxu0 %v916
    %4329 = vmatprep.subr.bf16.mxu0 0
    %4330 = vmatpush1.bf16.msra.mxu0 %v917
    %4331 = vmatprep.subr.bf16.mxu0 0
    %4332 = vmatpush1.bf16.msra.mxu0 0
    %4333 = vmatprep.subr.bf16.mxu0 0
    %4334 = vmatpush1.bf16.msra.mxu0 0
    %4335 = vmatprep.subr.bf16.mxu0 0
    %4336 = vmatpush1.bf16.msra.mxu0 0
    %4337 = vmatprep.subr.bf16.mxu0 0
    %4338 = vmatpush1.bf16.msra.mxu0 0
    %4339 = vmatprep.subr.bf16.mxu0 0
    %4340 = vmatpush1.bf16.msra.mxu0 0
    %4341 = vmatprep.subr.bf16.mxu0 0
    %4342 = vmatpush1.bf16.msra.mxu0 0
    %4343 = vmatprep.subr.bf16.mxu0 0
    %4344 = vmatpush1.bf16.msra.mxu0 0
    %4345 = vmatprep.subr.bf16.mxu0 0
    %4346 = vmatpush1.bf16.msra.mxu0 0
    %4347 = vmatprep.mubr.bf16.mxu0 0
    %4348 = vmatmul.mubr.bf16.gmra.mrb[0].mxu0 %v3831
    %v4349 = vpop.f32.mrb[0].mxu0
    %v4350 = vadd.f32 0.0, %v4349
    %v4351 = vpop.f32.mrb[0].mxu0
    %v4352 = vpop.f32.mrb[0].mxu0
    %v4353 = vpop.f32.mrb[0].mxu0
    %4354 = vdwg.mxu0
    %4355 = vmatprep.subr.bf16.mxu0 0
    %4356 = vmatpush1.bf16.msra.mxu0 %v918
    %4357 = vmatprep.subr.bf16.mxu0 0
    %4358 = vmatpush1.bf16.msra.mxu0 %v919
    %4359 = vmatprep.subr.bf16.mxu0 0
    %4360 = vmatpush1.bf16.msra.mxu0 %v920
    %4361 = vmatprep.subr.bf16.mxu0 0
    %4362 = vmatpush1.bf16.msra.mxu0 %v921
    %4363 = vmatprep.subr.bf16.mxu0 0
    %4364 = vmatpush1.bf16.msra.mxu0 %v922
    %4365 = vmatprep.subr.bf16.mxu0 0
    %4366 = vmatpush1.bf16.msra.mxu0 %v923
    %4367 = vmatprep.subr.bf16.mxu0 0
    %4368 = vmatpush1.bf16.msra.mxu0 %v924
    %4369 = vmatprep.subr.bf16.mxu0 0
    %4370 = vmatpush1.bf16.msra.mxu0 %v925
    %4371 = vmatprep.subr.bf16.mxu0 0
    %4372 = vmatpush1.bf16.msra.mxu0 0
    %4373 = vmatprep.subr.bf16.mxu0 0
    %4374 = vmatpush1.bf16.msra.mxu0 0
    %4375 = vmatprep.subr.bf16.mxu0 0
    %4376 = vmatpush1.bf16.msra.mxu0 0
    %4377 = vmatprep.subr.bf16.mxu0 0
    %4378 = vmatpush1.bf16.msra.mxu0 0
    %4379 = vmatprep.subr.bf16.mxu0 0
    %4380 = vmatpush1.bf16.msra.mxu0 0
    %4381 = vmatprep.subr.bf16.mxu0 0
    %4382 = vmatpush1.bf16.msra.mxu0 0
    %4383 = vmatprep.subr.bf16.mxu0 0
    %4384 = vmatpush1.bf16.msra.mxu0 0
    %4385 = vmatprep.subr.bf16.mxu0 0
    %4386 = vmatpush1.bf16.msra.mxu0 0
    %4387 = vmatprep.mubr.bf16.mxu0 0
    %4388 = vmatmul.mubr.bf16.gmra.mrb[0].mxu0 %v3832
    %v4389 = vpop.f32.mrb[0].mxu0
    %v4390 = vadd.f32 0.0, %v4389
    %v4391 = vpop.f32.mrb[0].mxu0
    %v4392 = vpop.f32.mrb[0].mxu0
    %v4393 = vpop.f32.mrb[0].mxu0
    %4394 = vdwg.mxu0
    %4395 = vmatprep.subr.bf16.mxu0 0
    %4396 = vmatpush1.bf16.msra.mxu0 %v926
    %4397 = vmatprep.subr.bf16.mxu0 0
    %4398 = vmatpush1.bf16.msra.mxu0 %v927
    %4399 = vmatprep.subr.bf16.mxu0 0
    %4400 = vmatpush1.bf16.msra.mxu0 %v928
    %4401 = vmatprep.subr.bf16.mxu0 0
    %4402 = vmatpush1.bf16.msra.mxu0 %v929
    %4403 = vmatprep.subr.bf16.mxu0 0
    %4404 = vmatpush1.bf16.msra.mxu0 %v930
    %4405 = vmatprep.subr.bf16.mxu0 0
    %4406 = vmatpush1.bf16.msra.mxu0 %v931
    %4407 = vmatprep.subr.bf16.mxu0 0
    %4408 = vmatpush1.bf16.msra.mxu0 %v932
    %4409 = vmatprep.subr.bf16.mxu0 0
    %4410 = vmatpush1.bf16.msra.mxu0 %v933
    %4411 = vmatprep.subr.bf16.mxu0 0
    %4412 = vmatpush1.bf16.msra.mxu0 0
    %4413 = vmatprep.subr.bf16.mxu0 0
    %4414 = vmatpush1.bf16.msra.mxu0 0
    %4415 = vmatprep.subr.bf16.mxu0 0
    %4416 = vmatpush1.bf16.msra.mxu0 0
    %4417 = vmatprep.subr.bf16.mxu0 0
    %4418 = vmatpush1.bf16.msra.mxu0 0
    %4419 = vmatprep.subr.bf16.mxu0 0
    %4420 = vmatpush1.bf16.msra.mxu0 0
    %4421 = vmatprep.subr.bf16.mxu0 0
    %4422 = vmatpush1.bf16.msra.mxu0 0
    %4423 = vmatprep.subr.bf16.mxu0 0
    %4424 = vmatpush1.bf16.msra.mxu0 0
    %4425 = vmatprep.subr.bf16.mxu0 0
    %4426 = vmatpush1.bf16.msra.mxu0 0
    %4427 = vmatprep.mubr.bf16.mxu0 0
    %4428 = vmatmul.mubr.bf16.gmra.mrb[0].mxu0 %v3833
    %v4429 = vpop.f32.mrb[0].mxu0
    %v4430 = vadd.f32 0.0, %v4429
    %v4431 = vpop.f32.mrb[0].mxu0
    %v4432 = vpop.f32.mrb[0].mxu0
    %v4433 = vpop.f32.mrb[0].mxu0
    %4434 = vdwg.mxu0
    %4435 = vmatprep.subr.bf16.mxu0 0
    %4436 = vmatpush1.bf16.msra.mxu0 %v934
    %4437 = vmatprep.subr.bf16.mxu0 0
    %4438 = vmatpush1.bf16.msra.mxu0 %v935
    %4439 = vmatprep.subr.bf16.mxu0 0
    %4440 = vmatpush1.bf16.msra.mxu0 %v936
    %4441 = vmatprep.subr.bf16.mxu0 0
    %4442 = vmatpush1.bf16.msra.mxu0 %v937
    %4443 = vmatprep.subr.bf16.mxu0 0
    %4444 = vmatpush1.bf16.msra.mxu0 %v938
    %4445 = vmatprep.subr.bf16.mxu0 0
    %4446 = vmatpush1.bf16.msra.mxu0 %v939
    %4447 = vmatprep.subr.bf16.mxu0 0
    %4448 = vmatpush1.bf16.msra.mxu0 %v940
    %4449 = vmatprep.subr.bf16.mxu0 0
    %4450 = vmatpush1.bf16.msra.mxu0 %v941
    %4451 = vmatprep.subr.bf16.mxu0 0
    %4452 = vmatpush1.bf16.msra.mxu0 0
    %4453 = vmatprep.subr.bf16.mxu0 0
    %4454 = vmatpush1.bf16.msra.mxu0 0
    %4455 = vmatprep.subr.bf16.mxu0 0
    %4456 = vmatpush1.bf16.msra.mxu0 0
    %4457 = vmatprep.subr.bf16.mxu0 0
    %4458 = vmatpush1.bf16.msra.mxu0 0
    %4459 = vmatprep.subr.bf16.mxu0 0
    %4460 = vmatpush1.bf16.msra.mxu0 0
    %4461 = vmatprep.subr.bf16.mxu0 0
    %4462 = vmatpush1.bf16.msra.mxu0 0
    %4463 = vmatprep.subr.bf16.mxu0 0
    %4464 = vmatpush1.bf16.msra.mxu0 0
    %4465 = vmatprep.subr.bf16.mxu0 0
    %4466 = vmatpush1.bf16.msra.mxu0 0
    %4467 = vmatprep.mubr.bf16.mxu0 0
    %4468 = vmatmul.mubr.bf16.gmra.mrb[0].mxu0 %v3834
    %v4469 = vpop.f32.mrb[0].mxu0
    %v4470 = vadd.f32 0.0, %v4469
    %v4471 = vpop.f32.mrb[0].mxu0
    %v4472 = vpop.f32.mrb[0].mxu0
    %v4473 = vpop.f32.mrb[0].mxu0
    %4474 = vdwg.mxu0
    %4475 = vst [vmem:[#allocation2] sm:$0x1] %v3870
    %4476 = vst [vmem:[#allocation2 + $0x1] sm:$0x1] %v3910
    %4477 = vst [vmem:[#allocation2 + $0x2] sm:$0x1] %v3950
    %4478 = vst [vmem:[#allocation2 + $0x3] sm:$0x1] %v3990
    %4479 = vst [vmem:[#allocation2 + $0x4] sm:$0x1] %v4030
    %4480 = vst [vmem:[#allocation2 + $0x5] sm:$0x1] %v4070
    %4481 = vst [vmem:[#allocation2 + $0x6] sm:$0x1] %v4110
    %4482 = vst [vmem:[#allocation2 + $0x7] sm:$0x1] %v4150
    %4483 = vst [vmem:[#allocation2 + $0x8] sm:$0x1] %v4190
    %4484 = vst [vmem:[#allocation2 + $0x9] sm:$0x1] %v4230
    %4485 = vst [vmem:[#allocation2 + $0xa] sm:$0x1] %v4270
    %4486 = vst [vmem:[#allocation2 + $0xb] sm:$0x1] %v4310
    %4487 = vst [vmem:[#allocation2 + $0xc] sm:$0x1] %v4350
    %4488 = vst [vmem:[#allocation2 + $0xd] sm:$0x1] %v4390
    %4489 = vst [vmem:[#allocation2 + $0xe] sm:$0x1] %v4430
    %4490 = vst [vmem:[#allocation2 + $0xf] sm:$0x1] %v4470
    // Predicated region
    $region26: #{bahdanau_attn_pallas.1} parent=1 // pred_check
      _
    $region27: #{bahdanau_attn_pallas.1} parent=1 // pred_check_branch
      %4492 = sbr.rel (0) target = $region29
    $region28: #{bahdanau_attn_pallas.1} parent=1 // pred_region
      %s4494 = ssub.s32 256, 256
      %4495 = vsyncadd [#allocation3], %s4494
      %s4496 = sshll.u32 [#allocation2], 4
      %s4497 = int_to_ptr.vmem [resolvable:$true] %s4496
      %4502 = dma.vmem_to_hbm [thread:$0]  %s4497, 256, %s6, [#allocation3], 16, 16, 1
    $region29: #{bahdanau_attn_pallas.1} parent=1 // pred_fallthru
      _
    // Predicated region
    $region30: #{bahdanau_attn_pallas.1} parent=1 // pred_check
      _
    $region31: #{bahdanau_attn_pallas.1} parent=1 // pred_check_branch
      %4504 = sbr.rel (0) target = $region33
    $region32: #{bahdanau_attn_pallas.1} parent=1 // pred_region
      %s4506 = ssub.s32 256, 256
      %4507 = vsyncadd [#allocation5], %s4506
      %s4508 = sshll.u32 [#allocation4], 4
      %s4509 = int_to_ptr.vmem [resolvable:$true] %s4508
      %4514 = dma.vmem_to_hbm [thread:$0]  %s4509, 256, %s7, [#allocation5], 16, 16, 1
    $region33: #{bahdanau_attn_pallas.1} parent=1 // pred_fallthru
      _
    // Predicated region
    $region34: #{bahdanau_attn_pallas.1} parent=1 // pred_check
      _
    $region35: #{bahdanau_attn_pallas.1} parent=1 // pred_check_branch
      %4516 = sbr.rel (0) target = $region37
    $region36: #{bahdanau_attn_pallas.1} parent=1 // pred_region
      %4517 = dma.done [#allocation3], 256
    $region37: #{bahdanau_attn_pallas.1} parent=1 // pred_fallthru
      _
    // Predicated region
    $region38: #{bahdanau_attn_pallas.1} parent=1 // pred_check
      _
    $region39: #{bahdanau_attn_pallas.1} parent=1 // pred_check_branch
      %4519 = sbr.rel (0) target = $region41
    $region40: #{bahdanau_attn_pallas.1} parent=1 // pred_region
      %4520 = dma.done [#allocation5], 256
    $region41: #{bahdanau_attn_pallas.1} parent=1 // pred_fallthru
      _
    %4521 = vsyncpa [#allocation3], 1
    %4522 = vsyncpa [#allocation5], 1

</llo_original>
